<compile_context>
chip_gen: v7x
topology: tpu7x:2x2x1
jax: 0.10.0
libtpu: 0.0.40
codegen_flags: <defaults>
</compile_context>

<pallas_src>
from functools import partial

import numpy as np
import jax
import jax.numpy as jnp
from jax.experimental import pallas as pl
from jax.experimental.pallas import tpu as pltpu

NUM_CLASSES = 19            # labels 1..19, as in the PyTorch list comprehension
MU, STD, FWHM, GMM_FWHM = 255.0, 16.0, 5.0, 5.0


# ----------------------------------------------------------------------------
# Device-side construction of MONAI-equivalent smoothing matrices:
#   gaussian_1d(sigma, truncated=4, approx='erf', normalize=False) applied with
#   zero padding == multiplication by a symmetric banded matrix.
# ----------------------------------------------------------------------------
def _smooth_matrix(n, sigma):
    sigma = jnp.maximum(jnp.asarray(sigma, jnp.float32), 1e-3)
    tail = jnp.floor(jnp.maximum(sigma * 4.0, 0.5) + 0.5)     # int() trunc; arg >= 1
    idx = jnp.arange(n, dtype=jnp.float32)
    d = idx[None, :] - idx[:, None]                           # S[a, b] uses offset b - a
    t = 0.70710678 / sigma
    g = jnp.clip(0.5 * (jax.scipy.special.erf(t * (d + 0.5))
                        - jax.scipy.special.erf(t * (d - 0.5))), 0.0, None)
    return jnp.where(jnp.abs(d) <= tail, g, 0.0)              # (n, n) f32


def _prepare_operands(x, noise, gmm_sigmas, final_sigma, ipb):
    """Fold the final smooth into the per-class filters, build the block-diag
    H-smooth matrices, and reshape/cast inputs — all on device."""
    B, C, H, W = x.shape
    S, G = B // ipb, ipb * C

    sh = jax.vmap(lambda s: _smooth_matrix(H, s))(gmm_sigmas)       # (19, H, H)
    sw = jax.vmap(lambda s: _smooth_matrix(W, s))(gmm_sigmas)       # (19, W, W)
    shf = _smooth_matrix(H, final_sigma)                            # (H, H)
    swf = _smooth_matrix(W, final_sigma)                            # (W, W)

    # linearity: smoothF(sum_i SH_i m_i SW_i) == sum_i (SHF@SH_i) m_i (SW_i@SWF)
    shc = jnp.einsum("hk,ikj->ihj", shf, sh)                        # (19, H, H)
    swc = jnp.einsum("iwk,kv->iwv", sw, swf)                        # (19, W, W)

    # block-diag kron(I_G, SH'_i) built by broadcasting (no host kron), bf16 for MXU
    shb = (jnp.eye(G, dtype=shc.dtype)[None, :, None, :, None]
           * shc[:, None, :, None, :]).reshape(NUM_CLASSES, G * H, G * H)
    shb = shb.astype(jnp.bfloat16)                                  # (19, G*H, G*H)
    swc_flat = swc.reshape(NUM_CLASSES * W, W)                      # vstack_i SW'_i, f32

    x2 = x.reshape(S, G * H, W)                                     # ipb images stacked on rows
    noise2 = (noise.reshape(S, ipb, NUM_CLASSES, C * H, W)
                   .transpose(0, 2, 1, 3, 4)
                   .reshape(S, NUM_CLASSES, G * H, W)
                   .astype(jnp.bfloat16))                           # bf16 halves the big DMA
    return x2, noise2, shb, swc_flat


# ----------------------------------------------------------------------------
# Pallas kernel (one grid step = one sub-batch of ipb images):
#   x_ref:     (1, G*H, W)            f32   intensities, rows = ipb x C x H
#   noise_ref: (1, 19, G*H, W)        bf16  per-class Gaussian noise fields
#   shb_ref:   (19, G*H, G*H)         bf16  block-diag(SHF @ SH_i)   (resident)
#   swc_ref:   (19*W, W)              f32   vstack_i (SW_i @ SWF)    (resident)
#   o_ref:     (1, G*H, W)            f32
#   tcat_ref:  (G*H, 19*W)            f32   scratch: concat of H-smoothed classes
# ----------------------------------------------------------------------------
def _gmm_synth_kernel(x_ref, noise_ref, shb_ref, swc_ref, o_ref, tcat_ref):
    w = o_ref.shape[2]
    # labels = int((x / 255) * 20); computed once (x >= 0 so truncation == floor)
    labels = ((x_ref[0] / 255.0) * 20.0).astype(jnp.int32)          # (G*H, W)
    zero = jnp.zeros((), dtype=noise_ref.dtype)

    # Unrolled class loop: mask -> one block-diag H-smooth matmul per class,
    # parked in the concat scratch at lane offset i*W (static slices).
    for i in range(NUM_CLASSES):
        masked = jnp.where(labels == i + 1, noise_ref[0, i], zero)   # bf16
        t = jnp.dot(shb_ref[i], masked, preferred_element_type=jnp.float32)
        tcat_ref[:, i * w:(i + 1) * w] = t                           # f32, no cast

    # Single big-K matmul fuses the 19 W-smooths AND the class sum; the
    # accumulation happens in the MXU result buffer, not as serial VPU adds.
    o_ref[0] = jnp.dot(tcat_ref[...], swc_ref[...],
                       preferred_element_type=jnp.float32)


@partial(jax.jit, static_argnames=("images_per_step",))
def gmm_synth(x, noise, gmm_sigmas, final_sigma, *, images_per_step=2):
    """x: (B,C,H,W) f32 in [0,255]; noise: (B,19,C,H,W) f32;
    gmm_sigmas: (19,) f32; final_sigma: () f32.  Returns (B,C,H,W) f32."""
    B, C, H, W = x.shape
    ipb = images_per_step
    assert B % ipb == 0
    S, GH = B // ipb, ipb * C * H

    x2, noise2, shb, swc_flat = _prepare_operands(x, noise, gmm_sigmas,
                                                  final_sigma, ipb)

    out2 = pl.pallas_call(
        _gmm_synth_kernel,
        out_shape=jax.ShapeDtypeStruct((S, GH, W), jnp.float32),
        grid_spec=pltpu.PrefetchScalarGridSpec(
            num_scalar_prefetch=0,
            grid=(S,),
            in_specs=[
                pl.BlockSpec((1, GH, W), lambda s: (s, 0, 0)),                   # x
                pl.BlockSpec((1, NUM_CLASSES, GH, W), lambda s: (s, 0, 0, 0)),   # noise
                pl.BlockSpec((NUM_CLASSES, GH, GH), lambda s: (0, 0, 0)),        # folded SH (resident)
                pl.BlockSpec((NUM_CLASSES * W, W), lambda s: (0, 0)),            # folded SW (resident)
            ],
            out_specs=pl.BlockSpec((1, GH, W), lambda s: (s, 0, 0)),
            scratch_shapes=[pltpu.VMEM((GH, NUM_CLASSES * W), jnp.float32)],
        ),
        compiler_params=pltpu.CompilerParams(
            dimension_semantics=("parallel",)),   # batch steps shard across v7x's 2 TCs
    )(x2, noise2, shb, swc_flat)

    return out2.reshape(B, C, H, W)


# ----------------------------------------------------------------------------
if __name__ == "__main__":
    B, C, H, W = 4, 2, 16, 128
    ipb = 2                                        # images per grid step -> M = ipb*C*H = 64

    key = jax.random.PRNGKey(0)
    kx, kn, km, ks, kg, kf = jax.random.split(key, 6)

    # intensity images in [0, 255] (what the module expects before /255*20)
    x = jax.random.uniform(kx, (B, C, H, W), jnp.float32, 0.0, 255.0)

    # deterministic stand-ins for the module's per-call np.random draws
    means = jax.random.uniform(km, (NUM_CLASSES,), jnp.float32, 0.0, MU)
    stds = jax.random.uniform(ks, (NUM_CLASSES,), jnp.float32, 0.0, STD)
    gmm_sigmas = jax.random.uniform(kg, (NUM_CLASSES,), jnp.float32, 0.0, GMM_FWHM)
    final_sigma = jax.random.uniform(kf, (), jnp.float32, 0.0, FWHM)

    # torch.normal(mean_i, std_i, x.shape) per class, per image
    noise = (jax.random.normal(kn, (B, NUM_CLASSES, C, H, W), jnp.float32)
             * stds[None, :, None, None, None]
             + means[None, :, None, None, None])

    out = jax.block_until_ready(
        gmm_synth(x, noise, gmm_sigmas, final_sigma, images_per_step=ipb))

    # ---------- pure-JAX f32 reference of the original (unfused) math --------
    hi = jax.lax.Precision.HIGHEST
    sh = jax.vmap(lambda s: _smooth_matrix(H, s))(gmm_sigmas)        # (19,H,H)
    sw = jax.vmap(lambda s: _smooth_matrix(W, s))(gmm_sigmas)        # (19,W,W)
    shf = _smooth_matrix(H, final_sigma)
    swf = _smooth_matrix(W, final_sigma)
    labels = ((x / 255.0) * 20.0).astype(jnp.int32)
    cls = jnp.arange(1, NUM_CLASSES + 1)[None, :, None, None, None]
    masked = noise * (labels[:, None] == cls).astype(jnp.float32)    # (B,19,C,H,W)
    t = jnp.einsum("ihk,bickw->bichw", sh, masked, precision=hi)
    per_cls = jnp.einsum("bichw,iwv->bichv", t, sw, precision=hi)
    acc = per_cls.sum(1)                                             # (B,C,H,W)
    tf = jnp.einsum("hk,bckw->bchw", shf, acc, precision=hi)
    ref = jnp.einsum("bchw,wv->bchv", tf, swf, precision=hi)

    assert out.shape == (B, C, H, W) and out.dtype == jnp.float32
    # tolerance sized for bf16 first-stage operands (noise, folded SH) with f32
    # accumulation and an all-f32 second stage
    np.testing.assert_allclose(np.asarray(out), np.asarray(ref), rtol=3e-2, atol=2.0)
    print("KERNEL_OK")
</pallas_src>

<mosaic_0001>
module attributes {stable_mosaic.version = 11 : i64} {
  func.func @_gmm_synth_kernel(%arg0: i32, %arg1: memref<1x64x128xf32, #tpu.memory_space<vmem>>, %arg2: memref<1x19x64x128xbf16, #tpu.memory_space<vmem>>, %arg3: memref<19x64x64xbf16, #tpu.memory_space<vmem>>, %arg4: memref<2432x128xf32, #tpu.memory_space<vmem>>, %arg5: memref<1x64x128xf32, #tpu.memory_space<vmem>>, %arg6: memref<64x2432xf32, #tpu.memory_space<vmem>>) attributes {dimension_semantics = [#tpu.dimension_semantics<parallel>], iteration_bounds = array<i64: 2>, scalar_prefetch = 0 : i64, scratch_operands = 1 : i64, tpu.core_type = #tpu.core_type<tc>, window_params = [{transform_indices = @transform_0, window_bounds = array<i64: 1, 64, 128>}, {transform_indices = @transform_1, window_bounds = array<i64: 1, 19, 64, 128>}, {pipeline_mode = #tpu.pipeline_mode<synchronous>, transform_indices = @transform_2, window_bounds = array<i64: 19, 64, 64>}, {pipeline_mode = #tpu.pipeline_mode<synchronous>, transform_indices = @transform_3, window_bounds = array<i64: 2432, 128>}, {transform_indices = @transform_4, window_bounds = array<i64: 1, 64, 128>}]} {
    %c0 = arith.constant 0 : index
    %c0_0 = arith.constant 0 : index
    %c0_1 = arith.constant 0 : index
    %0 = vector.load %arg1[%c0, %c0_0, %c0_1] : memref<1x64x128xf32, #tpu.memory_space<vmem>>, vector<1x64x128xf32>
    %1 = vector.shape_cast %0 : vector<1x64x128xf32> to vector<64x128xf32>
    %cst = arith.constant 2.550000e+02 : f32
    %2 = vector.broadcast %cst : f32 to vector<64x128xf32>
    %3 = arith.divf %1, %2 : vector<64x128xf32>
    %cst_2 = arith.constant 2.000000e+01 : f32
    %4 = vector.broadcast %cst_2 : f32 to vector<64x128xf32>
    %5 = arith.mulf %3, %4 : vector<64x128xf32>
    %6 = arith.fptosi %5 : vector<64x128xf32> to vector<64x128xi32>
    %c1_i32 = arith.constant 1 : i32
    %7 = vector.broadcast %c1_i32 : i32 to vector<64x128xi32>
    %8 = arith.cmpi eq, %6, %7 : vector<64x128xi32>
    %c0_3 = arith.constant 0 : index
    %c0_4 = arith.constant 0 : index
    %c0_5 = arith.constant 0 : index
    %c0_6 = arith.constant 0 : index
    %9 = vector.load %arg2[%c0_3, %c0_4, %c0_5, %c0_6] : memref<1x19x64x128xbf16, #tpu.memory_space<vmem>>, vector<1x1x64x128xbf16>
    %10 = vector.shape_cast %9 : vector<1x1x64x128xbf16> to vector<64x128xbf16>
    %cst_7 = arith.constant 0.000000e+00 : bf16
    %11 = vector.broadcast %cst_7 : bf16 to vector<64x128xbf16>
    %12 = arith.select %8, %10, %11 : vector<64x128xi1>, vector<64x128xbf16>
    %c0_8 = arith.constant 0 : index
    %c0_9 = arith.constant 0 : index
    %c0_10 = arith.constant 0 : index
    %13 = vector.load %arg3[%c0_8, %c0_9, %c0_10] : memref<19x64x64xbf16, #tpu.memory_space<vmem>>, vector<1x64x64xbf16>
    %14 = vector.shape_cast %13 : vector<1x64x64xbf16> to vector<64x64xbf16>
    %cst_11 = arith.constant dense<0.000000e+00> : vector<64x128xf32>
    %15 = tpu.matmul %14, %12, %cst_11 {dimension_numbers = #tpu.dot_dimension_numbers<[1], [0], [0], [1], [0, 0, 1, 1], [], []>} : vector<64x64xbf16>, vector<64x128xbf16>, vector<64x128xf32> -> vector<64x128xf32>
    %c0_12 = arith.constant 0 : index
    %c0_13 = arith.constant 0 : index
    %16 = vector.load %arg6[%c0_12, %c0_13] : memref<64x2432xf32, #tpu.memory_space<vmem>>, vector<64x128xf32>
    tpu.vector_store %arg6[%c0_12, %c0_13], %15 {strides = array<i32>} : memref<64x2432xf32, #tpu.memory_space<vmem>>, vector<64x128xf32>,
    %c2_i32 = arith.constant 2 : i32
    %17 = vector.broadcast %c2_i32 : i32 to vector<64x128xi32>
    %18 = arith.cmpi eq, %6, %17 : vector<64x128xi32>
    %c0_14 = arith.constant 0 : index
    %c1 = arith.constant 1 : index
    %c0_15 = arith.constant 0 : index
    %c0_16 = arith.constant 0 : index
    %19 = vector.load %arg2[%c0_14, %c1, %c0_15, %c0_16] : memref<1x19x64x128xbf16, #tpu.memory_space<vmem>>, vector<1x1x64x128xbf16>
    %20 = vector.shape_cast %19 : vector<1x1x64x128xbf16> to vector<64x128xbf16>
    %cst_17 = arith.constant 0.000000e+00 : bf16
    %21 = vector.broadcast %cst_17 : bf16 to vector<64x128xbf16>
    %22 = arith.select %18, %20, %21 : vector<64x128xi1>, vector<64x128xbf16>
    %c1_18 = arith.constant 1 : index
    %c0_19 = arith.constant 0 : index
    %c0_20 = arith.constant 0 : index
    %23 = vector.load %arg3[%c1_18, %c0_19, %c0_20] : memref<19x64x64xbf16, #tpu.memory_space<vmem>>, vector<1x64x64xbf16>
    %24 = vector.shape_cast %23 : vector<1x64x64xbf16> to vector<64x64xbf16>
    %cst_21 = arith.constant dense<0.000000e+00> : vector<64x128xf32>
    %25 = tpu.matmul %24, %22, %cst_21 {dimension_numbers = #tpu.dot_dimension_numbers<[1], [0], [0], [1], [0, 0, 1, 1], [], []>} : vector<64x64xbf16>, vector<64x128xbf16>, vector<64x128xf32> -> vector<64x128xf32>
    %c0_22 = arith.constant 0 : index
    %c128 = arith.constant 128 : index
    %26 = vector.load %arg6[%c0_22, %c128] : memref<64x2432xf32, #tpu.memory_space<vmem>>, vector<64x128xf32>
    tpu.vector_store %arg6[%c0_22, %c128], %25 {strides = array<i32>} : memref<64x2432xf32, #tpu.memory_space<vmem>>, vector<64x128xf32>,
    %c3_i32 = arith.constant 3 : i32
    %27 = vector.broadcast %c3_i32 : i32 to vector<64x128xi32>
    %28 = arith.cmpi eq, %6, %27 : vector<64x128xi32>
    %c0_23 = arith.constant 0 : index
    %c2 = arith.constant 2 : index
    %c0_24 = arith.constant 0 : index
    %c0_25 = arith.constant 0 : index
    %29 = vector.load %arg2[%c0_23, %c2, %c0_24, %c0_25] : memref<1x19x64x128xbf16, #tpu.memory_space<vmem>>, vector<1x1x64x128xbf16>
    %30 = vector.shape_cast %29 : vector<1x1x64x128xbf16> to vector<64x128xbf16>
    %cst_26 = arith.constant 0.000000e+00 : bf16
    %31 = vector.broadcast %cst_26 : bf16 to vector<64x128xbf16>
    %32 = arith.select %28, %30, %31 : vector<64x128xi1>, vector<64x128xbf16>
    %c2_27 = arith.constant 2 : index
    %c0_28 = arith.constant 0 : index
    %c0_29 = arith.constant 0 : index
    %33 = vector.load %arg3[%c2_27, %c0_28, %c0_29] : memref<19x64x64xbf16, #tpu.memory_space<vmem>>, vector<1x64x64xbf16>
    %34 = vector.shape_cast %33 : vector<1x64x64xbf16> to vector<64x64xbf16>
    %cst_30 = arith.constant dense<0.000000e+00> : vector<64x128xf32>
    %35 = tpu.matmul %34, %32, %cst_30 {dimension_numbers = #tpu.dot_dimension_numbers<[1], [0], [0], [1], [0, 0, 1, 1], [], []>} : vector<64x64xbf16>, vector<64x128xbf16>, vector<64x128xf32> -> vector<64x128xf32>
    %c0_31 = arith.constant 0 : index
    %c256 = arith.constant 256 : index
    %36 = vector.load %arg6[%c0_31, %c256] : memref<64x2432xf32, #tpu.memory_space<vmem>>, vector<64x128xf32>
    tpu.vector_store %arg6[%c0_31, %c256], %35 {strides = array<i32>} : memref<64x2432xf32, #tpu.memory_space<vmem>>, vector<64x128xf32>,
    %c4_i32 = arith.constant 4 : i32
    %37 = vector.broadcast %c4_i32 : i32 to vector<64x128xi32>
    %38 = arith.cmpi eq, %6, %37 : vector<64x128xi32>
    %c0_32 = arith.constant 0 : index
    %c3 = arith.constant 3 : index
    %c0_33 = arith.constant 0 : index
    %c0_34 = arith.constant 0 : index
    %39 = vector.load %arg2[%c0_32, %c3, %c0_33, %c0_34] : memref<1x19x64x128xbf16, #tpu.memory_space<vmem>>, vector<1x1x64x128xbf16>
    %40 = vector.shape_cast %39 : vector<1x1x64x128xbf16> to vector<64x128xbf16>
    %cst_35 = arith.constant 0.000000e+00 : bf16
    %41 = vector.broadcast %cst_35 : bf16 to vector<64x128xbf16>
    %42 = arith.select %38, %40, %41 : vector<64x128xi1>, vector<64x128xbf16>
    %c3_36 = arith.constant 3 : index
    %c0_37 = arith.constant 0 : index
    %c0_38 = arith.constant 0 : index
    %43 = vector.load %arg3[%c3_36, %c0_37, %c0_38] : memref<19x64x64xbf16, #tpu.memory_space<vmem>>, vector<1x64x64xbf16>
    %44 = vector.shape_cast %43 : vector<1x64x64xbf16> to vector<64x64xbf16>
    %cst_39 = arith.constant dense<0.000000e+00> : vector<64x128xf32>
    %45 = tpu.matmul %44, %42, %cst_39 {dimension_numbers = #tpu.dot_dimension_numbers<[1], [0], [0], [1], [0, 0, 1, 1], [], []>} : vector<64x64xbf16>, vector<64x128xbf16>, vector<64x128xf32> -> vector<64x128xf32>
    %c0_40 = arith.constant 0 : index
    %c384 = arith.constant 384 : index
    %46 = vector.load %arg6[%c0_40, %c384] : memref<64x2432xf32, #tpu.memory_space<vmem>>, vector<64x128xf32>
    tpu.vector_store %arg6[%c0_40, %c384], %45 {strides = array<i32>} : memref<64x2432xf32, #tpu.memory_space<vmem>>, vector<64x128xf32>,
    %c5_i32 = arith.constant 5 : i32
    %47 = vector.broadcast %c5_i32 : i32 to vector<64x128xi32>
    %48 = arith.cmpi eq, %6, %47 : vector<64x128xi32>
    %c0_41 = arith.constant 0 : index
    %c4 = arith.constant 4 : index
    %c0_42 = arith.constant 0 : index
    %c0_43 = arith.constant 0 : index
    %49 = vector.load %arg2[%c0_41, %c4, %c0_42, %c0_43] : memref<1x19x64x128xbf16, #tpu.memory_space<vmem>>, vector<1x1x64x128xbf16>
    %50 = vector.shape_cast %49 : vector<1x1x64x128xbf16> to vector<64x128xbf16>
    %cst_44 = arith.constant 0.000000e+00 : bf16
    %51 = vector.broadcast %cst_44 : bf16 to vector<64x128xbf16>
    %52 = arith.select %48, %50, %51 : vector<64x128xi1>, vector<64x128xbf16>
    %c4_45 = arith.constant 4 : index
    %c0_46 = arith.constant 0 : index
    %c0_47 = arith.constant 0 : index
    %53 = vector.load %arg3[%c4_45, %c0_46, %c0_47] : memref<19x64x64xbf16, #tpu.memory_space<vmem>>, vector<1x64x64xbf16>
    %54 = vector.shape_cast %53 : vector<1x64x64xbf16> to vector<64x64xbf16>
    %cst_48 = arith.constant dense<0.000000e+00> : vector<64x128xf32>
    %55 = tpu.matmul %54, %52, %cst_48 {dimension_numbers = #tpu.dot_dimension_numbers<[1], [0], [0], [1], [0, 0, 1, 1], [], []>} : vector<64x64xbf16>, vector<64x128xbf16>, vector<64x128xf32> -> vector<64x128xf32>
    %c0_49 = arith.constant 0 : index
    %c512 = arith.constant 512 : index
    %56 = vector.load %arg6[%c0_49, %c512] : memref<64x2432xf32, #tpu.memory_space<vmem>>, vector<64x128xf32>
    tpu.vector_store %arg6[%c0_49, %c512], %55 {strides = array<i32>} : memref<64x2432xf32, #tpu.memory_space<vmem>>, vector<64x128xf32>,
    %c6_i32 = arith.constant 6 : i32
    %57 = vector.broadcast %c6_i32 : i32 to vector<64x128xi32>
    %58 = arith.cmpi eq, %6, %57 : vector<64x128xi32>
    %c0_50 = arith.constant 0 : index
    %c5 = arith.constant 5 : index
    %c0_51 = arith.constant 0 : index
    %c0_52 = arith.constant 0 : index
    %59 = vector.load %arg2[%c0_50, %c5, %c0_51, %c0_52] : memref<1x19x64x128xbf16, #tpu.memory_space<vmem>>, vector<1x1x64x128xbf16>
    %60 = vector.shape_cast %59 : vector<1x1x64x128xbf16> to vector<64x128xbf16>
    %cst_53 = arith.constant 0.000000e+00 : bf16
    %61 = vector.broadcast %cst_53 : bf16 to vector<64x128xbf16>
    %62 = arith.select %58, %60, %61 : vector<64x128xi1>, vector<64x128xbf16>
    %c5_54 = arith.constant 5 : index
    %c0_55 = arith.constant 0 : index
    %c0_56 = arith.constant 0 : index
    %63 = vector.load %arg3[%c5_54, %c0_55, %c0_56] : memref<19x64x64xbf16, #tpu.memory_space<vmem>>, vector<1x64x64xbf16>
    %64 = vector.shape_cast %63 : vector<1x64x64xbf16> to vector<64x64xbf16>
    %cst_57 = arith.constant dense<0.000000e+00> : vector<64x128xf32>
    %65 = tpu.matmul %64, %62, %cst_57 {dimension_numbers = #tpu.dot_dimension_numbers<[1], [0], [0], [1], [0, 0, 1, 1], [], []>} : vector<64x64xbf16>, vector<64x128xbf16>, vector<64x128xf32> -> vector<64x128xf32>
    %c0_58 = arith.constant 0 : index
    %c640 = arith.constant 640 : index
    %66 = vector.load %arg6[%c0_58, %c640] : memref<64x2432xf32, #tpu.memory_space<vmem>>, vector<64x128xf32>
    tpu.vector_store %arg6[%c0_58, %c640], %65 {strides = array<i32>} : memref<64x2432xf32, #tpu.memory_space<vmem>>, vector<64x128xf32>,
    %c7_i32 = arith.constant 7 : i32
    %67 = vector.broadcast %c7_i32 : i32 to vector<64x128xi32>
    %68 = arith.cmpi eq, %6, %67 : vector<64x128xi32>
    %c0_59 = arith.constant 0 : index
    %c6 = arith.constant 6 : index
    %c0_60 = arith.constant 0 : index
    %c0_61 = arith.constant 0 : index
    %69 = vector.load %arg2[%c0_59, %c6, %c0_60, %c0_61] : memref<1x19x64x128xbf16, #tpu.memory_space<vmem>>, vector<1x1x64x128xbf16>
    %70 = vector.shape_cast %69 : vector<1x1x64x128xbf16> to vector<64x128xbf16>
    %cst_62 = arith.constant 0.000000e+00 : bf16
    %71 = vector.broadcast %cst_62 : bf16 to vector<64x128xbf16>
    %72 = arith.select %68, %70, %71 : vector<64x128xi1>, vector<64x128xbf16>
    %c6_63 = arith.constant 6 : index
    %c0_64 = arith.constant 0 : index
    %c0_65 = arith.constant 0 : index
    %73 = vector.load %arg3[%c6_63, %c0_64, %c0_65] : memref<19x64x64xbf16, #tpu.memory_space<vmem>>, vector<1x64x64xbf16>
    %74 = vector.shape_cast %73 : vector<1x64x64xbf16> to vector<64x64xbf16>
    %cst_66 = arith.constant dense<0.000000e+00> : vector<64x128xf32>
    %75 = tpu.matmul %74, %72, %cst_66 {dimension_numbers = #tpu.dot_dimension_numbers<[1], [0], [0], [1], [0, 0, 1, 1], [], []>} : vector<64x64xbf16>, vector<64x128xbf16>, vector<64x128xf32> -> vector<64x128xf32>
    %c0_67 = arith.constant 0 : index
    %c768 = arith.constant 768 : index
    %76 = vector.load %arg6[%c0_67, %c768] : memref<64x2432xf32, #tpu.memory_space<vmem>>, vector<64x128xf32>
    tpu.vector_store %arg6[%c0_67, %c768], %75 {strides = array<i32>} : memref<64x2432xf32, #tpu.memory_space<vmem>>, vector<64x128xf32>,
    %c8_i32 = arith.constant 8 : i32
    %77 = vector.broadcast %c8_i32 : i32 to vector<64x128xi32>
    %78 = arith.cmpi eq, %6, %77 : vector<64x128xi32>
    %c0_68 = arith.constant 0 : index
    %c7 = arith.constant 7 : index
    %c0_69 = arith.constant 0 : index
    %c0_70 = arith.constant 0 : index
    %79 = vector.load %arg2[%c0_68, %c7, %c0_69, %c0_70] : memref<1x19x64x128xbf16, #tpu.memory_space<vmem>>, vector<1x1x64x128xbf16>
    %80 = vector.shape_cast %79 : vector<1x1x64x128xbf16> to vector<64x128xbf16>
    %cst_71 = arith.constant 0.000000e+00 : bf16
    %81 = vector.broadcast %cst_71 : bf16 to vector<64x128xbf16>
    %82 = arith.select %78, %80, %81 : vector<64x128xi1>, vector<64x128xbf16>
    %c7_72 = arith.constant 7 : index
    %c0_73 = arith.constant 0 : index
    %c0_74 = arith.constant 0 : index
    %83 = vector.load %arg3[%c7_72, %c0_73, %c0_74] : memref<19x64x64xbf16, #tpu.memory_space<vmem>>, vector<1x64x64xbf16>
    %84 = vector.shape_cast %83 : vector<1x64x64xbf16> to vector<64x64xbf16>
    %cst_75 = arith.constant dense<0.000000e+00> : vector<64x128xf32>
    %85 = tpu.matmul %84, %82, %cst_75 {dimension_numbers = #tpu.dot_dimension_numbers<[1], [0], [0], [1], [0, 0, 1, 1], [], []>} : vector<64x64xbf16>, vector<64x128xbf16>, vector<64x128xf32> -> vector<64x128xf32>
    %c0_76 = arith.constant 0 : index
    %c896 = arith.constant 896 : index
    %86 = vector.load %arg6[%c0_76, %c896] : memref<64x2432xf32, #tpu.memory_space<vmem>>, vector<64x128xf32>
    tpu.vector_store %arg6[%c0_76, %c896], %85 {strides = array<i32>} : memref<64x2432xf32, #tpu.memory_space<vmem>>, vector<64x128xf32>,
    %c9_i32 = arith.constant 9 : i32
    %87 = vector.broadcast %c9_i32 : i32 to vector<64x128xi32>
    %88 = arith.cmpi eq, %6, %87 : vector<64x128xi32>
    %c0_77 = arith.constant 0 : index
    %c8 = arith.constant 8 : index
    %c0_78 = arith.constant 0 : index
    %c0_79 = arith.constant 0 : index
    %89 = vector.load %arg2[%c0_77, %c8, %c0_78, %c0_79] : memref<1x19x64x128xbf16, #tpu.memory_space<vmem>>, vector<1x1x64x128xbf16>
    %90 = vector.shape_cast %89 : vector<1x1x64x128xbf16> to vector<64x128xbf16>
    %cst_80 = arith.constant 0.000000e+00 : bf16
    %91 = vector.broadcast %cst_80 : bf16 to vector<64x128xbf16>
    %92 = arith.select %88, %90, %91 : vector<64x128xi1>, vector<64x128xbf16>
    %c8_81 = arith.constant 8 : index
    %c0_82 = arith.constant 0 : index
    %c0_83 = arith.constant 0 : index
    %93 = vector.load %arg3[%c8_81, %c0_82, %c0_83] : memref<19x64x64xbf16, #tpu.memory_space<vmem>>, vector<1x64x64xbf16>
    %94 = vector.shape_cast %93 : vector<1x64x64xbf16> to vector<64x64xbf16>
    %cst_84 = arith.constant dense<0.000000e+00> : vector<64x128xf32>
    %95 = tpu.matmul %94, %92, %cst_84 {dimension_numbers = #tpu.dot_dimension_numbers<[1], [0], [0], [1], [0, 0, 1, 1], [], []>} : vector<64x64xbf16>, vector<64x128xbf16>, vector<64x128xf32> -> vector<64x128xf32>
    %c0_85 = arith.constant 0 : index
    %c1024 = arith.constant 1024 : index
    %96 = vector.load %arg6[%c0_85, %c1024] : memref<64x2432xf32, #tpu.memory_space<vmem>>, vector<64x128xf32>
    tpu.vector_store %arg6[%c0_85, %c1024], %95 {strides = array<i32>} : memref<64x2432xf32, #tpu.memory_space<vmem>>, vector<64x128xf32>,
    %c10_i32 = arith.constant 10 : i32
    %97 = vector.broadcast %c10_i32 : i32 to vector<64x128xi32>
    %98 = arith.cmpi eq, %6, %97 : vector<64x128xi32>
    %c0_86 = arith.constant 0 : index
    %c9 = arith.constant 9 : index
    %c0_87 = arith.constant 0 : index
    %c0_88 = arith.constant 0 : index
    %99 = vector.load %arg2[%c0_86, %c9, %c0_87, %c0_88] : memref<1x19x64x128xbf16, #tpu.memory_space<vmem>>, vector<1x1x64x128xbf16>
    %100 = vector.shape_cast %99 : vector<1x1x64x128xbf16> to vector<64x128xbf16>
    %cst_89 = arith.constant 0.000000e+00 : bf16
    %101 = vector.broadcast %cst_89 : bf16 to vector<64x128xbf16>
    %102 = arith.select %98, %100, %101 : vector<64x128xi1>, vector<64x128xbf16>
    %c9_90 = arith.constant 9 : index
    %c0_91 = arith.constant 0 : index
    %c0_92 = arith.constant 0 : index
    %103 = vector.load %arg3[%c9_90, %c0_91, %c0_92] : memref<19x64x64xbf16, #tpu.memory_space<vmem>>, vector<1x64x64xbf16>
    %104 = vector.shape_cast %103 : vector<1x64x64xbf16> to vector<64x64xbf16>
    %cst_93 = arith.constant dense<0.000000e+00> : vector<64x128xf32>
    %105 = tpu.matmul %104, %102, %cst_93 {dimension_numbers = #tpu.dot_dimension_numbers<[1], [0], [0], [1], [0, 0, 1, 1], [], []>} : vector<64x64xbf16>, vector<64x128xbf16>, vector<64x128xf32> -> vector<64x128xf32>
    %c0_94 = arith.constant 0 : index
    %c1152 = arith.constant 1152 : index
    %106 = vector.load %arg6[%c0_94, %c1152] : memref<64x2432xf32, #tpu.memory_space<vmem>>, vector<64x128xf32>
    tpu.vector_store %arg6[%c0_94, %c1152], %105 {strides = array<i32>} : memref<64x2432xf32, #tpu.memory_space<vmem>>, vector<64x128xf32>,
    %c11_i32 = arith.constant 11 : i32
    %107 = vector.broadcast %c11_i32 : i32 to vector<64x128xi32>
    %108 = arith.cmpi eq, %6, %107 : vector<64x128xi32>
    %c0_95 = arith.constant 0 : index
    %c10 = arith.constant 10 : index
    %c0_96 = arith.constant 0 : index
    %c0_97 = arith.constant 0 : index
    %109 = vector.load %arg2[%c0_95, %c10, %c0_96, %c0_97] : memref<1x19x64x128xbf16, #tpu.memory_space<vmem>>, vector<1x1x64x128xbf16>
    %110 = vector.shape_cast %109 : vector<1x1x64x128xbf16> to vector<64x128xbf16>
    %cst_98 = arith.constant 0.000000e+00 : bf16
    %111 = vector.broadcast %cst_98 : bf16 to vector<64x128xbf16>
    %112 = arith.select %108, %110, %111 : vector<64x128xi1>, vector<64x128xbf16>
    %c10_99 = arith.constant 10 : index
    %c0_100 = arith.constant 0 : index
    %c0_101 = arith.constant 0 : index
    %113 = vector.load %arg3[%c10_99, %c0_100, %c0_101] : memref<19x64x64xbf16, #tpu.memory_space<vmem>>, vector<1x64x64xbf16>
    %114 = vector.shape_cast %113 : vector<1x64x64xbf16> to vector<64x64xbf16>
    %cst_102 = arith.constant dense<0.000000e+00> : vector<64x128xf32>
    %115 = tpu.matmul %114, %112, %cst_102 {dimension_numbers = #tpu.dot_dimension_numbers<[1], [0], [0], [1], [0, 0, 1, 1], [], []>} : vector<64x64xbf16>, vector<64x128xbf16>, vector<64x128xf32> -> vector<64x128xf32>
    %c0_103 = arith.constant 0 : index
    %c1280 = arith.constant 1280 : index
    %116 = vector.load %arg6[%c0_103, %c1280] : memref<64x2432xf32, #tpu.memory_space<vmem>>, vector<64x128xf32>
    tpu.vector_store %arg6[%c0_103, %c1280], %115 {strides = array<i32>} : memref<64x2432xf32, #tpu.memory_space<vmem>>, vector<64x128xf32>,
    %c12_i32 = arith.constant 12 : i32
    %117 = vector.broadcast %c12_i32 : i32 to vector<64x128xi32>
    %118 = arith.cmpi eq, %6, %117 : vector<64x128xi32>
    %c0_104 = arith.constant 0 : index
    %c11 = arith.constant 11 : index
    %c0_105 = arith.constant 0 : index
    %c0_106 = arith.constant 0 : index
    %119 = vector.load %arg2[%c0_104, %c11, %c0_105, %c0_106] : memref<1x19x64x128xbf16, #tpu.memory_space<vmem>>, vector<1x1x64x128xbf16>
    %120 = vector.shape_cast %119 : vector<1x1x64x128xbf16> to vector<64x128xbf16>
    %cst_107 = arith.constant 0.000000e+00 : bf16
    %121 = vector.broadcast %cst_107 : bf16 to vector<64x128xbf16>
    %122 = arith.select %118, %120, %121 : vector<64x128xi1>, vector<64x128xbf16>
    %c11_108 = arith.constant 11 : index
    %c0_109 = arith.constant 0 : index
    %c0_110 = arith.constant 0 : index
    %123 = vector.load %arg3[%c11_108, %c0_109, %c0_110] : memref<19x64x64xbf16, #tpu.memory_space<vmem>>, vector<1x64x64xbf16>
    %124 = vector.shape_cast %123 : vector<1x64x64xbf16> to vector<64x64xbf16>
    %cst_111 = arith.constant dense<0.000000e+00> : vector<64x128xf32>
    %125 = tpu.matmul %124, %122, %cst_111 {dimension_numbers = #tpu.dot_dimension_numbers<[1], [0], [0], [1], [0, 0, 1, 1], [], []>} : vector<64x64xbf16>, vector<64x128xbf16>, vector<64x128xf32> -> vector<64x128xf32>
    %c0_112 = arith.constant 0 : index
    %c1408 = arith.constant 1408 : index
    %126 = vector.load %arg6[%c0_112, %c1408] : memref<64x2432xf32, #tpu.memory_space<vmem>>, vector<64x128xf32>
    tpu.vector_store %arg6[%c0_112, %c1408], %125 {strides = array<i32>} : memref<64x2432xf32, #tpu.memory_space<vmem>>, vector<64x128xf32>,
    %c13_i32 = arith.constant 13 : i32
    %127 = vector.broadcast %c13_i32 : i32 to vector<64x128xi32>
    %128 = arith.cmpi eq, %6, %127 : vector<64x128xi32>
    %c0_113 = arith.constant 0 : index
    %c12 = arith.constant 12 : index
    %c0_114 = arith.constant 0 : index
    %c0_115 = arith.constant 0 : index
    %129 = vector.load %arg2[%c0_113, %c12, %c0_114, %c0_115] : memref<1x19x64x128xbf16, #tpu.memory_space<vmem>>, vector<1x1x64x128xbf16>
    %130 = vector.shape_cast %129 : vector<1x1x64x128xbf16> to vector<64x128xbf16>
    %cst_116 = arith.constant 0.000000e+00 : bf16
    %131 = vector.broadcast %cst_116 : bf16 to vector<64x128xbf16>
    %132 = arith.select %128, %130, %131 : vector<64x128xi1>, vector<64x128xbf16>
    %c12_117 = arith.constant 12 : index
    %c0_118 = arith.constant 0 : index
    %c0_119 = arith.constant 0 : index
    %133 = vector.load %arg3[%c12_117, %c0_118, %c0_119] : memref<19x64x64xbf16, #tpu.memory_space<vmem>>, vector<1x64x64xbf16>
    %134 = vector.shape_cast %133 : vector<1x64x64xbf16> to vector<64x64xbf16>
    %cst_120 = arith.constant dense<0.000000e+00> : vector<64x128xf32>
    %135 = tpu.matmul %134, %132, %cst_120 {dimension_numbers = #tpu.dot_dimension_numbers<[1], [0], [0], [1], [0, 0, 1, 1], [], []>} : vector<64x64xbf16>, vector<64x128xbf16>, vector<64x128xf32> -> vector<64x128xf32>
    %c0_121 = arith.constant 0 : index
    %c1536 = arith.constant 1536 : index
    %136 = vector.load %arg6[%c0_121, %c1536] : memref<64x2432xf32, #tpu.memory_space<vmem>>, vector<64x128xf32>
    tpu.vector_store %arg6[%c0_121, %c1536], %135 {strides = array<i32>} : memref<64x2432xf32, #tpu.memory_space<vmem>>, vector<64x128xf32>,
    %c14_i32 = arith.constant 14 : i32
    %137 = vector.broadcast %c14_i32 : i32 to vector<64x128xi32>
    %138 = arith.cmpi eq, %6, %137 : vector<64x128xi32>
    %c0_122 = arith.constant 0 : index
    %c13 = arith.constant 13 : index
    %c0_123 = arith.constant 0 : index
    %c0_124 = arith.constant 0 : index
    %139 = vector.load %arg2[%c0_122, %c13, %c0_123, %c0_124] : memref<1x19x64x128xbf16, #tpu.memory_space<vmem>>, vector<1x1x64x128xbf16>
    %140 = vector.shape_cast %139 : vector<1x1x64x128xbf16> to vector<64x128xbf16>
    %cst_125 = arith.constant 0.000000e+00 : bf16
    %141 = vector.broadcast %cst_125 : bf16 to vector<64x128xbf16>
    %142 = arith.select %138, %140, %141 : vector<64x128xi1>, vector<64x128xbf16>
    %c13_126 = arith.constant 13 : index
    %c0_127 = arith.constant 0 : index
    %c0_128 = arith.constant 0 : index
    %143 = vector.load %arg3[%c13_126, %c0_127, %c0_128] : memref<19x64x64xbf16, #tpu.memory_space<vmem>>, vector<1x64x64xbf16>
    %144 = vector.shape_cast %143 : vector<1x64x64xbf16> to vector<64x64xbf16>
    %cst_129 = arith.constant dense<0.000000e+00> : vector<64x128xf32>
    %145 = tpu.matmul %144, %142, %cst_129 {dimension_numbers = #tpu.dot_dimension_numbers<[1], [0], [0], [1], [0, 0, 1, 1], [], []>} : vector<64x64xbf16>, vector<64x128xbf16>, vector<64x128xf32> -> vector<64x128xf32>
    %c0_130 = arith.constant 0 : index
    %c1664 = arith.constant 1664 : index
    %146 = vector.load %arg6[%c0_130, %c1664] : memref<64x2432xf32, #tpu.memory_space<vmem>>, vector<64x128xf32>
    tpu.vector_store %arg6[%c0_130, %c1664], %145 {strides = array<i32>} : memref<64x2432xf32, #tpu.memory_space<vmem>>, vector<64x128xf32>,
    %c15_i32 = arith.constant 15 : i32
    %147 = vector.broadcast %c15_i32 : i32 to vector<64x128xi32>
    %148 = arith.cmpi eq, %6, %147 : vector<64x128xi32>
    %c0_131 = arith.constant 0 : index
    %c14 = arith.constant 14 : index
    %c0_132 = arith.constant 0 : index
    %c0_133 = arith.constant 0 : index
    %149 = vector.load %arg2[%c0_131, %c14, %c0_132, %c0_133] : memref<1x19x64x128xbf16, #tpu.memory_space<vmem>>, vector<1x1x64x128xbf16>
    %150 = vector.shape_cast %149 : vector<1x1x64x128xbf16> to vector<64x128xbf16>
    %cst_134 = arith.constant 0.000000e+00 : bf16
    %151 = vector.broadcast %cst_134 : bf16 to vector<64x128xbf16>
    %152 = arith.select %148, %150, %151 : vector<64x128xi1>, vector<64x128xbf16>
    %c14_135 = arith.constant 14 : index
    %c0_136 = arith.constant 0 : index
    %c0_137 = arith.constant 0 : index
    %153 = vector.load %arg3[%c14_135, %c0_136, %c0_137] : memref<19x64x64xbf16, #tpu.memory_space<vmem>>, vector<1x64x64xbf16>
    %154 = vector.shape_cast %153 : vector<1x64x64xbf16> to vector<64x64xbf16>
    %cst_138 = arith.constant dense<0.000000e+00> : vector<64x128xf32>
    %155 = tpu.matmul %154, %152, %cst_138 {dimension_numbers = #tpu.dot_dimension_numbers<[1], [0], [0], [1], [0, 0, 1, 1], [], []>} : vector<64x64xbf16>, vector<64x128xbf16>, vector<64x128xf32> -> vector<64x128xf32>
    %c0_139 = arith.constant 0 : index
    %c1792 = arith.constant 1792 : index
    %156 = vector.load %arg6[%c0_139, %c1792] : memref<64x2432xf32, #tpu.memory_space<vmem>>, vector<64x128xf32>
    tpu.vector_store %arg6[%c0_139, %c1792], %155 {strides = array<i32>} : memref<64x2432xf32, #tpu.memory_space<vmem>>, vector<64x128xf32>,
    %c16_i32 = arith.constant 16 : i32
    %157 = vector.broadcast %c16_i32 : i32 to vector<64x128xi32>
    %158 = arith.cmpi eq, %6, %157 : vector<64x128xi32>
    %c0_140 = arith.constant 0 : index
    %c15 = arith.constant 15 : index
    %c0_141 = arith.constant 0 : index
    %c0_142 = arith.constant 0 : index
    %159 = vector.load %arg2[%c0_140, %c15, %c0_141, %c0_142] : memref<1x19x64x128xbf16, #tpu.memory_space<vmem>>, vector<1x1x64x128xbf16>
    %160 = vector.shape_cast %159 : vector<1x1x64x128xbf16> to vector<64x128xbf16>
    %cst_143 = arith.constant 0.000000e+00 : bf16
    %161 = vector.broadcast %cst_143 : bf16 to vector<64x128xbf16>
    %162 = arith.select %158, %160, %161 : vector<64x128xi1>, vector<64x128xbf16>
    %c15_144 = arith.constant 15 : index
    %c0_145 = arith.constant 0 : index
    %c0_146 = arith.constant 0 : index
    %163 = vector.load %arg3[%c15_144, %c0_145, %c0_146] : memref<19x64x64xbf16, #tpu.memory_space<vmem>>, vector<1x64x64xbf16>
    %164 = vector.shape_cast %163 : vector<1x64x64xbf16> to vector<64x64xbf16>
    %cst_147 = arith.constant dense<0.000000e+00> : vector<64x128xf32>
    %165 = tpu.matmul %164, %162, %cst_147 {dimension_numbers = #tpu.dot_dimension_numbers<[1], [0], [0], [1], [0, 0, 1, 1], [], []>} : vector<64x64xbf16>, vector<64x128xbf16>, vector<64x128xf32> -> vector<64x128xf32>
    %c0_148 = arith.constant 0 : index
    %c1920 = arith.constant 1920 : index
    %166 = vector.load %arg6[%c0_148, %c1920] : memref<64x2432xf32, #tpu.memory_space<vmem>>, vector<64x128xf32>
    tpu.vector_store %arg6[%c0_148, %c1920], %165 {strides = array<i32>} : memref<64x2432xf32, #tpu.memory_space<vmem>>, vector<64x128xf32>,
    %c17_i32 = arith.constant 17 : i32
    %167 = vector.broadcast %c17_i32 : i32 to vector<64x128xi32>
    %168 = arith.cmpi eq, %6, %167 : vector<64x128xi32>
    %c0_149 = arith.constant 0 : index
    %c16 = arith.constant 16 : index
    %c0_150 = arith.constant 0 : index
    %c0_151 = arith.constant 0 : index
    %169 = vector.load %arg2[%c0_149, %c16, %c0_150, %c0_151] : memref<1x19x64x128xbf16, #tpu.memory_space<vmem>>, vector<1x1x64x128xbf16>
    %170 = vector.shape_cast %169 : vector<1x1x64x128xbf16> to vector<64x128xbf16>
    %cst_152 = arith.constant 0.000000e+00 : bf16
    %171 = vector.broadcast %cst_152 : bf16 to vector<64x128xbf16>
    %172 = arith.select %168, %170, %171 : vector<64x128xi1>, vector<64x128xbf16>
    %c16_153 = arith.constant 16 : index
    %c0_154 = arith.constant 0 : index
    %c0_155 = arith.constant 0 : index
    %173 = vector.load %arg3[%c16_153, %c0_154, %c0_155] : memref<19x64x64xbf16, #tpu.memory_space<vmem>>, vector<1x64x64xbf16>
    %174 = vector.shape_cast %173 : vector<1x64x64xbf16> to vector<64x64xbf16>
    %cst_156 = arith.constant dense<0.000000e+00> : vector<64x128xf32>
    %175 = tpu.matmul %174, %172, %cst_156 {dimension_numbers = #tpu.dot_dimension_numbers<[1], [0], [0], [1], [0, 0, 1, 1], [], []>} : vector<64x64xbf16>, vector<64x128xbf16>, vector<64x128xf32> -> vector<64x128xf32>
    %c0_157 = arith.constant 0 : index
    %c2048 = arith.constant 2048 : index
    %176 = vector.load %arg6[%c0_157, %c2048] : memref<64x2432xf32, #tpu.memory_space<vmem>>, vector<64x128xf32>
    tpu.vector_store %arg6[%c0_157, %c2048], %175 {strides = array<i32>} : memref<64x2432xf32, #tpu.memory_space<vmem>>, vector<64x128xf32>,
    %c18_i32 = arith.constant 18 : i32
    %177 = vector.broadcast %c18_i32 : i32 to vector<64x128xi32>
    %178 = arith.cmpi eq, %6, %177 : vector<64x128xi32>
    %c0_158 = arith.constant 0 : index
    %c17 = arith.constant 17 : index
    %c0_159 = arith.constant 0 : index
    %c0_160 = arith.constant 0 : index
    %179 = vector.load %arg2[%c0_158, %c17, %c0_159, %c0_160] : memref<1x19x64x128xbf16, #tpu.memory_space<vmem>>, vector<1x1x64x128xbf16>
    %180 = vector.shape_cast %179 : vector<1x1x64x128xbf16> to vector<64x128xbf16>
    %cst_161 = arith.constant 0.000000e+00 : bf16
    %181 = vector.broadcast %cst_161 : bf16 to vector<64x128xbf16>
    %182 = arith.select %178, %180, %181 : vector<64x128xi1>, vector<64x128xbf16>
    %c17_162 = arith.constant 17 : index
    %c0_163 = arith.constant 0 : index
    %c0_164 = arith.constant 0 : index
    %183 = vector.load %arg3[%c17_162, %c0_163, %c0_164] : memref<19x64x64xbf16, #tpu.memory_space<vmem>>, vector<1x64x64xbf16>
    %184 = vector.shape_cast %183 : vector<1x64x64xbf16> to vector<64x64xbf16>
    %cst_165 = arith.constant dense<0.000000e+00> : vector<64x128xf32>
    %185 = tpu.matmul %184, %182, %cst_165 {dimension_numbers = #tpu.dot_dimension_numbers<[1], [0], [0], [1], [0, 0, 1, 1], [], []>} : vector<64x64xbf16>, vector<64x128xbf16>, vector<64x128xf32> -> vector<64x128xf32>
    %c0_166 = arith.constant 0 : index
    %c2176 = arith.constant 2176 : index
    %186 = vector.load %arg6[%c0_166, %c2176] : memref<64x2432xf32, #tpu.memory_space<vmem>>, vector<64x128xf32>
    tpu.vector_store %arg6[%c0_166, %c2176], %185 {strides = array<i32>} : memref<64x2432xf32, #tpu.memory_space<vmem>>, vector<64x128xf32>,
    %c19_i32 = arith.constant 19 : i32
    %187 = vector.broadcast %c19_i32 : i32 to vector<64x128xi32>
    %188 = arith.cmpi eq, %6, %187 : vector<64x128xi32>
    %c0_167 = arith.constant 0 : index
    %c18 = arith.constant 18 : index
    %c0_168 = arith.constant 0 : index
    %c0_169 = arith.constant 0 : index
    %189 = vector.load %arg2[%c0_167, %c18, %c0_168, %c0_169] : memref<1x19x64x128xbf16, #tpu.memory_space<vmem>>, vector<1x1x64x128xbf16>
    %190 = vector.shape_cast %189 : vector<1x1x64x128xbf16> to vector<64x128xbf16>
    %cst_170 = arith.constant 0.000000e+00 : bf16
    %191 = vector.broadcast %cst_170 : bf16 to vector<64x128xbf16>
    %192 = arith.select %188, %190, %191 : vector<64x128xi1>, vector<64x128xbf16>
    %c18_171 = arith.constant 18 : index
    %c0_172 = arith.constant 0 : index
    %c0_173 = arith.constant 0 : index
    %193 = vector.load %arg3[%c18_171, %c0_172, %c0_173] : memref<19x64x64xbf16, #tpu.memory_space<vmem>>, vector<1x64x64xbf16>
    %194 = vector.shape_cast %193 : vector<1x64x64xbf16> to vector<64x64xbf16>
    %cst_174 = arith.constant dense<0.000000e+00> : vector<64x128xf32>
    %195 = tpu.matmul %194, %192, %cst_174 {dimension_numbers = #tpu.dot_dimension_numbers<[1], [0], [0], [1], [0, 0, 1, 1], [], []>} : vector<64x64xbf16>, vector<64x128xbf16>, vector<64x128xf32> -> vector<64x128xf32>
    %c0_175 = arith.constant 0 : index
    %c2304 = arith.constant 2304 : index
    %196 = vector.load %arg6[%c0_175, %c2304] : memref<64x2432xf32, #tpu.memory_space<vmem>>, vector<64x128xf32>
    tpu.vector_store %arg6[%c0_175, %c2304], %195 {strides = array<i32>} : memref<64x2432xf32, #tpu.memory_space<vmem>>, vector<64x128xf32>,
    %c0_176 = arith.constant 0 : index
    %c0_177 = arith.constant 0 : index
    %197 = vector.load %arg6[%c0_176, %c0_177] : memref<64x2432xf32, #tpu.memory_space<vmem>>, vector<64x2432xf32>
    %c0_178 = arith.constant 0 : index
    %c0_179 = arith.constant 0 : index
    %198 = vector.load %arg4[%c0_178, %c0_179] : memref<2432x128xf32, #tpu.memory_space<vmem>>, vector<2432x128xf32>
    %cst_180 = arith.constant dense<0.000000e+00> : vector<64x128xf32>
    %199 = tpu.matmul %197, %198, %cst_180 {dimension_numbers = #tpu.dot_dimension_numbers<[1], [0], [0], [1], [0, 0, 1, 1], [], []>} : vector<64x2432xf32>, vector<2432x128xf32>, vector<64x128xf32> -> vector<64x128xf32>
    %c0_181 = arith.constant 0 : index
    %c0_182 = arith.constant 0 : index
    %c0_183 = arith.constant 0 : index
    %200 = vector.load %arg5[%c0_181, %c0_182, %c0_183] : memref<1x64x128xf32, #tpu.memory_space<vmem>>, vector<1x64x128xf32>
    %201 = vector.shape_cast %200 : vector<1x64x128xf32> to vector<64x128xf32>
    %202 = vector.shape_cast %199 : vector<64x128xf32> to vector<1x64x128xf32>
    tpu.vector_store %arg5[%c0_181, %c0_182, %c0_183], %202 {strides = array<i32>} : memref<1x64x128xf32, #tpu.memory_space<vmem>>, vector<1x64x128xf32>,
    return
  }
  func.func @transform_0(%arg0: i32) -> (i32, i32, i32) {
    %c0_i32 = arith.constant 0 : i32
    %c0_i32_0 = arith.constant 0 : i32
    %c0_i32_1 = arith.constant 0 : i32
    return %arg0, %c0_i32, %c0_i32_0 : i32, i32, i32
  }
  func.func @transform_1(%arg0: i32) -> (i32, i32, i32, i32) {
    %c0_i32 = arith.constant 0 : i32
    %c0_i32_0 = arith.constant 0 : i32
    %c0_i32_1 = arith.constant 0 : i32
    %c0_i32_2 = arith.constant 0 : i32
    return %arg0, %c0_i32, %c0_i32_0, %c0_i32_1 : i32, i32, i32, i32
  }
  func.func @transform_2(%arg0: i32) -> (i32, i32, i32) {
    %c0_i32 = arith.constant 0 : i32
    %c0_i32_0 = arith.constant 0 : i32
    %c0_i32_1 = arith.constant 0 : i32
    %c0_i32_2 = arith.constant 0 : i32
    return %c0_i32, %c0_i32_0, %c0_i32_1 : i32, i32, i32
  }
  func.func @transform_3(%arg0: i32) -> (i32, i32) {
    %c0_i32 = arith.constant 0 : i32
    %c0_i32_0 = arith.constant 0 : i32
    %c0_i32_1 = arith.constant 0 : i32
    return %c0_i32, %c0_i32_0 : i32, i32
  }
  func.func @transform_4(%arg0: i32) -> (i32, i32, i32) {
    %c0_i32 = arith.constant 0 : i32
    %c0_i32_0 = arith.constant 0 : i32
    %c0_i32_1 = arith.constant 0 : i32
    return %arg0, %c0_i32, %c0_i32_0 : i32, i32, i32
  }
}

</mosaic_0001>

<llo_original>
// kernel: gmm_synth.1
$region0: #{gmm_synth.1}
  #allocation0 [shape = 'u32[]', space=smem, size = 0x4, offset = 0x4, fixed_abs, tag = 'smem constant byte address 0x4 - core index']
  #allocation1 [shape = 'u32[144,128]{1,0:T(1,128)}', space=vmem, size = 0x12000, scoped, tag = 'internal scratch']
  #allocation2 [shape = 'f32[64,2432]{1,0:T(8,128)}', space=vmem, size = 0x98000, scoped, tag = 'scratch operand']
  %s0 = inlined_call_operand.vmem [shape: f32[2,64,128], index: 0, kind: input, shape index: {}]
  %s1 = inlined_call_operand.vmem [shape: bf16[2,19,64,128], index: 1, kind: input, shape index: {}]
  %s2 = inlined_call_operand.vmem [shape: bf16[19,64,64], index: 2, kind: input, shape index: {}]
  %s3 = inlined_call_operand.vmem [shape: f32[2432,128], index: 3, kind: input, shape index: {}]
  %s4 = inlined_call_operand.hbm [shape: f32[2,64,128], index: 4, kind: output, shape index: {}]
  %s5 = sld [smem:[#allocation0]]
  $region49: #{gmm_synth.1} parent=0
    _
  %s7 = ssub.s32 1, %s5
  %s8 = scalar_select 0, %s7, %s5
  $region1: #{gmm_synth.1} parent=0
    #allocation3 [shape = 'u8[65536]{0}', space=vmem, size = 0x10000, scoped, tag = 'output window, operand 0']
    #allocation4 [shape = 's32[2]{0}', space=sflag, size = 0x8, scoped, tag = 'scoped memory for gmm_synth.1']
    %9 = vsyncpa [#allocation4], 0
    %s10 = scalar_lea.sflag [#allocation4], 1
    %11 = vsyncpa %s10, 0
    loop: start=0, step=1, limit=4
    $region2: #{gmm_synth.1} parent=1 // loop_pre_header
      _
    $region3: #{gmm_synth.1} parent=1 // loop_header
      %s13 = sphi 0, %s17
      %p14 = scmp.ge.s32.totalorder %s13, 4
      %s23 = sphi 0, %s25
      %s26 = sphi 0, %s23
      %s27 = sphi 0, %s26
      %s43 = sphi 0, %s27
      %s49 = sphi 0, %s51
      %s52 = sphi 0, %s49
      %s53 = sphi 0, %s52
      %s69 = sphi 0, %s53
      %s73 = sphi 0, %s73
      %s75 = sphi 0, %s73
      %s76 = sphi 0, %s75
      %s90 = sphi 0, %s76
      %s94 = sphi 0, %s94
      %s96 = sphi 0, %s94
      %s97 = sphi 0, %s96
      %s111 = sphi 0, %s97
      %s117 = sphi 0, %s119
      %s120 = sphi 0, %s117
      %s121 = sphi 0, %s120
      %s137 = sphi 0, %s121
    $region4: #{gmm_synth.1} parent=1 // loop_header_branch
      %16 = sbr.rel (%p14) target = $region8
    $region5: #{gmm_synth.1} parent=1 // loop_body
      %s18 = ssub.s32 %s13, 1
      %s19 = ssub.s32 %s13, 2
      %s20 = sadd.s32 %s13, 1
      %s21 = ssub.s32 %s13, %s20
      %p22 = scmp.eq.s32.totalorder %s21, 0
      %s24 = sadd.s32 %s23, 1
      %s25 = scalar_select %p22, %s23, %s24
      %p28 = pneg %p22
      %p29 = scmp.eq.s32.totalorder %s13, 1
      %p30 = por %p28, %p29
      %p31 = scmp.ne.s32.totalorder %s23, %s26
      %p32 = scmp.eq.s32.totalorder %s13, 0
      %p33 = por %p31, %p32
      %p34 = scmp.ne.s32.totalorder %s23, %s26
      %p35 = scmp.eq.s32.totalorder %s18, 1
      %p36 = por %p34, %p35
      %p37 = scmp.ne.s32.totalorder %s26, %s27
      %p38 = scmp.eq.s32.totalorder %s18, 0
      %p39 = por %p37, %p38
      %p40 = scmp.ne.s32.totalorder %s26, %s27
      %p41 = scmp.eq.s32.totalorder %s19, 1
      %p42 = por %p40, %p41
      %p44 = scmp.ne.s32.totalorder %s27, %s43
      %p45 = scmp.eq.s32.totalorder %s19, 0
      %p46 = por %p44, %p45
      %s47 = ssub.s32 %s13, %s20
      %p48 = scmp.eq.s32.totalorder %s47, 0
      %s50 = sadd.s32 %s49, 1
      %s51 = scalar_select %p48, %s49, %s50
      %p54 = pneg %p48
      %p55 = scmp.eq.s32.totalorder %s13, 1
      %p56 = por %p54, %p55
      %p57 = scmp.ne.s32.totalorder %s49, %s52
      %p58 = scmp.eq.s32.totalorder %s13, 0
      %p59 = por %p57, %p58
      %p60 = scmp.ne.s32.totalorder %s49, %s52
      %p61 = scmp.eq.s32.totalorder %s18, 1
      %p62 = por %p60, %p61
      %p63 = scmp.ne.s32.totalorder %s52, %s53
      %p64 = scmp.eq.s32.totalorder %s18, 0
      %p65 = por %p63, %p64
      %p66 = scmp.ne.s32.totalorder %s52, %s53
      %p67 = scmp.eq.s32.totalorder %s19, 1
      %p68 = por %p66, %p67
      %p70 = scmp.ne.s32.totalorder %s53, %s69
      %p71 = scmp.eq.s32.totalorder %s19, 0
      %p72 = por %p70, %p71
      %s74 = sadd.s32 %s73, 1
      %p77 = scmp.eq.s32.totalorder %s13, 1
      %p78 = scmp.ne.s32.totalorder %s73, %s75
      %p79 = scmp.eq.s32.totalorder %s13, 0
      %p80 = por %p78, %p79
      %p81 = scmp.ne.s32.totalorder %s73, %s75
      %p82 = scmp.eq.s32.totalorder %s18, 1
      %p83 = por %p81, %p82
      %p84 = scmp.ne.s32.totalorder %s75, %s76
      %p85 = scmp.eq.s32.totalorder %s18, 0
      %p86 = por %p84, %p85
      %p87 = scmp.ne.s32.totalorder %s75, %s76
      %p88 = scmp.eq.s32.totalorder %s19, 1
      %p89 = por %p87, %p88
      %p91 = scmp.ne.s32.totalorder %s76, %s90
      %p92 = scmp.eq.s32.totalorder %s19, 0
      %p93 = por %p91, %p92
      %s95 = sadd.s32 %s94, 1
      %p98 = scmp.eq.s32.totalorder %s13, 1
      %p99 = scmp.ne.s32.totalorder %s94, %s96
      %p100 = scmp.eq.s32.totalorder %s13, 0
      %p101 = por %p99, %p100
      %p102 = scmp.ne.s32.totalorder %s94, %s96
      %p103 = scmp.eq.s32.totalorder %s18, 1
      %p104 = por %p102, %p103
      %p105 = scmp.ne.s32.totalorder %s96, %s97
      %p106 = scmp.eq.s32.totalorder %s18, 0
      %p107 = por %p105, %p106
      %p108 = scmp.ne.s32.totalorder %s96, %s97
      %p109 = scmp.eq.s32.totalorder %s19, 1
      %p110 = por %p108, %p109
      %p112 = scmp.ne.s32.totalorder %s97, %s111
      %p113 = scmp.eq.s32.totalorder %s19, 0
      %p114 = por %p112, %p113
      %s115 = ssub.s32 %s13, %s20
      %p116 = scmp.eq.s32.totalorder %s115, 0
      %s118 = sadd.s32 %s117, 1
      %s119 = scalar_select %p116, %s117, %s118
      %p122 = pneg %p116
      %p123 = scmp.eq.s32.totalorder %s13, 1
      %p124 = por %p122, %p123
      %p125 = scmp.ne.s32.totalorder %s117, %s120
      %p126 = scmp.eq.s32.totalorder %s13, 0
      %p127 = por %p125, %p126
      %p128 = scmp.ne.s32.totalorder %s117, %s120
      %p129 = scmp.eq.s32.totalorder %s18, 1
      %p130 = por %p128, %p129
      %p131 = scmp.ne.s32.totalorder %s120, %s121
      %p132 = scmp.eq.s32.totalorder %s18, 0
      %p133 = por %p131, %p132
      %p134 = scmp.ne.s32.totalorder %s120, %s121
      %p135 = scmp.eq.s32.totalorder %s19, 1
      %p136 = por %p134, %p135
      %p138 = scmp.ne.s32.totalorder %s121, %s137
      %p139 = scmp.eq.s32.totalorder %s19, 0
      %p140 = por %p138, %p139
      %p141 = scmp.le.s32.totalorder 1, %s13
      %p142 = scmp.lt.s32.totalorder %s13, 3
      %p143 = pnand %p141, %p142
      %p144 = pneg %p143
      // Predicated region
      $region9: #{gmm_synth.1} parent=5 // pred_check
        _
      $region10: #{gmm_synth.1} parent=5 // pred_check_branch
        %146 = sbr.rel (%p143) target = $region12
      $region11: #{gmm_synth.1} parent=5 // pred_region
        %s147 = ssub.s32 %s13, 1
        // Predicated region
        $region13: #{gmm_synth.1} parent=11 // pred_check
          %p148 = pneg %p86
        $region14: #{gmm_synth.1} parent=11 // pred_check_branch
          %150 = sbr.rel (%p148) target = $region16
        $region15: #{gmm_synth.1} parent=11 // pred_region
          _
        $region16: #{gmm_synth.1} parent=11 // pred_fallthru
          _
        // Predicated region
        $region17: #{gmm_synth.1} parent=11 // pred_check
          %p151 = pneg %p107
        $region18: #{gmm_synth.1} parent=11 // pred_check_branch
          %153 = sbr.rel (%p151) target = $region20
        $region19: #{gmm_synth.1} parent=11 // pred_region
          _
        $region20: #{gmm_synth.1} parent=11 // pred_fallthru
          _
      $region12: #{gmm_synth.1} parent=5 // pred_fallthru
        _
      %p154 = scmp.lt.s32.totalorder %s13, 2
      // Predicated region
      $region21: #{gmm_synth.1} parent=5 // pred_check
        %p155 = pneg %p154
      $region22: #{gmm_synth.1} parent=5 // pred_check_branch
        %157 = sbr.rel (%p155) target = $region24
      $region23: #{gmm_synth.1} parent=5 // pred_region
        // Predicated region
        $region25: #{gmm_synth.1} parent=23 // pred_check
          %p158 = pneg %p33
        $region26: #{gmm_synth.1} parent=23 // pred_check_branch
          %160 = sbr.rel (%p158) target = $region28
        $region27: #{gmm_synth.1} parent=23 // pred_region
          %p161 = scmp.lt.s32.totalorder %s13, 1
          %s162 = scalar_select %p161, %s13, 1
          %s163 = smul.addr %s162, 8
          %s164 = smul.addr %s163, 8
          %s165 = scalar_lea.vmem %s0, %s164
        $region28: #{gmm_synth.1} parent=23 // pred_fallthru
          _
        // Predicated region
        $region29: #{gmm_synth.1} parent=23 // pred_check
          %p166 = pneg %p59
        $region30: #{gmm_synth.1} parent=23 // pred_check_branch
          %168 = sbr.rel (%p166) target = $region32
        $region31: #{gmm_synth.1} parent=23 // pred_region
          %p169 = scmp.lt.s32.totalorder %s13, 1
          %s170 = scalar_select %p169, %s13, 1
          %s171 = smul.addr %s170, 152
          %s172 = smul.addr %s171, 4
          %s173 = scalar_lea.vmem %s1, %s172
        $region32: #{gmm_synth.1} parent=23 // pred_fallthru
          _
      $region24: #{gmm_synth.1} parent=5 // pred_fallthru
        _
      %p174 = scmp.le.s32.totalorder 1, %s13
      %p175 = scmp.lt.s32.totalorder %s13, 3
      %p176 = pnand %p174, %p175
      %p177 = pneg %p176
      // Predicated region
      $region33: #{gmm_synth.1} parent=5 // pred_check
        _
      $region34: #{gmm_synth.1} parent=5 // pred_check_branch
        %179 = sbr.rel (%p176) target = $region36
      $region35: #{gmm_synth.1} parent=5 // pred_region
        %s180 = ssub.s32 %s13, 1
        %p181 = scmp.lt.s32.totalorder %s18, 1
        %s182 = scalar_select %p181, %s18, 1
        %s183 = smul.addr %s182, 8
        %s184 = smul.addr %s183, 8
        %s185 = scalar_lea.vmem %s0, %s184
        %p186 = pneg %p39
        %p187 = pneg %p36
        %p188 = scmp.lt.s32.totalorder %s18, 1
        %s189 = scalar_select %p188, %s18, 1
        %s190 = smul.addr %s189, 152
        %s191 = smul.addr %s190, 4
        %s192 = scalar_lea.vmem %s1, %s191
        %p193 = pneg %p65
        %p194 = pneg %p62
        %p195 = pneg %p86
        %p196 = pneg %p83
        %p197 = pneg %p107
        %p198 = pneg %p104
        %p199 = pneg %p133
        %p200 = pneg %p130
        %s201 = sand.u32 %s120, 1
        %s202 = scalar_lea.sflag [#allocation4], %s201
        %s203 = sand.u32 %s120, 1
        %s204 = smul.addr %s203, 64
        %s205 = scalar_lea.vmem [#allocation3], %s204
        %p206 = scmp.lt.s32.totalorder %s18, 1
        %s207 = scalar_select %p206, %s18, 1
        %s208 = smul.addr %s207, 8
        %s209 = smul.addr %s208, 8
        %s210 = scalar_lea.vmem %s0, %s209
        %p211 = scmp.lt.s32.totalorder %s18, 1
        %s212 = scalar_select %p211, %s18, 1
        %s213 = smul.addr %s212, 152
        %s214 = smul.addr %s213, 4
        %s215 = scalar_lea.vmem %s1, %s214
        %v217 = vld [vmem:[%s210] sm:$0xff]
        %v218 = vld [vmem:[%s210 + $0x8] sm:$0xff]
        %v219 = vld [vmem:[%s210 + $0x10] sm:$0xff]
        %v220 = vld [vmem:[%s210 + $0x18] sm:$0xff]
        %v221 = vld [vmem:[%s210 + $0x20] sm:$0xff]
        %v222 = vld [vmem:[%s210 + $0x28] sm:$0xff]
        %v223 = vld [vmem:[%s210 + $0x30] sm:$0xff]
        %v224 = vld [vmem:[%s210 + $0x38] sm:$0xff]
        %v225 = vrcp.pop 255.0
        %v226 = vmul.f32 %v217, %v225
        %v227 = vmul.f32 %v218, %v225
        %v228 = vmul.f32 %v219, %v225
        %v229 = vmul.f32 %v220, %v225
        %v230 = vmul.f32 %v221, %v225
        %v231 = vmul.f32 %v222, %v225
        %v232 = vmul.f32 %v223, %v225
        %v233 = vmul.f32 %v224, %v225
        %v234 = vmul.f32 %v226, 20.0
        %v235 = vmul.f32 %v227, 20.0
        %v236 = vmul.f32 %v228, 20.0
        %v237 = vmul.f32 %v229, 20.0
        %v238 = vmul.f32 %v230, 20.0
        %v239 = vmul.f32 %v231, 20.0
        %v240 = vmul.f32 %v232, 20.0
        %v241 = vmul.f32 %v233, 20.0
        %v242 = vcvt.f32.s32.to.zero.pseudo %v234
        %v243 = vcvt.f32.s32.to.zero.pseudo %v235
        %v244 = vcvt.f32.s32.to.zero.pseudo %v236
        %v245 = vcvt.f32.s32.to.zero.pseudo %v237
        %v246 = vcvt.f32.s32.to.zero.pseudo %v238
        %v247 = vcvt.f32.s32.to.zero.pseudo %v239
        %v248 = vcvt.f32.s32.to.zero.pseudo %v240
        %v249 = vcvt.f32.s32.to.zero.pseudo %v241
        %vm250 = vcmp.eq.s32.totalorder %v242, 1
        %vm251 = vcmp.eq.s32.totalorder %v243, 1
        %vm252 = vcmp.eq.s32.totalorder %v244, 1
        %vm253 = vcmp.eq.s32.totalorder %v245, 1
        %vm254 = vcmp.eq.s32.totalorder %v246, 1
        %vm255 = vcmp.eq.s32.totalorder %v247, 1
        %vm256 = vcmp.eq.s32.totalorder %v248, 1
        %vm257 = vcmp.eq.s32.totalorder %v249, 1
        %v258 = vld [vmem:[%s215] sm:$0xf]
        %v259 = vld [vmem:[%s215 + $0x4] sm:$0xf]
        %v260 = vld [vmem:[%s215 + $0x8] sm:$0xf]
        %v261 = vld [vmem:[%s215 + $0xc] sm:$0xf]
        %v262 = vld [vmem:[%s215 + $0x10] sm:$0xf]
        %v263 = vld [vmem:[%s215 + $0x14] sm:$0xf]
        %v264 = vld [vmem:[%s215 + $0x18] sm:$0xf]
        %v265 = vld [vmem:[%s215 + $0x1c] sm:$0xf]
        %vm266 = vmpackc.low %vm250, %vm250
        %vm267 = vmpackc.low %vm251, %vm251
        %vm268 = vmpackc.low %vm252, %vm252
        %vm269 = vmpackc.low %vm253, %vm253
        %vm270 = vmpackc.low %vm254, %vm254
        %vm271 = vmpackc.low %vm255, %vm255
        %vm272 = vmpackc.low %vm256, %vm256
        %vm273 = vmpackc.low %vm257, %vm257
        %v274 = vsel %vm266, %v258, 0
        %v275 = vsel %vm267, %v259, 0
        %v276 = vsel %vm268, %v260, 0
        %v277 = vsel %vm269, %v261, 0
        %v278 = vsel %vm270, %v262, 0
        %v279 = vsel %vm271, %v263, 0
        %v280 = vsel %vm272, %v264, 0
        %v281 = vsel %vm273, %v265, 0
        %v282 = vld [vmem:[%s2] sm:$0xf]
        %v283 = vld [vmem:[%s2 + $0x4] sm:$0xf]
        %v284 = vld [vmem:[%s2 + $0x8] sm:$0xf]
        %v285 = vld [vmem:[%s2 + $0xc] sm:$0xf]
        %v286 = vld [vmem:[%s2 + $0x10] sm:$0xf]
        %v287 = vld [vmem:[%s2 + $0x14] sm:$0xf]
        %v288 = vld [vmem:[%s2 + $0x18] sm:$0xf]
        %v289 = vld [vmem:[%s2 + $0x1c] sm:$0xf]
        %v298 = vunpack.c.l.b16 %v282
        %v299 = vunpack.c.l.b16 %v283
        %v300 = vunpack.c.l.b16 %v284
        %v301 = vunpack.c.l.b16 %v285
        %v302 = vunpack.c.l.b16 %v286
        %v303 = vunpack.c.l.b16 %v287
        %v304 = vunpack.c.l.b16 %v288
        %v305 = vunpack.c.l.b16 %v289
        %v306 = vpack.c.b16 %v299, %v298
        %v307 = vpack.c.b16 %v301, %v300
        %v308 = vpack.c.b16 %v303, %v302
        %v309 = vpack.c.b16 %v305, %v304
        %v318 = vunpack.c.l.b16 %v274
        %v319 = vunpack.c.l.b16 %v275
        %v320 = vunpack.c.l.b16 %v276
        %v321 = vunpack.c.l.b16 %v277
        %v322 = vunpack.c.l.b16 %v278
        %v323 = vunpack.c.l.b16 %v279
        %v324 = vunpack.c.l.b16 %v280
        %v325 = vunpack.c.l.b16 %v281
        %v326 = vpack.c.b16 %v319, %v318
        %v327 = vpack.c.b16 %v321, %v320
        %v328 = vpack.c.b16 %v323, %v322
        %v329 = vpack.c.b16 %v325, %v324
        %vm334 = vcmask 523264
        %v336 = vsel %vm334, %v306, 0
        %v339 = vsel %vm334, %v307, 0
        %v342 = vsel %vm334, %v308, 0
        %v345 = vsel %vm334, %v309, 0
        %347 = vmatprep.subr.bf16.mxu0 0
        %348 = vmatpush1.bf16.msra.mxu0 %v326
        %349 = vmatprep.subr.bf16.mxu0 0
        %350 = vmatpush1.bf16.msra.mxu0 %v327
        %351 = vmatprep.subr.bf16.mxu0 0
        %352 = vmatpush1.bf16.msra.mxu0 %v328
        %353 = vmatprep.subr.bf16.mxu0 0
        %354 = vmatpush1.bf16.msra.mxu0 %v329
        %355 = vmatprep.subr.bf16.mxu0 0
        %356 = vmatpush1.bf16.msra.mxu0 0
        %357 = vmatprep.subr.bf16.mxu0 0
        %358 = vmatpush1.bf16.msra.mxu0 0
        %359 = vmatprep.subr.bf16.mxu0 0
        %360 = vmatpush1.bf16.msra.mxu0 0
        %361 = vmatprep.subr.bf16.mxu0 0
        %362 = vmatpush1.bf16.msra.mxu0 0
        %363 = vmatprep.subr.bf16.mxu0 0
        %364 = vmatpush1.bf16.msra.mxu0 0
        %365 = vmatprep.subr.bf16.mxu0 0
        %366 = vmatpush1.bf16.msra.mxu0 0
        %367 = vmatprep.subr.bf16.mxu0 0
        %368 = vmatpush1.bf16.msra.mxu0 0
        %369 = vmatprep.subr.bf16.mxu0 0
        %370 = vmatpush1.bf16.msra.mxu0 0
        %371 = vmatprep.subr.bf16.mxu0 0
        %372 = vmatpush1.bf16.msra.mxu0 0
        %373 = vmatprep.subr.bf16.mxu0 0
        %374 = vmatpush1.bf16.msra.mxu0 0
        %375 = vmatprep.subr.bf16.mxu0 0
        %376 = vmatpush1.bf16.msra.mxu0 0
        %377 = vmatprep.subr.bf16.mxu0 0
        %378 = vmatpush1.bf16.msra.mxu0 0
        %379 = vmatprep.mubr.bf16.mxu0 0
        %380 = vmatmul.mubr.bf16.gmra.mrb[0].mxu0 %v336
        %v381 = vpop.f32.mrb[0].mxu0
        %v382 = vadd.f32 0.0, %v381
        %v383 = vpop.f32.mrb[0].mxu0
        %v384 = vpop.f32.mrb[0].mxu0
        %v385 = vadd.f32 0.0, %v384
        %v386 = vpop.f32.mrb[0].mxu0
        %387 = vmatprep.mubr.bf16.mxu0 0
        %388 = vmatmul.mubr.bf16.gmra.mrb[0].mxu0 %v339
        %v389 = vpop.f32.mrb[0].mxu0
        %v390 = vadd.f32 0.0, %v389
        %v391 = vpop.f32.mrb[0].mxu0
        %v392 = vpop.f32.mrb[0].mxu0
        %v393 = vadd.f32 0.0, %v392
        %v394 = vpop.f32.mrb[0].mxu0
        %395 = vmatprep.mubr.bf16.mxu0 0
        %396 = vmatmul.mubr.bf16.gmra.mrb[0].mxu0 %v342
        %v397 = vpop.f32.mrb[0].mxu0
        %v398 = vadd.f32 0.0, %v397
        %v399 = vpop.f32.mrb[0].mxu0
        %v400 = vpop.f32.mrb[0].mxu0
        %v401 = vadd.f32 0.0, %v400
        %v402 = vpop.f32.mrb[0].mxu0
        %403 = vmatprep.mubr.bf16.mxu0 0
        %404 = vmatmul.mubr.bf16.gmra.mrb[0].mxu0 %v345
        %v405 = vpop.f32.mrb[0].mxu0
        %v406 = vadd.f32 0.0, %v405
        %v407 = vpop.f32.mrb[0].mxu0
        %v408 = vpop.f32.mrb[0].mxu0
        %v409 = vadd.f32 0.0, %v408
        %v410 = vpop.f32.mrb[0].mxu0
        %411 = vdwg.mxu0
        %412 = vst [vmem:[#allocation2] sm:$0xff] %v382
        %413 = vst [vmem:[#allocation2 + $0x98] sm:$0xff] %v385
        %414 = vst [vmem:[#allocation2 + $0x130] sm:$0xff] %v390
        %415 = vst [vmem:[#allocation2 + $0x1c8] sm:$0xff] %v393
        %416 = vst [vmem:[#allocation2 + $0x260] sm:$0xff] %v398
        %417 = vst [vmem:[#allocation2 + $0x2f8] sm:$0xff] %v401
        %418 = vst [vmem:[#allocation2 + $0x390] sm:$0xff] %v406
        %419 = vst [vmem:[#allocation2 + $0x428] sm:$0xff] %v409
        %vm420 = vcmp.eq.s32.totalorder %v242, 2
        %vm421 = vcmp.eq.s32.totalorder %v243, 2
        %vm422 = vcmp.eq.s32.totalorder %v244, 2
        %vm423 = vcmp.eq.s32.totalorder %v245, 2
        %vm424 = vcmp.eq.s32.totalorder %v246, 2
        %vm425 = vcmp.eq.s32.totalorder %v247, 2
        %vm426 = vcmp.eq.s32.totalorder %v248, 2
        %vm427 = vcmp.eq.s32.totalorder %v249, 2
        %s428 = scalar_lea.vmem %s215, 32
        %v429 = vld [vmem:[%s428] sm:$0xf]
        %v430 = vld [vmem:[%s428 + $0x4] sm:$0xf]
        %v431 = vld [vmem:[%s428 + $0x8] sm:$0xf]
        %v432 = vld [vmem:[%s428 + $0xc] sm:$0xf]
        %v433 = vld [vmem:[%s428 + $0x10] sm:$0xf]
        %v434 = vld [vmem:[%s428 + $0x14] sm:$0xf]
        %v435 = vld [vmem:[%s428 + $0x18] sm:$0xf]
        %v436 = vld [vmem:[%s428 + $0x1c] sm:$0xf]
        %vm437 = vmpackc.low %vm420, %vm420
        %vm438 = vmpackc.low %vm421, %vm421
        %vm439 = vmpackc.low %vm422, %vm422
        %vm440 = vmpackc.low %vm423, %vm423
        %vm441 = vmpackc.low %vm424, %vm424
        %vm442 = vmpackc.low %vm425, %vm425
        %vm443 = vmpackc.low %vm426, %vm426
        %vm444 = vmpackc.low %vm427, %vm427
        %v445 = vsel %vm437, %v429, 0
        %v446 = vsel %vm438, %v430, 0
        %v447 = vsel %vm439, %v431, 0
        %v448 = vsel %vm440, %v432, 0
        %v449 = vsel %vm441, %v433, 0
        %v450 = vsel %vm442, %v434, 0
        %v451 = vsel %vm443, %v435, 0
        %v452 = vsel %vm444, %v436, 0
        %s453 = scalar_lea.vmem %s2, 32
        %v454 = vld [vmem:[%s453] sm:$0xf]
        %v455 = vld [vmem:[%s453 + $0x4] sm:$0xf]
        %v456 = vld [vmem:[%s453 + $0x8] sm:$0xf]
        %v457 = vld [vmem:[%s453 + $0xc] sm:$0xf]
        %v458 = vld [vmem:[%s453 + $0x10] sm:$0xf]
        %v459 = vld [vmem:[%s453 + $0x14] sm:$0xf]
        %v460 = vld [vmem:[%s453 + $0x18] sm:$0xf]
        %v461 = vld [vmem:[%s453 + $0x1c] sm:$0xf]
        %v470 = vunpack.c.l.b16 %v454
        %v471 = vunpack.c.l.b16 %v455
        %v472 = vunpack.c.l.b16 %v456
        %v473 = vunpack.c.l.b16 %v457
        %v474 = vunpack.c.l.b16 %v458
        %v475 = vunpack.c.l.b16 %v459
        %v476 = vunpack.c.l.b16 %v460
        %v477 = vunpack.c.l.b16 %v461
        %v478 = vpack.c.b16 %v471, %v470
        %v479 = vpack.c.b16 %v473, %v472
        %v480 = vpack.c.b16 %v475, %v474
        %v481 = vpack.c.b16 %v477, %v476
        %v490 = vunpack.c.l.b16 %v445
        %v491 = vunpack.c.l.b16 %v446
        %v492 = vunpack.c.l.b16 %v447
        %v493 = vunpack.c.l.b16 %v448
        %v494 = vunpack.c.l.b16 %v449
        %v495 = vunpack.c.l.b16 %v450
        %v496 = vunpack.c.l.b16 %v451
        %v497 = vunpack.c.l.b16 %v452
        %v498 = vpack.c.b16 %v491, %v490
        %v499 = vpack.c.b16 %v493, %v492
        %v500 = vpack.c.b16 %v495, %v494
        %v501 = vpack.c.b16 %v497, %v496
        %v507 = vsel %vm334, %v478, 0
        %v510 = vsel %vm334, %v479, 0
        %v513 = vsel %vm334, %v480, 0
        %v516 = vsel %vm334, %v481, 0
        %518 = vmatprep.subr.bf16.mxu0 0
        %519 = vmatpush1.bf16.msra.mxu0 %v498
        %520 = vmatprep.subr.bf16.mxu0 0
        %521 = vmatpush1.bf16.msra.mxu0 %v499
        %522 = vmatprep.subr.bf16.mxu0 0
        %523 = vmatpush1.bf16.msra.mxu0 %v500
        %524 = vmatprep.subr.bf16.mxu0 0
        %525 = vmatpush1.bf16.msra.mxu0 %v501
        %526 = vmatprep.subr.bf16.mxu0 0
        %527 = vmatpush1.bf16.msra.mxu0 0
        %528 = vmatprep.subr.bf16.mxu0 0
        %529 = vmatpush1.bf16.msra.mxu0 0
        %530 = vmatprep.subr.bf16.mxu0 0
        %531 = vmatpush1.bf16.msra.mxu0 0
        %532 = vmatprep.subr.bf16.mxu0 0
        %533 = vmatpush1.bf16.msra.mxu0 0
        %534 = vmatprep.subr.bf16.mxu0 0
        %535 = vmatpush1.bf16.msra.mxu0 0
        %536 = vmatprep.subr.bf16.mxu0 0
        %537 = vmatpush1.bf16.msra.mxu0 0
        %538 = vmatprep.subr.bf16.mxu0 0
        %539 = vmatpush1.bf16.msra.mxu0 0
        %540 = vmatprep.subr.bf16.mxu0 0
        %541 = vmatpush1.bf16.msra.mxu0 0
        %542 = vmatprep.subr.bf16.mxu0 0
        %543 = vmatpush1.bf16.msra.mxu0 0
        %544 = vmatprep.subr.bf16.mxu0 0
        %545 = vmatpush1.bf16.msra.mxu0 0
        %546 = vmatprep.subr.bf16.mxu0 0
        %547 = vmatpush1.bf16.msra.mxu0 0
        %548 = vmatprep.subr.bf16.mxu0 0
        %549 = vmatpush1.bf16.msra.mxu0 0
        %550 = vmatprep.mubr.bf16.mxu0 0
        %551 = vmatmul.mubr.bf16.gmra.mrb[0].mxu0 %v507
        %v552 = vpop.f32.mrb[0].mxu0
        %v553 = vadd.f32 0.0, %v552
        %v554 = vpop.f32.mrb[0].mxu0
        %v555 = vpop.f32.mrb[0].mxu0
        %v556 = vadd.f32 0.0, %v555
        %v557 = vpop.f32.mrb[0].mxu0
        %558 = vmatprep.mubr.bf16.mxu0 0
        %559 = vmatmul.mubr.bf16.gmra.mrb[0].mxu0 %v510
        %v560 = vpop.f32.mrb[0].mxu0
        %v561 = vadd.f32 0.0, %v560
        %v562 = vpop.f32.mrb[0].mxu0
        %v563 = vpop.f32.mrb[0].mxu0
        %v564 = vadd.f32 0.0, %v563
        %v565 = vpop.f32.mrb[0].mxu0
        %566 = vmatprep.mubr.bf16.mxu0 0
        %567 = vmatmul.mubr.bf16.gmra.mrb[0].mxu0 %v513
        %v568 = vpop.f32.mrb[0].mxu0
        %v569 = vadd.f32 0.0, %v568
        %v570 = vpop.f32.mrb[0].mxu0
        %v571 = vpop.f32.mrb[0].mxu0
        %v572 = vadd.f32 0.0, %v571
        %v573 = vpop.f32.mrb[0].mxu0
        %574 = vmatprep.mubr.bf16.mxu0 0
        %575 = vmatmul.mubr.bf16.gmra.mrb[0].mxu0 %v516
        %v576 = vpop.f32.mrb[0].mxu0
        %v577 = vadd.f32 0.0, %v576
        %v578 = vpop.f32.mrb[0].mxu0
        %v579 = vpop.f32.mrb[0].mxu0
        %v580 = vadd.f32 0.0, %v579
        %v581 = vpop.f32.mrb[0].mxu0
        %582 = vdwg.mxu0
        %583 = vst [vmem:[#allocation2 + $0x8] sm:$0xff] %v553
        %584 = vst [vmem:[#allocation2 + $0xa0] sm:$0xff] %v556
        %585 = vst [vmem:[#allocation2 + $0x138] sm:$0xff] %v561
        %586 = vst [vmem:[#allocation2 + $0x1d0] sm:$0xff] %v564
        %587 = vst [vmem:[#allocation2 + $0x268] sm:$0xff] %v569
        %588 = vst [vmem:[#allocation2 + $0x300] sm:$0xff] %v572
        %589 = vst [vmem:[#allocation2 + $0x398] sm:$0xff] %v577
        %590 = vst [vmem:[#allocation2 + $0x430] sm:$0xff] %v580
        %vm591 = vcmp.eq.s32.totalorder %v242, 3
        %vm592 = vcmp.eq.s32.totalorder %v243, 3
        %vm593 = vcmp.eq.s32.totalorder %v244, 3
        %vm594 = vcmp.eq.s32.totalorder %v245, 3
        %vm595 = vcmp.eq.s32.totalorder %v246, 3
        %vm596 = vcmp.eq.s32.totalorder %v247, 3
        %vm597 = vcmp.eq.s32.totalorder %v248, 3
        %vm598 = vcmp.eq.s32.totalorder %v249, 3
        %s599 = scalar_lea.vmem %s215, 64
        %v600 = vld [vmem:[%s599] sm:$0xf]
        %v601 = vld [vmem:[%s599 + $0x4] sm:$0xf]
        %v602 = vld [vmem:[%s599 + $0x8] sm:$0xf]
        %v603 = vld [vmem:[%s599 + $0xc] sm:$0xf]
        %v604 = vld [vmem:[%s599 + $0x10] sm:$0xf]
        %v605 = vld [vmem:[%s599 + $0x14] sm:$0xf]
        %v606 = vld [vmem:[%s599 + $0x18] sm:$0xf]
        %v607 = vld [vmem:[%s599 + $0x1c] sm:$0xf]
        %vm608 = vmpackc.low %vm591, %vm591
        %vm609 = vmpackc.low %vm592, %vm592
        %vm610 = vmpackc.low %vm593, %vm593
        %vm611 = vmpackc.low %vm594, %vm594
        %vm612 = vmpackc.low %vm595, %vm595
        %vm613 = vmpackc.low %vm596, %vm596
        %vm614 = vmpackc.low %vm597, %vm597
        %vm615 = vmpackc.low %vm598, %vm598
        %v616 = vsel %vm608, %v600, 0
        %v617 = vsel %vm609, %v601, 0
        %v618 = vsel %vm610, %v602, 0
        %v619 = vsel %vm611, %v603, 0
        %v620 = vsel %vm612, %v604, 0
        %v621 = vsel %vm613, %v605, 0
        %v622 = vsel %vm614, %v606, 0
        %v623 = vsel %vm615, %v607, 0
        %s624 = scalar_lea.vmem %s2, 64
        %v625 = vld [vmem:[%s624] sm:$0xf]
        %v626 = vld [vmem:[%s624 + $0x4] sm:$0xf]
        %v627 = vld [vmem:[%s624 + $0x8] sm:$0xf]
        %v628 = vld [vmem:[%s624 + $0xc] sm:$0xf]
        %v629 = vld [vmem:[%s624 + $0x10] sm:$0xf]
        %v630 = vld [vmem:[%s624 + $0x14] sm:$0xf]
        %v631 = vld [vmem:[%s624 + $0x18] sm:$0xf]
        %v632 = vld [vmem:[%s624 + $0x1c] sm:$0xf]
        %v641 = vunpack.c.l.b16 %v625
        %v642 = vunpack.c.l.b16 %v626
        %v643 = vunpack.c.l.b16 %v627
        %v644 = vunpack.c.l.b16 %v628
        %v645 = vunpack.c.l.b16 %v629
        %v646 = vunpack.c.l.b16 %v630
        %v647 = vunpack.c.l.b16 %v631
        %v648 = vunpack.c.l.b16 %v632
        %v649 = vpack.c.b16 %v642, %v641
        %v650 = vpack.c.b16 %v644, %v643
        %v651 = vpack.c.b16 %v646, %v645
        %v652 = vpack.c.b16 %v648, %v647
        %v661 = vunpack.c.l.b16 %v616
        %v662 = vunpack.c.l.b16 %v617
        %v663 = vunpack.c.l.b16 %v618
        %v664 = vunpack.c.l.b16 %v619
        %v665 = vunpack.c.l.b16 %v620
        %v666 = vunpack.c.l.b16 %v621
        %v667 = vunpack.c.l.b16 %v622
        %v668 = vunpack.c.l.b16 %v623
        %v669 = vpack.c.b16 %v662, %v661
        %v670 = vpack.c.b16 %v664, %v663
        %v671 = vpack.c.b16 %v666, %v665
        %v672 = vpack.c.b16 %v668, %v667
        %v678 = vsel %vm334, %v649, 0
        %v681 = vsel %vm334, %v650, 0
        %v684 = vsel %vm334, %v651, 0
        %v687 = vsel %vm334, %v652, 0
        %689 = vmatprep.subr.bf16.mxu0 0
        %690 = vmatpush1.bf16.msra.mxu0 %v669
        %691 = vmatprep.subr.bf16.mxu0 0
        %692 = vmatpush1.bf16.msra.mxu0 %v670
        %693 = vmatprep.subr.bf16.mxu0 0
        %694 = vmatpush1.bf16.msra.mxu0 %v671
        %695 = vmatprep.subr.bf16.mxu0 0
        %696 = vmatpush1.bf16.msra.mxu0 %v672
        %697 = vmatprep.subr.bf16.mxu0 0
        %698 = vmatpush1.bf16.msra.mxu0 0
        %699 = vmatprep.subr.bf16.mxu0 0
        %700 = vmatpush1.bf16.msra.mxu0 0
        %701 = vmatprep.subr.bf16.mxu0 0
        %702 = vmatpush1.bf16.msra.mxu0 0
        %703 = vmatprep.subr.bf16.mxu0 0
        %704 = vmatpush1.bf16.msra.mxu0 0
        %705 = vmatprep.subr.bf16.mxu0 0
        %706 = vmatpush1.bf16.msra.mxu0 0
        %707 = vmatprep.subr.bf16.mxu0 0
        %708 = vmatpush1.bf16.msra.mxu0 0
        %709 = vmatprep.subr.bf16.mxu0 0
        %710 = vmatpush1.bf16.msra.mxu0 0
        %711 = vmatprep.subr.bf16.mxu0 0
        %712 = vmatpush1.bf16.msra.mxu0 0
        %713 = vmatprep.subr.bf16.mxu0 0
        %714 = vmatpush1.bf16.msra.mxu0 0
        %715 = vmatprep.subr.bf16.mxu0 0
        %716 = vmatpush1.bf16.msra.mxu0 0
        %717 = vmatprep.subr.bf16.mxu0 0
        %718 = vmatpush1.bf16.msra.mxu0 0
        %719 = vmatprep.subr.bf16.mxu0 0
        %720 = vmatpush1.bf16.msra.mxu0 0
        %721 = vmatprep.mubr.bf16.mxu0 0
        %722 = vmatmul.mubr.bf16.gmra.mrb[0].mxu0 %v678
        %v723 = vpop.f32.mrb[0].mxu0
        %v724 = vadd.f32 0.0, %v723
        %v725 = vpop.f32.mrb[0].mxu0
        %v726 = vpop.f32.mrb[0].mxu0
        %v727 = vadd.f32 0.0, %v726
        %v728 = vpop.f32.mrb[0].mxu0
        %729 = vmatprep.mubr.bf16.mxu0 0
        %730 = vmatmul.mubr.bf16.gmra.mrb[0].mxu0 %v681
        %v731 = vpop.f32.mrb[0].mxu0
        %v732 = vadd.f32 0.0, %v731
        %v733 = vpop.f32.mrb[0].mxu0
        %v734 = vpop.f32.mrb[0].mxu0
        %v735 = vadd.f32 0.0, %v734
        %v736 = vpop.f32.mrb[0].mxu0
        %737 = vmatprep.mubr.bf16.mxu0 0
        %738 = vmatmul.mubr.bf16.gmra.mrb[0].mxu0 %v684
        %v739 = vpop.f32.mrb[0].mxu0
        %v740 = vadd.f32 0.0, %v739
        %v741 = vpop.f32.mrb[0].mxu0
        %v742 = vpop.f32.mrb[0].mxu0
        %v743 = vadd.f32 0.0, %v742
        %v744 = vpop.f32.mrb[0].mxu0
        %745 = vmatprep.mubr.bf16.mxu0 0
        %746 = vmatmul.mubr.bf16.gmra.mrb[0].mxu0 %v687
        %v747 = vpop.f32.mrb[0].mxu0
        %v748 = vadd.f32 0.0, %v747
        %v749 = vpop.f32.mrb[0].mxu0
        %v750 = vpop.f32.mrb[0].mxu0
        %v751 = vadd.f32 0.0, %v750
        %v752 = vpop.f32.mrb[0].mxu0
        %753 = vdwg.mxu0
        %754 = vst [vmem:[#allocation2 + $0x10] sm:$0xff] %v724
        %755 = vst [vmem:[#allocation2 + $0xa8] sm:$0xff] %v727
        %756 = vst [vmem:[#allocation2 + $0x140] sm:$0xff] %v732
        %757 = vst [vmem:[#allocation2 + $0x1d8] sm:$0xff] %v735
        %758 = vst [vmem:[#allocation2 + $0x270] sm:$0xff] %v740
        %759 = vst [vmem:[#allocation2 + $0x308] sm:$0xff] %v743
        %760 = vst [vmem:[#allocation2 + $0x3a0] sm:$0xff] %v748
        %761 = vst [vmem:[#allocation2 + $0x438] sm:$0xff] %v751
        %vm762 = vcmp.eq.s32.totalorder %v242, 4
        %vm763 = vcmp.eq.s32.totalorder %v243, 4
        %vm764 = vcmp.eq.s32.totalorder %v244, 4
        %vm765 = vcmp.eq.s32.totalorder %v245, 4
        %vm766 = vcmp.eq.s32.totalorder %v246, 4
        %vm767 = vcmp.eq.s32.totalorder %v247, 4
        %vm768 = vcmp.eq.s32.totalorder %v248, 4
        %vm769 = vcmp.eq.s32.totalorder %v249, 4
        %s770 = scalar_lea.vmem %s215, 96
        %v771 = vld [vmem:[%s770] sm:$0xf]
        %v772 = vld [vmem:[%s770 + $0x4] sm:$0xf]
        %v773 = vld [vmem:[%s770 + $0x8] sm:$0xf]
        %v774 = vld [vmem:[%s770 + $0xc] sm:$0xf]
        %v775 = vld [vmem:[%s770 + $0x10] sm:$0xf]
        %v776 = vld [vmem:[%s770 + $0x14] sm:$0xf]
        %v777 = vld [vmem:[%s770 + $0x18] sm:$0xf]
        %v778 = vld [vmem:[%s770 + $0x1c] sm:$0xf]
        %vm779 = vmpackc.low %vm762, %vm762
        %vm780 = vmpackc.low %vm763, %vm763
        %vm781 = vmpackc.low %vm764, %vm764
        %vm782 = vmpackc.low %vm765, %vm765
        %vm783 = vmpackc.low %vm766, %vm766
        %vm784 = vmpackc.low %vm767, %vm767
        %vm785 = vmpackc.low %vm768, %vm768
        %vm786 = vmpackc.low %vm769, %vm769
        %v787 = vsel %vm779, %v771, 0
        %v788 = vsel %vm780, %v772, 0
        %v789 = vsel %vm781, %v773, 0
        %v790 = vsel %vm782, %v774, 0
        %v791 = vsel %vm783, %v775, 0
        %v792 = vsel %vm784, %v776, 0
        %v793 = vsel %vm785, %v777, 0
        %v794 = vsel %vm786, %v778, 0
        %s795 = scalar_lea.vmem %s2, 96
        %v796 = vld [vmem:[%s795] sm:$0xf]
        %v797 = vld [vmem:[%s795 + $0x4] sm:$0xf]
        %v798 = vld [vmem:[%s795 + $0x8] sm:$0xf]
        %v799 = vld [vmem:[%s795 + $0xc] sm:$0xf]
        %v800 = vld [vmem:[%s795 + $0x10] sm:$0xf]
        %v801 = vld [vmem:[%s795 + $0x14] sm:$0xf]
        %v802 = vld [vmem:[%s795 + $0x18] sm:$0xf]
        %v803 = vld [vmem:[%s795 + $0x1c] sm:$0xf]
        %v812 = vunpack.c.l.b16 %v796
        %v813 = vunpack.c.l.b16 %v797
        %v814 = vunpack.c.l.b16 %v798
        %v815 = vunpack.c.l.b16 %v799
        %v816 = vunpack.c.l.b16 %v800
        %v817 = vunpack.c.l.b16 %v801
        %v818 = vunpack.c.l.b16 %v802
        %v819 = vunpack.c.l.b16 %v803
        %v820 = vpack.c.b16 %v813, %v812
        %v821 = vpack.c.b16 %v815, %v814
        %v822 = vpack.c.b16 %v817, %v816
        %v823 = vpack.c.b16 %v819, %v818
        %v832 = vunpack.c.l.b16 %v787
        %v833 = vunpack.c.l.b16 %v788
        %v834 = vunpack.c.l.b16 %v789
        %v835 = vunpack.c.l.b16 %v790
        %v836 = vunpack.c.l.b16 %v791
        %v837 = vunpack.c.l.b16 %v792
        %v838 = vunpack.c.l.b16 %v793
        %v839 = vunpack.c.l.b16 %v794
        %v840 = vpack.c.b16 %v833, %v832
        %v841 = vpack.c.b16 %v835, %v834
        %v842 = vpack.c.b16 %v837, %v836
        %v843 = vpack.c.b16 %v839, %v838
        %v849 = vsel %vm334, %v820, 0
        %v852 = vsel %vm334, %v821, 0
        %v855 = vsel %vm334, %v822, 0
        %v858 = vsel %vm334, %v823, 0
        %860 = vmatprep.subr.bf16.mxu0 0
        %861 = vmatpush1.bf16.msra.mxu0 %v840
        %862 = vmatprep.subr.bf16.mxu0 0
        %863 = vmatpush1.bf16.msra.mxu0 %v841
        %864 = vmatprep.subr.bf16.mxu0 0
        %865 = vmatpush1.bf16.msra.mxu0 %v842
        %866 = vmatprep.subr.bf16.mxu0 0
        %867 = vmatpush1.bf16.msra.mxu0 %v843
        %868 = vmatprep.subr.bf16.mxu0 0
        %869 = vmatpush1.bf16.msra.mxu0 0
        %870 = vmatprep.subr.bf16.mxu0 0
        %871 = vmatpush1.bf16.msra.mxu0 0
        %872 = vmatprep.subr.bf16.mxu0 0
        %873 = vmatpush1.bf16.msra.mxu0 0
        %874 = vmatprep.subr.bf16.mxu0 0
        %875 = vmatpush1.bf16.msra.mxu0 0
        %876 = vmatprep.subr.bf16.mxu0 0
        %877 = vmatpush1.bf16.msra.mxu0 0
        %878 = vmatprep.subr.bf16.mxu0 0
        %879 = vmatpush1.bf16.msra.mxu0 0
        %880 = vmatprep.subr.bf16.mxu0 0
        %881 = vmatpush1.bf16.msra.mxu0 0
        %882 = vmatprep.subr.bf16.mxu0 0
        %883 = vmatpush1.bf16.msra.mxu0 0
        %884 = vmatprep.subr.bf16.mxu0 0
        %885 = vmatpush1.bf16.msra.mxu0 0
        %886 = vmatprep.subr.bf16.mxu0 0
        %887 = vmatpush1.bf16.msra.mxu0 0
        %888 = vmatprep.subr.bf16.mxu0 0
        %889 = vmatpush1.bf16.msra.mxu0 0
        %890 = vmatprep.subr.bf16.mxu0 0
        %891 = vmatpush1.bf16.msra.mxu0 0
        %892 = vmatprep.mubr.bf16.mxu0 0
        %893 = vmatmul.mubr.bf16.gmra.mrb[0].mxu0 %v849
        %v894 = vpop.f32.mrb[0].mxu0
        %v895 = vadd.f32 0.0, %v894
        %v896 = vpop.f32.mrb[0].mxu0
        %v897 = vpop.f32.mrb[0].mxu0
        %v898 = vadd.f32 0.0, %v897
        %v899 = vpop.f32.mrb[0].mxu0
        %900 = vmatprep.mubr.bf16.mxu0 0
        %901 = vmatmul.mubr.bf16.gmra.mrb[0].mxu0 %v852
        %v902 = vpop.f32.mrb[0].mxu0
        %v903 = vadd.f32 0.0, %v902
        %v904 = vpop.f32.mrb[0].mxu0
        %v905 = vpop.f32.mrb[0].mxu0
        %v906 = vadd.f32 0.0, %v905
        %v907 = vpop.f32.mrb[0].mxu0
        %908 = vmatprep.mubr.bf16.mxu0 0
        %909 = vmatmul.mubr.bf16.gmra.mrb[0].mxu0 %v855
        %v910 = vpop.f32.mrb[0].mxu0
        %v911 = vadd.f32 0.0, %v910
        %v912 = vpop.f32.mrb[0].mxu0
        %v913 = vpop.f32.mrb[0].mxu0
        %v914 = vadd.f32 0.0, %v913
        %v915 = vpop.f32.mrb[0].mxu0
        %916 = vmatprep.mubr.bf16.mxu0 0
        %917 = vmatmul.mubr.bf16.gmra.mrb[0].mxu0 %v858
        %v918 = vpop.f32.mrb[0].mxu0
        %v919 = vadd.f32 0.0, %v918
        %v920 = vpop.f32.mrb[0].mxu0
        %v921 = vpop.f32.mrb[0].mxu0
        %v922 = vadd.f32 0.0, %v921
        %v923 = vpop.f32.mrb[0].mxu0
        %924 = vdwg.mxu0
        %925 = vst [vmem:[#allocation2 + $0x18] sm:$0xff] %v895
        %926 = vst [vmem:[#allocation2 + $0xb0] sm:$0xff] %v898
        %927 = vst [vmem:[#allocation2 + $0x148] sm:$0xff] %v903
        %928 = vst [vmem:[#allocation2 + $0x1e0] sm:$0xff] %v906
        %929 = vst [vmem:[#allocation2 + $0x278] sm:$0xff] %v911
        %930 = vst [vmem:[#allocation2 + $0x310] sm:$0xff] %v914
        %931 = vst [vmem:[#allocation2 + $0x3a8] sm:$0xff] %v919
        %932 = vst [vmem:[#allocation2 + $0x440] sm:$0xff] %v922
        %vm933 = vcmp.eq.s32.totalorder %v242, 5
        %vm934 = vcmp.eq.s32.totalorder %v243, 5
        %vm935 = vcmp.eq.s32.totalorder %v244, 5
        %vm936 = vcmp.eq.s32.totalorder %v245, 5
        %vm937 = vcmp.eq.s32.totalorder %v246, 5
        %vm938 = vcmp.eq.s32.totalorder %v247, 5
        %vm939 = vcmp.eq.s32.totalorder %v248, 5
        %vm940 = vcmp.eq.s32.totalorder %v249, 5
        %s941 = scalar_lea.vmem %s215, 128
        %v942 = vld [vmem:[%s941] sm:$0xf]
        %v943 = vld [vmem:[%s941 + $0x4] sm:$0xf]
        %v944 = vld [vmem:[%s941 + $0x8] sm:$0xf]
        %v945 = vld [vmem:[%s941 + $0xc] sm:$0xf]
        %v946 = vld [vmem:[%s941 + $0x10] sm:$0xf]
        %v947 = vld [vmem:[%s941 + $0x14] sm:$0xf]
        %v948 = vld [vmem:[%s941 + $0x18] sm:$0xf]
        %v949 = vld [vmem:[%s941 + $0x1c] sm:$0xf]
        %vm950 = vmpackc.low %vm933, %vm933
        %vm951 = vmpackc.low %vm934, %vm934
        %vm952 = vmpackc.low %vm935, %vm935
        %vm953 = vmpackc.low %vm936, %vm936
        %vm954 = vmpackc.low %vm937, %vm937
        %vm955 = vmpackc.low %vm938, %vm938
        %vm956 = vmpackc.low %vm939, %vm939
        %vm957 = vmpackc.low %vm940, %vm940
        %v958 = vsel %vm950, %v942, 0
        %v959 = vsel %vm951, %v943, 0
        %v960 = vsel %vm952, %v944, 0
        %v961 = vsel %vm953, %v945, 0
        %v962 = vsel %vm954, %v946, 0
        %v963 = vsel %vm955, %v947, 0
        %v964 = vsel %vm956, %v948, 0
        %v965 = vsel %vm957, %v949, 0
        %s966 = scalar_lea.vmem %s2, 128
        %v967 = vld [vmem:[%s966] sm:$0xf]
        %v968 = vld [vmem:[%s966 + $0x4] sm:$0xf]
        %v969 = vld [vmem:[%s966 + $0x8] sm:$0xf]
        %v970 = vld [vmem:[%s966 + $0xc] sm:$0xf]
        %v971 = vld [vmem:[%s966 + $0x10] sm:$0xf]
        %v972 = vld [vmem:[%s966 + $0x14] sm:$0xf]
        %v973 = vld [vmem:[%s966 + $0x18] sm:$0xf]
        %v974 = vld [vmem:[%s966 + $0x1c] sm:$0xf]
        %v983 = vunpack.c.l.b16 %v967
        %v984 = vunpack.c.l.b16 %v968
        %v985 = vunpack.c.l.b16 %v969
        %v986 = vunpack.c.l.b16 %v970
        %v987 = vunpack.c.l.b16 %v971
        %v988 = vunpack.c.l.b16 %v972
        %v989 = vunpack.c.l.b16 %v973
        %v990 = vunpack.c.l.b16 %v974
        %v991 = vpack.c.b16 %v984, %v983
        %v992 = vpack.c.b16 %v986, %v985
        %v993 = vpack.c.b16 %v988, %v987
        %v994 = vpack.c.b16 %v990, %v989
        %v1003 = vunpack.c.l.b16 %v958
        %v1004 = vunpack.c.l.b16 %v959
        %v1005 = vunpack.c.l.b16 %v960
        %v1006 = vunpack.c.l.b16 %v961
        %v1007 = vunpack.c.l.b16 %v962
        %v1008 = vunpack.c.l.b16 %v963
        %v1009 = vunpack.c.l.b16 %v964
        %v1010 = vunpack.c.l.b16 %v965
        %v1011 = vpack.c.b16 %v1004, %v1003
        %v1012 = vpack.c.b16 %v1006, %v1005
        %v1013 = vpack.c.b16 %v1008, %v1007
        %v1014 = vpack.c.b16 %v1010, %v1009
        %v1020 = vsel %vm334, %v991, 0
        %v1023 = vsel %vm334, %v992, 0
        %v1026 = vsel %vm334, %v993, 0
        %v1029 = vsel %vm334, %v994, 0
        %1031 = vmatprep.subr.bf16.mxu0 0
        %1032 = vmatpush1.bf16.msra.mxu0 %v1011
        %1033 = vmatprep.subr.bf16.mxu0 0
        %1034 = vmatpush1.bf16.msra.mxu0 %v1012
        %1035 = vmatprep.subr.bf16.mxu0 0
        %1036 = vmatpush1.bf16.msra.mxu0 %v1013
        %1037 = vmatprep.subr.bf16.mxu0 0
        %1038 = vmatpush1.bf16.msra.mxu0 %v1014
        %1039 = vmatprep.subr.bf16.mxu0 0
        %1040 = vmatpush1.bf16.msra.mxu0 0
        %1041 = vmatprep.subr.bf16.mxu0 0
        %1042 = vmatpush1.bf16.msra.mxu0 0
        %1043 = vmatprep.subr.bf16.mxu0 0
        %1044 = vmatpush1.bf16.msra.mxu0 0
        %1045 = vmatprep.subr.bf16.mxu0 0
        %1046 = vmatpush1.bf16.msra.mxu0 0
        %1047 = vmatprep.subr.bf16.mxu0 0
        %1048 = vmatpush1.bf16.msra.mxu0 0
        %1049 = vmatprep.subr.bf16.mxu0 0
        %1050 = vmatpush1.bf16.msra.mxu0 0
        %1051 = vmatprep.subr.bf16.mxu0 0
        %1052 = vmatpush1.bf16.msra.mxu0 0
        %1053 = vmatprep.subr.bf16.mxu0 0
        %1054 = vmatpush1.bf16.msra.mxu0 0
        %1055 = vmatprep.subr.bf16.mxu0 0
        %1056 = vmatpush1.bf16.msra.mxu0 0
        %1057 = vmatprep.subr.bf16.mxu0 0
        %1058 = vmatpush1.bf16.msra.mxu0 0
        %1059 = vmatprep.subr.bf16.mxu0 0
        %1060 = vmatpush1.bf16.msra.mxu0 0
        %1061 = vmatprep.subr.bf16.mxu0 0
        %1062 = vmatpush1.bf16.msra.mxu0 0
        %1063 = vmatprep.mubr.bf16.mxu0 0
        %1064 = vmatmul.mubr.bf16.gmra.mrb[0].mxu0 %v1020
        %v1065 = vpop.f32.mrb[0].mxu0
        %v1066 = vadd.f32 0.0, %v1065
        %v1067 = vpop.f32.mrb[0].mxu0
        %v1068 = vpop.f32.mrb[0].mxu0
        %v1069 = vadd.f32 0.0, %v1068
        %v1070 = vpop.f32.mrb[0].mxu0
        %1071 = vmatprep.mubr.bf16.mxu0 0
        %1072 = vmatmul.mubr.bf16.gmra.mrb[0].mxu0 %v1023
        %v1073 = vpop.f32.mrb[0].mxu0
        %v1074 = vadd.f32 0.0, %v1073
        %v1075 = vpop.f32.mrb[0].mxu0
        %v1076 = vpop.f32.mrb[0].mxu0
        %v1077 = vadd.f32 0.0, %v1076
        %v1078 = vpop.f32.mrb[0].mxu0
        %1079 = vmatprep.mubr.bf16.mxu0 0
        %1080 = vmatmul.mubr.bf16.gmra.mrb[0].mxu0 %v1026
        %v1081 = vpop.f32.mrb[0].mxu0
        %v1082 = vadd.f32 0.0, %v1081
        %v1083 = vpop.f32.mrb[0].mxu0
        %v1084 = vpop.f32.mrb[0].mxu0
        %v1085 = vadd.f32 0.0, %v1084
        %v1086 = vpop.f32.mrb[0].mxu0
        %1087 = vmatprep.mubr.bf16.mxu0 0
        %1088 = vmatmul.mubr.bf16.gmra.mrb[0].mxu0 %v1029
        %v1089 = vpop.f32.mrb[0].mxu0
        %v1090 = vadd.f32 0.0, %v1089
        %v1091 = vpop.f32.mrb[0].mxu0
        %v1092 = vpop.f32.mrb[0].mxu0
        %v1093 = vadd.f32 0.0, %v1092
        %v1094 = vpop.f32.mrb[0].mxu0
        %1095 = vdwg.mxu0
        %1096 = vst [vmem:[#allocation2 + $0x20] sm:$0xff] %v1066
        %1097 = vst [vmem:[#allocation2 + $0xb8] sm:$0xff] %v1069
        %1098 = vst [vmem:[#allocation2 + $0x150] sm:$0xff] %v1074
        %1099 = vst [vmem:[#allocation2 + $0x1e8] sm:$0xff] %v1077
        %1100 = vst [vmem:[#allocation2 + $0x280] sm:$0xff] %v1082
        %1101 = vst [vmem:[#allocation2 + $0x318] sm:$0xff] %v1085
        %1102 = vst [vmem:[#allocation2 + $0x3b0] sm:$0xff] %v1090
        %1103 = vst [vmem:[#allocation2 + $0x448] sm:$0xff] %v1093
        %vm1104 = vcmp.eq.s32.totalorder %v242, 6
        %vm1105 = vcmp.eq.s32.totalorder %v243, 6
        %vm1106 = vcmp.eq.s32.totalorder %v244, 6
        %vm1107 = vcmp.eq.s32.totalorder %v245, 6
        %vm1108 = vcmp.eq.s32.totalorder %v246, 6
        %vm1109 = vcmp.eq.s32.totalorder %v247, 6
        %vm1110 = vcmp.eq.s32.totalorder %v248, 6
        %vm1111 = vcmp.eq.s32.totalorder %v249, 6
        %s1112 = scalar_lea.vmem %s215, 160
        %v1113 = vld [vmem:[%s1112] sm:$0xf]
        %v1114 = vld [vmem:[%s1112 + $0x4] sm:$0xf]
        %v1115 = vld [vmem:[%s1112 + $0x8] sm:$0xf]
        %v1116 = vld [vmem:[%s1112 + $0xc] sm:$0xf]
        %v1117 = vld [vmem:[%s1112 + $0x10] sm:$0xf]
        %v1118 = vld [vmem:[%s1112 + $0x14] sm:$0xf]
        %v1119 = vld [vmem:[%s1112 + $0x18] sm:$0xf]
        %v1120 = vld [vmem:[%s1112 + $0x1c] sm:$0xf]
        %vm1121 = vmpackc.low %vm1104, %vm1104
        %vm1122 = vmpackc.low %vm1105, %vm1105
        %vm1123 = vmpackc.low %vm1106, %vm1106
        %vm1124 = vmpackc.low %vm1107, %vm1107
        %vm1125 = vmpackc.low %vm1108, %vm1108
        %vm1126 = vmpackc.low %vm1109, %vm1109
        %vm1127 = vmpackc.low %vm1110, %vm1110
        %vm1128 = vmpackc.low %vm1111, %vm1111
        %v1129 = vsel %vm1121, %v1113, 0
        %v1130 = vsel %vm1122, %v1114, 0
        %v1131 = vsel %vm1123, %v1115, 0
        %v1132 = vsel %vm1124, %v1116, 0
        %v1133 = vsel %vm1125, %v1117, 0
        %v1134 = vsel %vm1126, %v1118, 0
        %v1135 = vsel %vm1127, %v1119, 0
        %v1136 = vsel %vm1128, %v1120, 0
        %s1137 = scalar_lea.vmem %s2, 160
        %v1138 = vld [vmem:[%s1137] sm:$0xf]
        %v1139 = vld [vmem:[%s1137 + $0x4] sm:$0xf]
        %v1140 = vld [vmem:[%s1137 + $0x8] sm:$0xf]
        %v1141 = vld [vmem:[%s1137 + $0xc] sm:$0xf]
        %v1142 = vld [vmem:[%s1137 + $0x10] sm:$0xf]
        %v1143 = vld [vmem:[%s1137 + $0x14] sm:$0xf]
        %v1144 = vld [vmem:[%s1137 + $0x18] sm:$0xf]
        %v1145 = vld [vmem:[%s1137 + $0x1c] sm:$0xf]
        %v1154 = vunpack.c.l.b16 %v1138
        %v1155 = vunpack.c.l.b16 %v1139
        %v1156 = vunpack.c.l.b16 %v1140
        %v1157 = vunpack.c.l.b16 %v1141
        %v1158 = vunpack.c.l.b16 %v1142
        %v1159 = vunpack.c.l.b16 %v1143
        %v1160 = vunpack.c.l.b16 %v1144
        %v1161 = vunpack.c.l.b16 %v1145
        %v1162 = vpack.c.b16 %v1155, %v1154
        %v1163 = vpack.c.b16 %v1157, %v1156
        %v1164 = vpack.c.b16 %v1159, %v1158
        %v1165 = vpack.c.b16 %v1161, %v1160
        %v1174 = vunpack.c.l.b16 %v1129
        %v1175 = vunpack.c.l.b16 %v1130
        %v1176 = vunpack.c.l.b16 %v1131
        %v1177 = vunpack.c.l.b16 %v1132
        %v1178 = vunpack.c.l.b16 %v1133
        %v1179 = vunpack.c.l.b16 %v1134
        %v1180 = vunpack.c.l.b16 %v1135
        %v1181 = vunpack.c.l.b16 %v1136
        %v1182 = vpack.c.b16 %v1175, %v1174
        %v1183 = vpack.c.b16 %v1177, %v1176
        %v1184 = vpack.c.b16 %v1179, %v1178
        %v1185 = vpack.c.b16 %v1181, %v1180
        %v1191 = vsel %vm334, %v1162, 0
        %v1194 = vsel %vm334, %v1163, 0
        %v1197 = vsel %vm334, %v1164, 0
        %v1200 = vsel %vm334, %v1165, 0
        %1202 = vmatprep.subr.bf16.mxu0 0
        %1203 = vmatpush1.bf16.msra.mxu0 %v1182
        %1204 = vmatprep.subr.bf16.mxu0 0
        %1205 = vmatpush1.bf16.msra.mxu0 %v1183
        %1206 = vmatprep.subr.bf16.mxu0 0
        %1207 = vmatpush1.bf16.msra.mxu0 %v1184
        %1208 = vmatprep.subr.bf16.mxu0 0
        %1209 = vmatpush1.bf16.msra.mxu0 %v1185
        %1210 = vmatprep.subr.bf16.mxu0 0
        %1211 = vmatpush1.bf16.msra.mxu0 0
        %1212 = vmatprep.subr.bf16.mxu0 0
        %1213 = vmatpush1.bf16.msra.mxu0 0
        %1214 = vmatprep.subr.bf16.mxu0 0
        %1215 = vmatpush1.bf16.msra.mxu0 0
        %1216 = vmatprep.subr.bf16.mxu0 0
        %1217 = vmatpush1.bf16.msra.mxu0 0
        %1218 = vmatprep.subr.bf16.mxu0 0
        %1219 = vmatpush1.bf16.msra.mxu0 0
        %1220 = vmatprep.subr.bf16.mxu0 0
        %1221 = vmatpush1.bf16.msra.mxu0 0
        %1222 = vmatprep.subr.bf16.mxu0 0
        %1223 = vmatpush1.bf16.msra.mxu0 0
        %1224 = vmatprep.subr.bf16.mxu0 0
        %1225 = vmatpush1.bf16.msra.mxu0 0
        %1226 = vmatprep.subr.bf16.mxu0 0
        %1227 = vmatpush1.bf16.msra.mxu0 0
        %1228 = vmatprep.subr.bf16.mxu0 0
        %1229 = vmatpush1.bf16.msra.mxu0 0
        %1230 = vmatprep.subr.bf16.mxu0 0
        %1231 = vmatpush1.bf16.msra.mxu0 0
        %1232 = vmatprep.subr.bf16.mxu0 0
        %1233 = vmatpush1.bf16.msra.mxu0 0
        %1234 = vmatprep.mubr.bf16.mxu0 0
        %1235 = vmatmul.mubr.bf16.gmra.mrb[0].mxu0 %v1191
        %v1236 = vpop.f32.mrb[0].mxu0
        %v1237 = vadd.f32 0.0, %v1236
        %v1238 = vpop.f32.mrb[0].mxu0
        %v1239 = vpop.f32.mrb[0].mxu0
        %v1240 = vadd.f32 0.0, %v1239
        %v1241 = vpop.f32.mrb[0].mxu0
        %1242 = vmatprep.mubr.bf16.mxu0 0
        %1243 = vmatmul.mubr.bf16.gmra.mrb[0].mxu0 %v1194
        %v1244 = vpop.f32.mrb[0].mxu0
        %v1245 = vadd.f32 0.0, %v1244
        %v1246 = vpop.f32.mrb[0].mxu0
        %v1247 = vpop.f32.mrb[0].mxu0
        %v1248 = vadd.f32 0.0, %v1247
        %v1249 = vpop.f32.mrb[0].mxu0
        %1250 = vmatprep.mubr.bf16.mxu0 0
        %1251 = vmatmul.mubr.bf16.gmra.mrb[0].mxu0 %v1197
        %v1252 = vpop.f32.mrb[0].mxu0
        %v1253 = vadd.f32 0.0, %v1252
        %v1254 = vpop.f32.mrb[0].mxu0
        %v1255 = vpop.f32.mrb[0].mxu0
        %v1256 = vadd.f32 0.0, %v1255
        %v1257 = vpop.f32.mrb[0].mxu0
        %1258 = vmatprep.mubr.bf16.mxu0 0
        %1259 = vmatmul.mubr.bf16.gmra.mrb[0].mxu0 %v1200
        %v1260 = vpop.f32.mrb[0].mxu0
        %v1261 = vadd.f32 0.0, %v1260
        %v1262 = vpop.f32.mrb[0].mxu0
        %v1263 = vpop.f32.mrb[0].mxu0
        %v1264 = vadd.f32 0.0, %v1263
        %v1265 = vpop.f32.mrb[0].mxu0
        %1266 = vdwg.mxu0
        %1267 = vst [vmem:[#allocation2 + $0x28] sm:$0xff] %v1237
        %1268 = vst [vmem:[#allocation2 + $0xc0] sm:$0xff] %v1240
        %1269 = vst [vmem:[#allocation2 + $0x158] sm:$0xff] %v1245
        %1270 = vst [vmem:[#allocation2 + $0x1f0] sm:$0xff] %v1248
        %1271 = vst [vmem:[#allocation2 + $0x288] sm:$0xff] %v1253
        %1272 = vst [vmem:[#allocation2 + $0x320] sm:$0xff] %v1256
        %1273 = vst [vmem:[#allocation2 + $0x3b8] sm:$0xff] %v1261
        %1274 = vst [vmem:[#allocation2 + $0x450] sm:$0xff] %v1264
        %vm1275 = vcmp.eq.s32.totalorder %v242, 7
        %vm1276 = vcmp.eq.s32.totalorder %v243, 7
        %vm1277 = vcmp.eq.s32.totalorder %v244, 7
        %vm1278 = vcmp.eq.s32.totalorder %v245, 7
        %vm1279 = vcmp.eq.s32.totalorder %v246, 7
        %vm1280 = vcmp.eq.s32.totalorder %v247, 7
        %vm1281 = vcmp.eq.s32.totalorder %v248, 7
        %vm1282 = vcmp.eq.s32.totalorder %v249, 7
        %s1283 = scalar_lea.vmem %s215, 192
        %v1284 = vld [vmem:[%s1283] sm:$0xf]
        %v1285 = vld [vmem:[%s1283 + $0x4] sm:$0xf]
        %v1286 = vld [vmem:[%s1283 + $0x8] sm:$0xf]
        %v1287 = vld [vmem:[%s1283 + $0xc] sm:$0xf]
        %v1288 = vld [vmem:[%s1283 + $0x10] sm:$0xf]
        %v1289 = vld [vmem:[%s1283 + $0x14] sm:$0xf]
        %v1290 = vld [vmem:[%s1283 + $0x18] sm:$0xf]
        %v1291 = vld [vmem:[%s1283 + $0x1c] sm:$0xf]
        %vm1292 = vmpackc.low %vm1275, %vm1275
        %vm1293 = vmpackc.low %vm1276, %vm1276
        %vm1294 = vmpackc.low %vm1277, %vm1277
        %vm1295 = vmpackc.low %vm1278, %vm1278
        %vm1296 = vmpackc.low %vm1279, %vm1279
        %vm1297 = vmpackc.low %vm1280, %vm1280
        %vm1298 = vmpackc.low %vm1281, %vm1281
        %vm1299 = vmpackc.low %vm1282, %vm1282
        %v1300 = vsel %vm1292, %v1284, 0
        %v1301 = vsel %vm1293, %v1285, 0
        %v1302 = vsel %vm1294, %v1286, 0
        %v1303 = vsel %vm1295, %v1287, 0
        %v1304 = vsel %vm1296, %v1288, 0
        %v1305 = vsel %vm1297, %v1289, 0
        %v1306 = vsel %vm1298, %v1290, 0
        %v1307 = vsel %vm1299, %v1291, 0
        %s1308 = scalar_lea.vmem %s2, 192
        %v1309 = vld [vmem:[%s1308] sm:$0xf]
        %v1310 = vld [vmem:[%s1308 + $0x4] sm:$0xf]
        %v1311 = vld [vmem:[%s1308 + $0x8] sm:$0xf]
        %v1312 = vld [vmem:[%s1308 + $0xc] sm:$0xf]
        %v1313 = vld [vmem:[%s1308 + $0x10] sm:$0xf]
        %v1314 = vld [vmem:[%s1308 + $0x14] sm:$0xf]
        %v1315 = vld [vmem:[%s1308 + $0x18] sm:$0xf]
        %v1316 = vld [vmem:[%s1308 + $0x1c] sm:$0xf]
        %v1325 = vunpack.c.l.b16 %v1309
        %v1326 = vunpack.c.l.b16 %v1310
        %v1327 = vunpack.c.l.b16 %v1311
        %v1328 = vunpack.c.l.b16 %v1312
        %v1329 = vunpack.c.l.b16 %v1313
        %v1330 = vunpack.c.l.b16 %v1314
        %v1331 = vunpack.c.l.b16 %v1315
        %v1332 = vunpack.c.l.b16 %v1316
        %v1333 = vpack.c.b16 %v1326, %v1325
        %v1334 = vpack.c.b16 %v1328, %v1327
        %v1335 = vpack.c.b16 %v1330, %v1329
        %v1336 = vpack.c.b16 %v1332, %v1331
        %v1345 = vunpack.c.l.b16 %v1300
        %v1346 = vunpack.c.l.b16 %v1301
        %v1347 = vunpack.c.l.b16 %v1302
        %v1348 = vunpack.c.l.b16 %v1303
        %v1349 = vunpack.c.l.b16 %v1304
        %v1350 = vunpack.c.l.b16 %v1305
        %v1351 = vunpack.c.l.b16 %v1306
        %v1352 = vunpack.c.l.b16 %v1307
        %v1353 = vpack.c.b16 %v1346, %v1345
        %v1354 = vpack.c.b16 %v1348, %v1347
        %v1355 = vpack.c.b16 %v1350, %v1349
        %v1356 = vpack.c.b16 %v1352, %v1351
        %v1362 = vsel %vm334, %v1333, 0
        %v1365 = vsel %vm334, %v1334, 0
        %v1368 = vsel %vm334, %v1335, 0
        %v1371 = vsel %vm334, %v1336, 0
        %1373 = vmatprep.subr.bf16.mxu0 0
        %1374 = vmatpush1.bf16.msra.mxu0 %v1353
        %1375 = vmatprep.subr.bf16.mxu0 0
        %1376 = vmatpush1.bf16.msra.mxu0 %v1354
        %1377 = vmatprep.subr.bf16.mxu0 0
        %1378 = vmatpush1.bf16.msra.mxu0 %v1355
        %1379 = vmatprep.subr.bf16.mxu0 0
        %1380 = vmatpush1.bf16.msra.mxu0 %v1356
        %1381 = vmatprep.subr.bf16.mxu0 0
        %1382 = vmatpush1.bf16.msra.mxu0 0
        %1383 = vmatprep.subr.bf16.mxu0 0
        %1384 = vmatpush1.bf16.msra.mxu0 0
        %1385 = vmatprep.subr.bf16.mxu0 0
        %1386 = vmatpush1.bf16.msra.mxu0 0
        %1387 = vmatprep.subr.bf16.mxu0 0
        %1388 = vmatpush1.bf16.msra.mxu0 0
        %1389 = vmatprep.subr.bf16.mxu0 0
        %1390 = vmatpush1.bf16.msra.mxu0 0
        %1391 = vmatprep.subr.bf16.mxu0 0
        %1392 = vmatpush1.bf16.msra.mxu0 0
        %1393 = vmatprep.subr.bf16.mxu0 0
        %1394 = vmatpush1.bf16.msra.mxu0 0
        %1395 = vmatprep.subr.bf16.mxu0 0
        %1396 = vmatpush1.bf16.msra.mxu0 0
        %1397 = vmatprep.subr.bf16.mxu0 0
        %1398 = vmatpush1.bf16.msra.mxu0 0
        %1399 = vmatprep.subr.bf16.mxu0 0
        %1400 = vmatpush1.bf16.msra.mxu0 0
        %1401 = vmatprep.subr.bf16.mxu0 0
        %1402 = vmatpush1.bf16.msra.mxu0 0
        %1403 = vmatprep.subr.bf16.mxu0 0
        %1404 = vmatpush1.bf16.msra.mxu0 0
        %1405 = vmatprep.mubr.bf16.mxu0 0
        %1406 = vmatmul.mubr.bf16.gmra.mrb[0].mxu0 %v1362
        %v1407 = vpop.f32.mrb[0].mxu0
        %v1408 = vadd.f32 0.0, %v1407
        %v1409 = vpop.f32.mrb[0].mxu0
        %v1410 = vpop.f32.mrb[0].mxu0
        %v1411 = vadd.f32 0.0, %v1410
        %v1412 = vpop.f32.mrb[0].mxu0
        %1413 = vmatprep.mubr.bf16.mxu0 0
        %1414 = vmatmul.mubr.bf16.gmra.mrb[0].mxu0 %v1365
        %v1415 = vpop.f32.mrb[0].mxu0
        %v1416 = vadd.f32 0.0, %v1415
        %v1417 = vpop.f32.mrb[0].mxu0
        %v1418 = vpop.f32.mrb[0].mxu0
        %v1419 = vadd.f32 0.0, %v1418
        %v1420 = vpop.f32.mrb[0].mxu0
        %1421 = vmatprep.mubr.bf16.mxu0 0
        %1422 = vmatmul.mubr.bf16.gmra.mrb[0].mxu0 %v1368
        %v1423 = vpop.f32.mrb[0].mxu0
        %v1424 = vadd.f32 0.0, %v1423
        %v1425 = vpop.f32.mrb[0].mxu0
        %v1426 = vpop.f32.mrb[0].mxu0
        %v1427 = vadd.f32 0.0, %v1426
        %v1428 = vpop.f32.mrb[0].mxu0
        %1429 = vmatprep.mubr.bf16.mxu0 0
        %1430 = vmatmul.mubr.bf16.gmra.mrb[0].mxu0 %v1371
        %v1431 = vpop.f32.mrb[0].mxu0
        %v1432 = vadd.f32 0.0, %v1431
        %v1433 = vpop.f32.mrb[0].mxu0
        %v1434 = vpop.f32.mrb[0].mxu0
        %v1435 = vadd.f32 0.0, %v1434
        %v1436 = vpop.f32.mrb[0].mxu0
        %1437 = vdwg.mxu0
        %1438 = vst [vmem:[#allocation2 + $0x30] sm:$0xff] %v1408
        %1439 = vst [vmem:[#allocation2 + $0xc8] sm:$0xff] %v1411
        %1440 = vst [vmem:[#allocation2 + $0x160] sm:$0xff] %v1416
        %1441 = vst [vmem:[#allocation2 + $0x1f8] sm:$0xff] %v1419
        %1442 = vst [vmem:[#allocation2 + $0x290] sm:$0xff] %v1424
        %1443 = vst [vmem:[#allocation2 + $0x328] sm:$0xff] %v1427
        %1444 = vst [vmem:[#allocation2 + $0x3c0] sm:$0xff] %v1432
        %1445 = vst [vmem:[#allocation2 + $0x458] sm:$0xff] %v1435
        %vm1446 = vcmp.eq.s32.totalorder %v242, 8
        %vm1447 = vcmp.eq.s32.totalorder %v243, 8
        %vm1448 = vcmp.eq.s32.totalorder %v244, 8
        %vm1449 = vcmp.eq.s32.totalorder %v245, 8
        %vm1450 = vcmp.eq.s32.totalorder %v246, 8
        %vm1451 = vcmp.eq.s32.totalorder %v247, 8
        %vm1452 = vcmp.eq.s32.totalorder %v248, 8
        %vm1453 = vcmp.eq.s32.totalorder %v249, 8
        %s1454 = scalar_lea.vmem %s215, 224
        %v1455 = vld [vmem:[%s1454] sm:$0xf]
        %v1456 = vld [vmem:[%s1454 + $0x4] sm:$0xf]
        %v1457 = vld [vmem:[%s1454 + $0x8] sm:$0xf]
        %v1458 = vld [vmem:[%s1454 + $0xc] sm:$0xf]
        %v1459 = vld [vmem:[%s1454 + $0x10] sm:$0xf]
        %v1460 = vld [vmem:[%s1454 + $0x14] sm:$0xf]
        %v1461 = vld [vmem:[%s1454 + $0x18] sm:$0xf]
        %v1462 = vld [vmem:[%s1454 + $0x1c] sm:$0xf]
        %vm1463 = vmpackc.low %vm1446, %vm1446
        %vm1464 = vmpackc.low %vm1447, %vm1447
        %vm1465 = vmpackc.low %vm1448, %vm1448
        %vm1466 = vmpackc.low %vm1449, %vm1449
        %vm1467 = vmpackc.low %vm1450, %vm1450
        %vm1468 = vmpackc.low %vm1451, %vm1451
        %vm1469 = vmpackc.low %vm1452, %vm1452
        %vm1470 = vmpackc.low %vm1453, %vm1453
        %v1471 = vsel %vm1463, %v1455, 0
        %v1472 = vsel %vm1464, %v1456, 0
        %v1473 = vsel %vm1465, %v1457, 0
        %v1474 = vsel %vm1466, %v1458, 0
        %v1475 = vsel %vm1467, %v1459, 0
        %v1476 = vsel %vm1468, %v1460, 0
        %v1477 = vsel %vm1469, %v1461, 0
        %v1478 = vsel %vm1470, %v1462, 0
        %s1479 = scalar_lea.vmem %s2, 224
        %v1480 = vld [vmem:[%s1479] sm:$0xf]
        %v1481 = vld [vmem:[%s1479 + $0x4] sm:$0xf]
        %v1482 = vld [vmem:[%s1479 + $0x8] sm:$0xf]
        %v1483 = vld [vmem:[%s1479 + $0xc] sm:$0xf]
        %v1484 = vld [vmem:[%s1479 + $0x10] sm:$0xf]
        %v1485 = vld [vmem:[%s1479 + $0x14] sm:$0xf]
        %v1486 = vld [vmem:[%s1479 + $0x18] sm:$0xf]
        %v1487 = vld [vmem:[%s1479 + $0x1c] sm:$0xf]
        %v1496 = vunpack.c.l.b16 %v1480
        %v1497 = vunpack.c.l.b16 %v1481
        %v1498 = vunpack.c.l.b16 %v1482
        %v1499 = vunpack.c.l.b16 %v1483
        %v1500 = vunpack.c.l.b16 %v1484
        %v1501 = vunpack.c.l.b16 %v1485
        %v1502 = vunpack.c.l.b16 %v1486
        %v1503 = vunpack.c.l.b16 %v1487
        %v1504 = vpack.c.b16 %v1497, %v1496
        %v1505 = vpack.c.b16 %v1499, %v1498
        %v1506 = vpack.c.b16 %v1501, %v1500
        %v1507 = vpack.c.b16 %v1503, %v1502
        %v1516 = vunpack.c.l.b16 %v1471
        %v1517 = vunpack.c.l.b16 %v1472
        %v1518 = vunpack.c.l.b16 %v1473
        %v1519 = vunpack.c.l.b16 %v1474
        %v1520 = vunpack.c.l.b16 %v1475
        %v1521 = vunpack.c.l.b16 %v1476
        %v1522 = vunpack.c.l.b16 %v1477
        %v1523 = vunpack.c.l.b16 %v1478
        %v1524 = vpack.c.b16 %v1517, %v1516
        %v1525 = vpack.c.b16 %v1519, %v1518
        %v1526 = vpack.c.b16 %v1521, %v1520
        %v1527 = vpack.c.b16 %v1523, %v1522
        %v1533 = vsel %vm334, %v1504, 0
        %v1536 = vsel %vm334, %v1505, 0
        %v1539 = vsel %vm334, %v1506, 0
        %v1542 = vsel %vm334, %v1507, 0
        %1544 = vmatprep.subr.bf16.mxu0 0
        %1545 = vmatpush1.bf16.msra.mxu0 %v1524
        %1546 = vmatprep.subr.bf16.mxu0 0
        %1547 = vmatpush1.bf16.msra.mxu0 %v1525
        %1548 = vmatprep.subr.bf16.mxu0 0
        %1549 = vmatpush1.bf16.msra.mxu0 %v1526
        %1550 = vmatprep.subr.bf16.mxu0 0
        %1551 = vmatpush1.bf16.msra.mxu0 %v1527
        %1552 = vmatprep.subr.bf16.mxu0 0
        %1553 = vmatpush1.bf16.msra.mxu0 0
        %1554 = vmatprep.subr.bf16.mxu0 0
        %1555 = vmatpush1.bf16.msra.mxu0 0
        %1556 = vmatprep.subr.bf16.mxu0 0
        %1557 = vmatpush1.bf16.msra.mxu0 0
        %1558 = vmatprep.subr.bf16.mxu0 0
        %1559 = vmatpush1.bf16.msra.mxu0 0
        %1560 = vmatprep.subr.bf16.mxu0 0
        %1561 = vmatpush1.bf16.msra.mxu0 0
        %1562 = vmatprep.subr.bf16.mxu0 0
        %1563 = vmatpush1.bf16.msra.mxu0 0
        %1564 = vmatprep.subr.bf16.mxu0 0
        %1565 = vmatpush1.bf16.msra.mxu0 0
        %1566 = vmatprep.subr.bf16.mxu0 0
        %1567 = vmatpush1.bf16.msra.mxu0 0
        %1568 = vmatprep.subr.bf16.mxu0 0
        %1569 = vmatpush1.bf16.msra.mxu0 0
        %1570 = vmatprep.subr.bf16.mxu0 0
        %1571 = vmatpush1.bf16.msra.mxu0 0
        %1572 = vmatprep.subr.bf16.mxu0 0
        %1573 = vmatpush1.bf16.msra.mxu0 0
        %1574 = vmatprep.subr.bf16.mxu0 0
        %1575 = vmatpush1.bf16.msra.mxu0 0
        %1576 = vmatprep.mubr.bf16.mxu0 0
        %1577 = vmatmul.mubr.bf16.gmra.mrb[0].mxu0 %v1533
        %v1578 = vpop.f32.mrb[0].mxu0
        %v1579 = vadd.f32 0.0, %v1578
        %v1580 = vpop.f32.mrb[0].mxu0
        %v1581 = vpop.f32.mrb[0].mxu0
        %v1582 = vadd.f32 0.0, %v1581
        %v1583 = vpop.f32.mrb[0].mxu0
        %1584 = vmatprep.mubr.bf16.mxu0 0
        %1585 = vmatmul.mubr.bf16.gmra.mrb[0].mxu0 %v1536
        %v1586 = vpop.f32.mrb[0].mxu0
        %v1587 = vadd.f32 0.0, %v1586
        %v1588 = vpop.f32.mrb[0].mxu0
        %v1589 = vpop.f32.mrb[0].mxu0
        %v1590 = vadd.f32 0.0, %v1589
        %v1591 = vpop.f32.mrb[0].mxu0
        %1592 = vmatprep.mubr.bf16.mxu0 0
        %1593 = vmatmul.mubr.bf16.gmra.mrb[0].mxu0 %v1539
        %v1594 = vpop.f32.mrb[0].mxu0
        %v1595 = vadd.f32 0.0, %v1594
        %v1596 = vpop.f32.mrb[0].mxu0
        %v1597 = vpop.f32.mrb[0].mxu0
        %v1598 = vadd.f32 0.0, %v1597
        %v1599 = vpop.f32.mrb[0].mxu0
        %1600 = vmatprep.mubr.bf16.mxu0 0
        %1601 = vmatmul.mubr.bf16.gmra.mrb[0].mxu0 %v1542
        %v1602 = vpop.f32.mrb[0].mxu0
        %v1603 = vadd.f32 0.0, %v1602
        %v1604 = vpop.f32.mrb[0].mxu0
        %v1605 = vpop.f32.mrb[0].mxu0
        %v1606 = vadd.f32 0.0, %v1605
        %v1607 = vpop.f32.mrb[0].mxu0
        %1608 = vdwg.mxu0
        %1609 = vst [vmem:[#allocation2 + $0x38] sm:$0xff] %v1579
        %1610 = vst [vmem:[#allocation2 + $0xd0] sm:$0xff] %v1582
        %1611 = vst [vmem:[#allocation2 + $0x168] sm:$0xff] %v1587
        %1612 = vst [vmem:[#allocation2 + $0x200] sm:$0xff] %v1590
        %1613 = vst [vmem:[#allocation2 + $0x298] sm:$0xff] %v1595
        %1614 = vst [vmem:[#allocation2 + $0x330] sm:$0xff] %v1598
        %1615 = vst [vmem:[#allocation2 + $0x3c8] sm:$0xff] %v1603
        %1616 = vst [vmem:[#allocation2 + $0x460] sm:$0xff] %v1606
        %vm1617 = vcmp.eq.s32.totalorder %v242, 9
        %vm1618 = vcmp.eq.s32.totalorder %v243, 9
        %vm1619 = vcmp.eq.s32.totalorder %v244, 9
        %vm1620 = vcmp.eq.s32.totalorder %v245, 9
        %vm1621 = vcmp.eq.s32.totalorder %v246, 9
        %vm1622 = vcmp.eq.s32.totalorder %v247, 9
        %vm1623 = vcmp.eq.s32.totalorder %v248, 9
        %vm1624 = vcmp.eq.s32.totalorder %v249, 9
        %s1625 = scalar_lea.vmem %s215, 256
        %v1626 = vld [vmem:[%s1625] sm:$0xf]
        %v1627 = vld [vmem:[%s1625 + $0x4] sm:$0xf]
        %v1628 = vld [vmem:[%s1625 + $0x8] sm:$0xf]
        %v1629 = vld [vmem:[%s1625 + $0xc] sm:$0xf]
        %v1630 = vld [vmem:[%s1625 + $0x10] sm:$0xf]
        %v1631 = vld [vmem:[%s1625 + $0x14] sm:$0xf]
        %v1632 = vld [vmem:[%s1625 + $0x18] sm:$0xf]
        %v1633 = vld [vmem:[%s1625 + $0x1c] sm:$0xf]
        %vm1634 = vmpackc.low %vm1617, %vm1617
        %vm1635 = vmpackc.low %vm1618, %vm1618
        %vm1636 = vmpackc.low %vm1619, %vm1619
        %vm1637 = vmpackc.low %vm1620, %vm1620
        %vm1638 = vmpackc.low %vm1621, %vm1621
        %vm1639 = vmpackc.low %vm1622, %vm1622
        %vm1640 = vmpackc.low %vm1623, %vm1623
        %vm1641 = vmpackc.low %vm1624, %vm1624
        %v1642 = vsel %vm1634, %v1626, 0
        %v1643 = vsel %vm1635, %v1627, 0
        %v1644 = vsel %vm1636, %v1628, 0
        %v1645 = vsel %vm1637, %v1629, 0
        %v1646 = vsel %vm1638, %v1630, 0
        %v1647 = vsel %vm1639, %v1631, 0
        %v1648 = vsel %vm1640, %v1632, 0
        %v1649 = vsel %vm1641, %v1633, 0
        %s1650 = scalar_lea.vmem %s2, 256
        %v1651 = vld [vmem:[%s1650] sm:$0xf]
        %v1652 = vld [vmem:[%s1650 + $0x4] sm:$0xf]
        %v1653 = vld [vmem:[%s1650 + $0x8] sm:$0xf]
        %v1654 = vld [vmem:[%s1650 + $0xc] sm:$0xf]
        %v1655 = vld [vmem:[%s1650 + $0x10] sm:$0xf]
        %v1656 = vld [vmem:[%s1650 + $0x14] sm:$0xf]
        %v1657 = vld [vmem:[%s1650 + $0x18] sm:$0xf]
        %v1658 = vld [vmem:[%s1650 + $0x1c] sm:$0xf]
        %v1667 = vunpack.c.l.b16 %v1651
        %v1668 = vunpack.c.l.b16 %v1652
        %v1669 = vunpack.c.l.b16 %v1653
        %v1670 = vunpack.c.l.b16 %v1654
        %v1671 = vunpack.c.l.b16 %v1655
        %v1672 = vunpack.c.l.b16 %v1656
        %v1673 = vunpack.c.l.b16 %v1657
        %v1674 = vunpack.c.l.b16 %v1658
        %v1675 = vpack.c.b16 %v1668, %v1667
        %v1676 = vpack.c.b16 %v1670, %v1669
        %v1677 = vpack.c.b16 %v1672, %v1671
        %v1678 = vpack.c.b16 %v1674, %v1673
        %v1687 = vunpack.c.l.b16 %v1642
        %v1688 = vunpack.c.l.b16 %v1643
        %v1689 = vunpack.c.l.b16 %v1644
        %v1690 = vunpack.c.l.b16 %v1645
        %v1691 = vunpack.c.l.b16 %v1646
        %v1692 = vunpack.c.l.b16 %v1647
        %v1693 = vunpack.c.l.b16 %v1648
        %v1694 = vunpack.c.l.b16 %v1649
        %v1695 = vpack.c.b16 %v1688, %v1687
        %v1696 = vpack.c.b16 %v1690, %v1689
        %v1697 = vpack.c.b16 %v1692, %v1691
        %v1698 = vpack.c.b16 %v1694, %v1693
        %v1704 = vsel %vm334, %v1675, 0
        %v1707 = vsel %vm334, %v1676, 0
        %v1710 = vsel %vm334, %v1677, 0
        %v1713 = vsel %vm334, %v1678, 0
        %1715 = vmatprep.subr.bf16.mxu0 0
        %1716 = vmatpush1.bf16.msra.mxu0 %v1695
        %1717 = vmatprep.subr.bf16.mxu0 0
        %1718 = vmatpush1.bf16.msra.mxu0 %v1696
        %1719 = vmatprep.subr.bf16.mxu0 0
        %1720 = vmatpush1.bf16.msra.mxu0 %v1697
        %1721 = vmatprep.subr.bf16.mxu0 0
        %1722 = vmatpush1.bf16.msra.mxu0 %v1698
        %1723 = vmatprep.subr.bf16.mxu0 0
        %1724 = vmatpush1.bf16.msra.mxu0 0
        %1725 = vmatprep.subr.bf16.mxu0 0
        %1726 = vmatpush1.bf16.msra.mxu0 0
        %1727 = vmatprep.subr.bf16.mxu0 0
        %1728 = vmatpush1.bf16.msra.mxu0 0
        %1729 = vmatprep.subr.bf16.mxu0 0
        %1730 = vmatpush1.bf16.msra.mxu0 0
        %1731 = vmatprep.subr.bf16.mxu0 0
        %1732 = vmatpush1.bf16.msra.mxu0 0
        %1733 = vmatprep.subr.bf16.mxu0 0
        %1734 = vmatpush1.bf16.msra.mxu0 0
        %1735 = vmatprep.subr.bf16.mxu0 0
        %1736 = vmatpush1.bf16.msra.mxu0 0
        %1737 = vmatprep.subr.bf16.mxu0 0
        %1738 = vmatpush1.bf16.msra.mxu0 0
        %1739 = vmatprep.subr.bf16.mxu0 0
        %1740 = vmatpush1.bf16.msra.mxu0 0
        %1741 = vmatprep.subr.bf16.mxu0 0
        %1742 = vmatpush1.bf16.msra.mxu0 0
        %1743 = vmatprep.subr.bf16.mxu0 0
        %1744 = vmatpush1.bf16.msra.mxu0 0
        %1745 = vmatprep.subr.bf16.mxu0 0
        %1746 = vmatpush1.bf16.msra.mxu0 0
        %1747 = vmatprep.mubr.bf16.mxu0 0
        %1748 = vmatmul.mubr.bf16.gmra.mrb[0].mxu0 %v1704
        %v1749 = vpop.f32.mrb[0].mxu0
        %v1750 = vadd.f32 0.0, %v1749
        %v1751 = vpop.f32.mrb[0].mxu0
        %v1752 = vpop.f32.mrb[0].mxu0
        %v1753 = vadd.f32 0.0, %v1752
        %v1754 = vpop.f32.mrb[0].mxu0
        %1755 = vmatprep.mubr.bf16.mxu0 0
        %1756 = vmatmul.mubr.bf16.gmra.mrb[0].mxu0 %v1707
        %v1757 = vpop.f32.mrb[0].mxu0
        %v1758 = vadd.f32 0.0, %v1757
        %v1759 = vpop.f32.mrb[0].mxu0
        %v1760 = vpop.f32.mrb[0].mxu0
        %v1761 = vadd.f32 0.0, %v1760
        %v1762 = vpop.f32.mrb[0].mxu0
        %1763 = vmatprep.mubr.bf16.mxu0 0
        %1764 = vmatmul.mubr.bf16.gmra.mrb[0].mxu0 %v1710
        %v1765 = vpop.f32.mrb[0].mxu0
        %v1766 = vadd.f32 0.0, %v1765
        %v1767 = vpop.f32.mrb[0].mxu0
        %v1768 = vpop.f32.mrb[0].mxu0
        %v1769 = vadd.f32 0.0, %v1768
        %v1770 = vpop.f32.mrb[0].mxu0
        %1771 = vmatprep.mubr.bf16.mxu0 0
        %1772 = vmatmul.mubr.bf16.gmra.mrb[0].mxu0 %v1713
        %v1773 = vpop.f32.mrb[0].mxu0
        %v1774 = vadd.f32 0.0, %v1773
        %v1775 = vpop.f32.mrb[0].mxu0
        %v1776 = vpop.f32.mrb[0].mxu0
        %v1777 = vadd.f32 0.0, %v1776
        %v1778 = vpop.f32.mrb[0].mxu0
        %1779 = vdwg.mxu0
        %1780 = vst [vmem:[#allocation2 + $0x40] sm:$0xff] %v1750
        %1781 = vst [vmem:[#allocation2 + $0xd8] sm:$0xff] %v1753
        %1782 = vst [vmem:[#allocation2 + $0x170] sm:$0xff] %v1758
        %1783 = vst [vmem:[#allocation2 + $0x208] sm:$0xff] %v1761
        %1784 = vst [vmem:[#allocation2 + $0x2a0] sm:$0xff] %v1766
        %1785 = vst [vmem:[#allocation2 + $0x338] sm:$0xff] %v1769
        %1786 = vst [vmem:[#allocation2 + $0x3d0] sm:$0xff] %v1774
        %1787 = vst [vmem:[#allocation2 + $0x468] sm:$0xff] %v1777
        %vm1788 = vcmp.eq.s32.totalorder %v242, 10
        %vm1789 = vcmp.eq.s32.totalorder %v243, 10
        %vm1790 = vcmp.eq.s32.totalorder %v244, 10
        %vm1791 = vcmp.eq.s32.totalorder %v245, 10
        %vm1792 = vcmp.eq.s32.totalorder %v246, 10
        %vm1793 = vcmp.eq.s32.totalorder %v247, 10
        %vm1794 = vcmp.eq.s32.totalorder %v248, 10
        %vm1795 = vcmp.eq.s32.totalorder %v249, 10
        %s1796 = scalar_lea.vmem %s215, 288
        %v1797 = vld [vmem:[%s1796] sm:$0xf]
        %v1798 = vld [vmem:[%s1796 + $0x4] sm:$0xf]
        %v1799 = vld [vmem:[%s1796 + $0x8] sm:$0xf]
        %v1800 = vld [vmem:[%s1796 + $0xc] sm:$0xf]
        %v1801 = vld [vmem:[%s1796 + $0x10] sm:$0xf]
        %v1802 = vld [vmem:[%s1796 + $0x14] sm:$0xf]
        %v1803 = vld [vmem:[%s1796 + $0x18] sm:$0xf]
        %v1804 = vld [vmem:[%s1796 + $0x1c] sm:$0xf]
        %vm1805 = vmpackc.low %vm1788, %vm1788
        %vm1806 = vmpackc.low %vm1789, %vm1789
        %vm1807 = vmpackc.low %vm1790, %vm1790
        %vm1808 = vmpackc.low %vm1791, %vm1791
        %vm1809 = vmpackc.low %vm1792, %vm1792
        %vm1810 = vmpackc.low %vm1793, %vm1793
        %vm1811 = vmpackc.low %vm1794, %vm1794
        %vm1812 = vmpackc.low %vm1795, %vm1795
        %v1813 = vsel %vm1805, %v1797, 0
        %v1814 = vsel %vm1806, %v1798, 0
        %v1815 = vsel %vm1807, %v1799, 0
        %v1816 = vsel %vm1808, %v1800, 0
        %v1817 = vsel %vm1809, %v1801, 0
        %v1818 = vsel %vm1810, %v1802, 0
        %v1819 = vsel %vm1811, %v1803, 0
        %v1820 = vsel %vm1812, %v1804, 0
        %s1821 = scalar_lea.vmem %s2, 288
        %v1822 = vld [vmem:[%s1821] sm:$0xf]
        %v1823 = vld [vmem:[%s1821 + $0x4] sm:$0xf]
        %v1824 = vld [vmem:[%s1821 + $0x8] sm:$0xf]
        %v1825 = vld [vmem:[%s1821 + $0xc] sm:$0xf]
        %v1826 = vld [vmem:[%s1821 + $0x10] sm:$0xf]
        %v1827 = vld [vmem:[%s1821 + $0x14] sm:$0xf]
        %v1828 = vld [vmem:[%s1821 + $0x18] sm:$0xf]
        %v1829 = vld [vmem:[%s1821 + $0x1c] sm:$0xf]
        %v1838 = vunpack.c.l.b16 %v1822
        %v1839 = vunpack.c.l.b16 %v1823
        %v1840 = vunpack.c.l.b16 %v1824
        %v1841 = vunpack.c.l.b16 %v1825
        %v1842 = vunpack.c.l.b16 %v1826
        %v1843 = vunpack.c.l.b16 %v1827
        %v1844 = vunpack.c.l.b16 %v1828
        %v1845 = vunpack.c.l.b16 %v1829
        %v1846 = vpack.c.b16 %v1839, %v1838
        %v1847 = vpack.c.b16 %v1841, %v1840
        %v1848 = vpack.c.b16 %v1843, %v1842
        %v1849 = vpack.c.b16 %v1845, %v1844
        %v1858 = vunpack.c.l.b16 %v1813
        %v1859 = vunpack.c.l.b16 %v1814
        %v1860 = vunpack.c.l.b16 %v1815
        %v1861 = vunpack.c.l.b16 %v1816
        %v1862 = vunpack.c.l.b16 %v1817
        %v1863 = vunpack.c.l.b16 %v1818
        %v1864 = vunpack.c.l.b16 %v1819
        %v1865 = vunpack.c.l.b16 %v1820
        %v1866 = vpack.c.b16 %v1859, %v1858
        %v1867 = vpack.c.b16 %v1861, %v1860
        %v1868 = vpack.c.b16 %v1863, %v1862
        %v1869 = vpack.c.b16 %v1865, %v1864
        %v1875 = vsel %vm334, %v1846, 0
        %v1878 = vsel %vm334, %v1847, 0
        %v1881 = vsel %vm334, %v1848, 0
        %v1884 = vsel %vm334, %v1849, 0
        %1886 = vmatprep.subr.bf16.mxu0 0
        %1887 = vmatpush1.bf16.msra.mxu0 %v1866
        %1888 = vmatprep.subr.bf16.mxu0 0
        %1889 = vmatpush1.bf16.msra.mxu0 %v1867
        %1890 = vmatprep.subr.bf16.mxu0 0
        %1891 = vmatpush1.bf16.msra.mxu0 %v1868
        %1892 = vmatprep.subr.bf16.mxu0 0
        %1893 = vmatpush1.bf16.msra.mxu0 %v1869
        %1894 = vmatprep.subr.bf16.mxu0 0
        %1895 = vmatpush1.bf16.msra.mxu0 0
        %1896 = vmatprep.subr.bf16.mxu0 0
        %1897 = vmatpush1.bf16.msra.mxu0 0
        %1898 = vmatprep.subr.bf16.mxu0 0
        %1899 = vmatpush1.bf16.msra.mxu0 0
        %1900 = vmatprep.subr.bf16.mxu0 0
        %1901 = vmatpush1.bf16.msra.mxu0 0
        %1902 = vmatprep.subr.bf16.mxu0 0
        %1903 = vmatpush1.bf16.msra.mxu0 0
        %1904 = vmatprep.subr.bf16.mxu0 0
        %1905 = vmatpush1.bf16.msra.mxu0 0
        %1906 = vmatprep.subr.bf16.mxu0 0
        %1907 = vmatpush1.bf16.msra.mxu0 0
        %1908 = vmatprep.subr.bf16.mxu0 0
        %1909 = vmatpush1.bf16.msra.mxu0 0
        %1910 = vmatprep.subr.bf16.mxu0 0
        %1911 = vmatpush1.bf16.msra.mxu0 0
        %1912 = vmatprep.subr.bf16.mxu0 0
        %1913 = vmatpush1.bf16.msra.mxu0 0
        %1914 = vmatprep.subr.bf16.mxu0 0
        %1915 = vmatpush1.bf16.msra.mxu0 0
        %1916 = vmatprep.subr.bf16.mxu0 0
        %1917 = vmatpush1.bf16.msra.mxu0 0
        %1918 = vmatprep.mubr.bf16.mxu0 0
        %1919 = vmatmul.mubr.bf16.gmra.mrb[0].mxu0 %v1875
        %v1920 = vpop.f32.mrb[0].mxu0
        %v1921 = vadd.f32 0.0, %v1920
        %v1922 = vpop.f32.mrb[0].mxu0
        %v1923 = vpop.f32.mrb[0].mxu0
        %v1924 = vadd.f32 0.0, %v1923
        %v1925 = vpop.f32.mrb[0].mxu0
        %1926 = vmatprep.mubr.bf16.mxu0 0
        %1927 = vmatmul.mubr.bf16.gmra.mrb[0].mxu0 %v1878
        %v1928 = vpop.f32.mrb[0].mxu0
        %v1929 = vadd.f32 0.0, %v1928
        %v1930 = vpop.f32.mrb[0].mxu0
        %v1931 = vpop.f32.mrb[0].mxu0
        %v1932 = vadd.f32 0.0, %v1931
        %v1933 = vpop.f32.mrb[0].mxu0
        %1934 = vmatprep.mubr.bf16.mxu0 0
        %1935 = vmatmul.mubr.bf16.gmra.mrb[0].mxu0 %v1881
        %v1936 = vpop.f32.mrb[0].mxu0
        %v1937 = vadd.f32 0.0, %v1936
        %v1938 = vpop.f32.mrb[0].mxu0
        %v1939 = vpop.f32.mrb[0].mxu0
        %v1940 = vadd.f32 0.0, %v1939
        %v1941 = vpop.f32.mrb[0].mxu0
        %1942 = vmatprep.mubr.bf16.mxu0 0
        %1943 = vmatmul.mubr.bf16.gmra.mrb[0].mxu0 %v1884
        %v1944 = vpop.f32.mrb[0].mxu0
        %v1945 = vadd.f32 0.0, %v1944
        %v1946 = vpop.f32.mrb[0].mxu0
        %v1947 = vpop.f32.mrb[0].mxu0
        %v1948 = vadd.f32 0.0, %v1947
        %v1949 = vpop.f32.mrb[0].mxu0
        %1950 = vdwg.mxu0
        %1951 = vst [vmem:[#allocation2 + $0x48] sm:$0xff] %v1921
        %1952 = vst [vmem:[#allocation2 + $0xe0] sm:$0xff] %v1924
        %1953 = vst [vmem:[#allocation2 + $0x178] sm:$0xff] %v1929
        %1954 = vst [vmem:[#allocation2 + $0x210] sm:$0xff] %v1932
        %1955 = vst [vmem:[#allocation2 + $0x2a8] sm:$0xff] %v1937
        %1956 = vst [vmem:[#allocation2 + $0x340] sm:$0xff] %v1940
        %1957 = vst [vmem:[#allocation2 + $0x3d8] sm:$0xff] %v1945
        %1958 = vst [vmem:[#allocation2 + $0x470] sm:$0xff] %v1948
        %vm1959 = vcmp.eq.s32.totalorder %v242, 11
        %vm1960 = vcmp.eq.s32.totalorder %v243, 11
        %vm1961 = vcmp.eq.s32.totalorder %v244, 11
        %vm1962 = vcmp.eq.s32.totalorder %v245, 11
        %vm1963 = vcmp.eq.s32.totalorder %v246, 11
        %vm1964 = vcmp.eq.s32.totalorder %v247, 11
        %vm1965 = vcmp.eq.s32.totalorder %v248, 11
        %vm1966 = vcmp.eq.s32.totalorder %v249, 11
        %s1967 = scalar_lea.vmem %s215, 320
        %v1968 = vld [vmem:[%s1967] sm:$0xf]
        %v1969 = vld [vmem:[%s1967 + $0x4] sm:$0xf]
        %v1970 = vld [vmem:[%s1967 + $0x8] sm:$0xf]
        %v1971 = vld [vmem:[%s1967 + $0xc] sm:$0xf]
        %v1972 = vld [vmem:[%s1967 + $0x10] sm:$0xf]
        %v1973 = vld [vmem:[%s1967 + $0x14] sm:$0xf]
        %v1974 = vld [vmem:[%s1967 + $0x18] sm:$0xf]
        %v1975 = vld [vmem:[%s1967 + $0x1c] sm:$0xf]
        %vm1976 = vmpackc.low %vm1959, %vm1959
        %vm1977 = vmpackc.low %vm1960, %vm1960
        %vm1978 = vmpackc.low %vm1961, %vm1961
        %vm1979 = vmpackc.low %vm1962, %vm1962
        %vm1980 = vmpackc.low %vm1963, %vm1963
        %vm1981 = vmpackc.low %vm1964, %vm1964
        %vm1982 = vmpackc.low %vm1965, %vm1965
        %vm1983 = vmpackc.low %vm1966, %vm1966
        %v1984 = vsel %vm1976, %v1968, 0
        %v1985 = vsel %vm1977, %v1969, 0
        %v1986 = vsel %vm1978, %v1970, 0
        %v1987 = vsel %vm1979, %v1971, 0
        %v1988 = vsel %vm1980, %v1972, 0
        %v1989 = vsel %vm1981, %v1973, 0
        %v1990 = vsel %vm1982, %v1974, 0
        %v1991 = vsel %vm1983, %v1975, 0
        %s1992 = scalar_lea.vmem %s2, 320
        %v1993 = vld [vmem:[%s1992] sm:$0xf]
        %v1994 = vld [vmem:[%s1992 + $0x4] sm:$0xf]
        %v1995 = vld [vmem:[%s1992 + $0x8] sm:$0xf]
        %v1996 = vld [vmem:[%s1992 + $0xc] sm:$0xf]
        %v1997 = vld [vmem:[%s1992 + $0x10] sm:$0xf]
        %v1998 = vld [vmem:[%s1992 + $0x14] sm:$0xf]
        %v1999 = vld [vmem:[%s1992 + $0x18] sm:$0xf]
        %v2000 = vld [vmem:[%s1992 + $0x1c] sm:$0xf]
        %v2009 = vunpack.c.l.b16 %v1993
        %v2010 = vunpack.c.l.b16 %v1994
        %v2011 = vunpack.c.l.b16 %v1995
        %v2012 = vunpack.c.l.b16 %v1996
        %v2013 = vunpack.c.l.b16 %v1997
        %v2014 = vunpack.c.l.b16 %v1998
        %v2015 = vunpack.c.l.b16 %v1999
        %v2016 = vunpack.c.l.b16 %v2000
        %v2017 = vpack.c.b16 %v2010, %v2009
        %v2018 = vpack.c.b16 %v2012, %v2011
        %v2019 = vpack.c.b16 %v2014, %v2013
        %v2020 = vpack.c.b16 %v2016, %v2015
        %v2029 = vunpack.c.l.b16 %v1984
        %v2030 = vunpack.c.l.b16 %v1985
        %v2031 = vunpack.c.l.b16 %v1986
        %v2032 = vunpack.c.l.b16 %v1987
        %v2033 = vunpack.c.l.b16 %v1988
        %v2034 = vunpack.c.l.b16 %v1989
        %v2035 = vunpack.c.l.b16 %v1990
        %v2036 = vunpack.c.l.b16 %v1991
        %v2037 = vpack.c.b16 %v2030, %v2029
        %v2038 = vpack.c.b16 %v2032, %v2031
        %v2039 = vpack.c.b16 %v2034, %v2033
        %v2040 = vpack.c.b16 %v2036, %v2035
        %v2046 = vsel %vm334, %v2017, 0
        %v2049 = vsel %vm334, %v2018, 0
        %v2052 = vsel %vm334, %v2019, 0
        %v2055 = vsel %vm334, %v2020, 0
        %2057 = vmatprep.subr.bf16.mxu0 0
        %2058 = vmatpush1.bf16.msra.mxu0 %v2037
        %2059 = vmatprep.subr.bf16.mxu0 0
        %2060 = vmatpush1.bf16.msra.mxu0 %v2038
        %2061 = vmatprep.subr.bf16.mxu0 0
        %2062 = vmatpush1.bf16.msra.mxu0 %v2039
        %2063 = vmatprep.subr.bf16.mxu0 0
        %2064 = vmatpush1.bf16.msra.mxu0 %v2040
        %2065 = vmatprep.subr.bf16.mxu0 0
        %2066 = vmatpush1.bf16.msra.mxu0 0
        %2067 = vmatprep.subr.bf16.mxu0 0
        %2068 = vmatpush1.bf16.msra.mxu0 0
        %2069 = vmatprep.subr.bf16.mxu0 0
        %2070 = vmatpush1.bf16.msra.mxu0 0
        %2071 = vmatprep.subr.bf16.mxu0 0
        %2072 = vmatpush1.bf16.msra.mxu0 0
        %2073 = vmatprep.subr.bf16.mxu0 0
        %2074 = vmatpush1.bf16.msra.mxu0 0
        %2075 = vmatprep.subr.bf16.mxu0 0
        %2076 = vmatpush1.bf16.msra.mxu0 0
        %2077 = vmatprep.subr.bf16.mxu0 0
        %2078 = vmatpush1.bf16.msra.mxu0 0
        %2079 = vmatprep.subr.bf16.mxu0 0
        %2080 = vmatpush1.bf16.msra.mxu0 0
        %2081 = vmatprep.subr.bf16.mxu0 0
        %2082 = vmatpush1.bf16.msra.mxu0 0
        %2083 = vmatprep.subr.bf16.mxu0 0
        %2084 = vmatpush1.bf16.msra.mxu0 0
        %2085 = vmatprep.subr.bf16.mxu0 0
        %2086 = vmatpush1.bf16.msra.mxu0 0
        %2087 = vmatprep.subr.bf16.mxu0 0
        %2088 = vmatpush1.bf16.msra.mxu0 0
        %2089 = vmatprep.mubr.bf16.mxu0 0
        %2090 = vmatmul.mubr.bf16.gmra.mrb[0].mxu0 %v2046
        %v2091 = vpop.f32.mrb[0].mxu0
        %v2092 = vadd.f32 0.0, %v2091
        %v2093 = vpop.f32.mrb[0].mxu0
        %v2094 = vpop.f32.mrb[0].mxu0
        %v2095 = vadd.f32 0.0, %v2094
        %v2096 = vpop.f32.mrb[0].mxu0
        %2097 = vmatprep.mubr.bf16.mxu0 0
        %2098 = vmatmul.mubr.bf16.gmra.mrb[0].mxu0 %v2049
        %v2099 = vpop.f32.mrb[0].mxu0
        %v2100 = vadd.f32 0.0, %v2099
        %v2101 = vpop.f32.mrb[0].mxu0
        %v2102 = vpop.f32.mrb[0].mxu0
        %v2103 = vadd.f32 0.0, %v2102
        %v2104 = vpop.f32.mrb[0].mxu0
        %2105 = vmatprep.mubr.bf16.mxu0 0
        %2106 = vmatmul.mubr.bf16.gmra.mrb[0].mxu0 %v2052
        %v2107 = vpop.f32.mrb[0].mxu0
        %v2108 = vadd.f32 0.0, %v2107
        %v2109 = vpop.f32.mrb[0].mxu0
        %v2110 = vpop.f32.mrb[0].mxu0
        %v2111 = vadd.f32 0.0, %v2110
        %v2112 = vpop.f32.mrb[0].mxu0
        %2113 = vmatprep.mubr.bf16.mxu0 0
        %2114 = vmatmul.mubr.bf16.gmra.mrb[0].mxu0 %v2055
        %v2115 = vpop.f32.mrb[0].mxu0
        %v2116 = vadd.f32 0.0, %v2115
        %v2117 = vpop.f32.mrb[0].mxu0
        %v2118 = vpop.f32.mrb[0].mxu0
        %v2119 = vadd.f32 0.0, %v2118
        %v2120 = vpop.f32.mrb[0].mxu0
        %2121 = vdwg.mxu0
        %2122 = vst [vmem:[#allocation2 + $0x50] sm:$0xff] %v2092
        %2123 = vst [vmem:[#allocation2 + $0xe8] sm:$0xff] %v2095
        %2124 = vst [vmem:[#allocation2 + $0x180] sm:$0xff] %v2100
        %2125 = vst [vmem:[#allocation2 + $0x218] sm:$0xff] %v2103
        %2126 = vst [vmem:[#allocation2 + $0x2b0] sm:$0xff] %v2108
        %2127 = vst [vmem:[#allocation2 + $0x348] sm:$0xff] %v2111
        %2128 = vst [vmem:[#allocation2 + $0x3e0] sm:$0xff] %v2116
        %2129 = vst [vmem:[#allocation2 + $0x478] sm:$0xff] %v2119
        %vm2130 = vcmp.eq.s32.totalorder %v242, 12
        %vm2131 = vcmp.eq.s32.totalorder %v243, 12
        %vm2132 = vcmp.eq.s32.totalorder %v244, 12
        %vm2133 = vcmp.eq.s32.totalorder %v245, 12
        %vm2134 = vcmp.eq.s32.totalorder %v246, 12
        %vm2135 = vcmp.eq.s32.totalorder %v247, 12
        %vm2136 = vcmp.eq.s32.totalorder %v248, 12
        %vm2137 = vcmp.eq.s32.totalorder %v249, 12
        %s2138 = scalar_lea.vmem %s215, 352
        %v2139 = vld [vmem:[%s2138] sm:$0xf]
        %v2140 = vld [vmem:[%s2138 + $0x4] sm:$0xf]
        %v2141 = vld [vmem:[%s2138 + $0x8] sm:$0xf]
        %v2142 = vld [vmem:[%s2138 + $0xc] sm:$0xf]
        %v2143 = vld [vmem:[%s2138 + $0x10] sm:$0xf]
        %v2144 = vld [vmem:[%s2138 + $0x14] sm:$0xf]
        %v2145 = vld [vmem:[%s2138 + $0x18] sm:$0xf]
        %v2146 = vld [vmem:[%s2138 + $0x1c] sm:$0xf]
        %vm2147 = vmpackc.low %vm2130, %vm2130
        %vm2148 = vmpackc.low %vm2131, %vm2131
        %vm2149 = vmpackc.low %vm2132, %vm2132
        %vm2150 = vmpackc.low %vm2133, %vm2133
        %vm2151 = vmpackc.low %vm2134, %vm2134
        %vm2152 = vmpackc.low %vm2135, %vm2135
        %vm2153 = vmpackc.low %vm2136, %vm2136
        %vm2154 = vmpackc.low %vm2137, %vm2137
        %v2155 = vsel %vm2147, %v2139, 0
        %v2156 = vsel %vm2148, %v2140, 0
        %v2157 = vsel %vm2149, %v2141, 0
        %v2158 = vsel %vm2150, %v2142, 0
        %v2159 = vsel %vm2151, %v2143, 0
        %v2160 = vsel %vm2152, %v2144, 0
        %v2161 = vsel %vm2153, %v2145, 0
        %v2162 = vsel %vm2154, %v2146, 0
        %s2163 = scalar_lea.vmem %s2, 352
        %v2164 = vld [vmem:[%s2163] sm:$0xf]
        %v2165 = vld [vmem:[%s2163 + $0x4] sm:$0xf]
        %v2166 = vld [vmem:[%s2163 + $0x8] sm:$0xf]
        %v2167 = vld [vmem:[%s2163 + $0xc] sm:$0xf]
        %v2168 = vld [vmem:[%s2163 + $0x10] sm:$0xf]
        %v2169 = vld [vmem:[%s2163 + $0x14] sm:$0xf]
        %v2170 = vld [vmem:[%s2163 + $0x18] sm:$0xf]
        %v2171 = vld [vmem:[%s2163 + $0x1c] sm:$0xf]
        %v2180 = vunpack.c.l.b16 %v2164
        %v2181 = vunpack.c.l.b16 %v2165
        %v2182 = vunpack.c.l.b16 %v2166
        %v2183 = vunpack.c.l.b16 %v2167
        %v2184 = vunpack.c.l.b16 %v2168
        %v2185 = vunpack.c.l.b16 %v2169
        %v2186 = vunpack.c.l.b16 %v2170
        %v2187 = vunpack.c.l.b16 %v2171
        %v2188 = vpack.c.b16 %v2181, %v2180
        %v2189 = vpack.c.b16 %v2183, %v2182
        %v2190 = vpack.c.b16 %v2185, %v2184
        %v2191 = vpack.c.b16 %v2187, %v2186
        %v2200 = vunpack.c.l.b16 %v2155
        %v2201 = vunpack.c.l.b16 %v2156
        %v2202 = vunpack.c.l.b16 %v2157
        %v2203 = vunpack.c.l.b16 %v2158
        %v2204 = vunpack.c.l.b16 %v2159
        %v2205 = vunpack.c.l.b16 %v2160
        %v2206 = vunpack.c.l.b16 %v2161
        %v2207 = vunpack.c.l.b16 %v2162
        %v2208 = vpack.c.b16 %v2201, %v2200
        %v2209 = vpack.c.b16 %v2203, %v2202
        %v2210 = vpack.c.b16 %v2205, %v2204
        %v2211 = vpack.c.b16 %v2207, %v2206
        %v2217 = vsel %vm334, %v2188, 0
        %v2220 = vsel %vm334, %v2189, 0
        %v2223 = vsel %vm334, %v2190, 0
        %v2226 = vsel %vm334, %v2191, 0
        %2228 = vmatprep.subr.bf16.mxu0 0
        %2229 = vmatpush1.bf16.msra.mxu0 %v2208
        %2230 = vmatprep.subr.bf16.mxu0 0
        %2231 = vmatpush1.bf16.msra.mxu0 %v2209
        %2232 = vmatprep.subr.bf16.mxu0 0
        %2233 = vmatpush1.bf16.msra.mxu0 %v2210
        %2234 = vmatprep.subr.bf16.mxu0 0
        %2235 = vmatpush1.bf16.msra.mxu0 %v2211
        %2236 = vmatprep.subr.bf16.mxu0 0
        %2237 = vmatpush1.bf16.msra.mxu0 0
        %2238 = vmatprep.subr.bf16.mxu0 0
        %2239 = vmatpush1.bf16.msra.mxu0 0
        %2240 = vmatprep.subr.bf16.mxu0 0
        %2241 = vmatpush1.bf16.msra.mxu0 0
        %2242 = vmatprep.subr.bf16.mxu0 0
        %2243 = vmatpush1.bf16.msra.mxu0 0
        %2244 = vmatprep.subr.bf16.mxu0 0
        %2245 = vmatpush1.bf16.msra.mxu0 0
        %2246 = vmatprep.subr.bf16.mxu0 0
        %2247 = vmatpush1.bf16.msra.mxu0 0
        %2248 = vmatprep.subr.bf16.mxu0 0
        %2249 = vmatpush1.bf16.msra.mxu0 0
        %2250 = vmatprep.subr.bf16.mxu0 0
        %2251 = vmatpush1.bf16.msra.mxu0 0
        %2252 = vmatprep.subr.bf16.mxu0 0
        %2253 = vmatpush1.bf16.msra.mxu0 0
        %2254 = vmatprep.subr.bf16.mxu0 0
        %2255 = vmatpush1.bf16.msra.mxu0 0
        %2256 = vmatprep.subr.bf16.mxu0 0
        %2257 = vmatpush1.bf16.msra.mxu0 0
        %2258 = vmatprep.subr.bf16.mxu0 0
        %2259 = vmatpush1.bf16.msra.mxu0 0
        %2260 = vmatprep.mubr.bf16.mxu0 0
        %2261 = vmatmul.mubr.bf16.gmra.mrb[0].mxu0 %v2217
        %v2262 = vpop.f32.mrb[0].mxu0
        %v2263 = vadd.f32 0.0, %v2262
        %v2264 = vpop.f32.mrb[0].mxu0
        %v2265 = vpop.f32.mrb[0].mxu0
        %v2266 = vadd.f32 0.0, %v2265
        %v2267 = vpop.f32.mrb[0].mxu0
        %2268 = vmatprep.mubr.bf16.mxu0 0
        %2269 = vmatmul.mubr.bf16.gmra.mrb[0].mxu0 %v2220
        %v2270 = vpop.f32.mrb[0].mxu0
        %v2271 = vadd.f32 0.0, %v2270
        %v2272 = vpop.f32.mrb[0].mxu0
        %v2273 = vpop.f32.mrb[0].mxu0
        %v2274 = vadd.f32 0.0, %v2273
        %v2275 = vpop.f32.mrb[0].mxu0
        %2276 = vmatprep.mubr.bf16.mxu0 0
        %2277 = vmatmul.mubr.bf16.gmra.mrb[0].mxu0 %v2223
        %v2278 = vpop.f32.mrb[0].mxu0
        %v2279 = vadd.f32 0.0, %v2278
        %v2280 = vpop.f32.mrb[0].mxu0
        %v2281 = vpop.f32.mrb[0].mxu0
        %v2282 = vadd.f32 0.0, %v2281
        %v2283 = vpop.f32.mrb[0].mxu0
        %2284 = vmatprep.mubr.bf16.mxu0 0
        %2285 = vmatmul.mubr.bf16.gmra.mrb[0].mxu0 %v2226
        %v2286 = vpop.f32.mrb[0].mxu0
        %v2287 = vadd.f32 0.0, %v2286
        %v2288 = vpop.f32.mrb[0].mxu0
        %v2289 = vpop.f32.mrb[0].mxu0
        %v2290 = vadd.f32 0.0, %v2289
        %v2291 = vpop.f32.mrb[0].mxu0
        %2292 = vdwg.mxu0
        %2293 = vst [vmem:[#allocation2 + $0x58] sm:$0xff] %v2263
        %2294 = vst [vmem:[#allocation2 + $0xf0] sm:$0xff] %v2266
        %2295 = vst [vmem:[#allocation2 + $0x188] sm:$0xff] %v2271
        %2296 = vst [vmem:[#allocation2 + $0x220] sm:$0xff] %v2274
        %2297 = vst [vmem:[#allocation2 + $0x2b8] sm:$0xff] %v2279
        %2298 = vst [vmem:[#allocation2 + $0x350] sm:$0xff] %v2282
        %2299 = vst [vmem:[#allocation2 + $0x3e8] sm:$0xff] %v2287
        %2300 = vst [vmem:[#allocation2 + $0x480] sm:$0xff] %v2290
        %vm2301 = vcmp.eq.s32.totalorder %v242, 13
        %vm2302 = vcmp.eq.s32.totalorder %v243, 13
        %vm2303 = vcmp.eq.s32.totalorder %v244, 13
        %vm2304 = vcmp.eq.s32.totalorder %v245, 13
        %vm2305 = vcmp.eq.s32.totalorder %v246, 13
        %vm2306 = vcmp.eq.s32.totalorder %v247, 13
        %vm2307 = vcmp.eq.s32.totalorder %v248, 13
        %vm2308 = vcmp.eq.s32.totalorder %v249, 13
        %s2309 = scalar_lea.vmem %s215, 384
        %v2310 = vld [vmem:[%s2309] sm:$0xf]
        %v2311 = vld [vmem:[%s2309 + $0x4] sm:$0xf]
        %v2312 = vld [vmem:[%s2309 + $0x8] sm:$0xf]
        %v2313 = vld [vmem:[%s2309 + $0xc] sm:$0xf]
        %v2314 = vld [vmem:[%s2309 + $0x10] sm:$0xf]
        %v2315 = vld [vmem:[%s2309 + $0x14] sm:$0xf]
        %v2316 = vld [vmem:[%s2309 + $0x18] sm:$0xf]
        %v2317 = vld [vmem:[%s2309 + $0x1c] sm:$0xf]
        %vm2318 = vmpackc.low %vm2301, %vm2301
        %vm2319 = vmpackc.low %vm2302, %vm2302
        %vm2320 = vmpackc.low %vm2303, %vm2303
        %vm2321 = vmpackc.low %vm2304, %vm2304
        %vm2322 = vmpackc.low %vm2305, %vm2305
        %vm2323 = vmpackc.low %vm2306, %vm2306
        %vm2324 = vmpackc.low %vm2307, %vm2307
        %vm2325 = vmpackc.low %vm2308, %vm2308
        %v2326 = vsel %vm2318, %v2310, 0
        %v2327 = vsel %vm2319, %v2311, 0
        %v2328 = vsel %vm2320, %v2312, 0
        %v2329 = vsel %vm2321, %v2313, 0
        %v2330 = vsel %vm2322, %v2314, 0
        %v2331 = vsel %vm2323, %v2315, 0
        %v2332 = vsel %vm2324, %v2316, 0
        %v2333 = vsel %vm2325, %v2317, 0
        %s2334 = scalar_lea.vmem %s2, 384
        %v2335 = vld [vmem:[%s2334] sm:$0xf]
        %v2336 = vld [vmem:[%s2334 + $0x4] sm:$0xf]
        %v2337 = vld [vmem:[%s2334 + $0x8] sm:$0xf]
        %v2338 = vld [vmem:[%s2334 + $0xc] sm:$0xf]
        %v2339 = vld [vmem:[%s2334 + $0x10] sm:$0xf]
        %v2340 = vld [vmem:[%s2334 + $0x14] sm:$0xf]
        %v2341 = vld [vmem:[%s2334 + $0x18] sm:$0xf]
        %v2342 = vld [vmem:[%s2334 + $0x1c] sm:$0xf]
        %v2351 = vunpack.c.l.b16 %v2335
        %v2352 = vunpack.c.l.b16 %v2336
        %v2353 = vunpack.c.l.b16 %v2337
        %v2354 = vunpack.c.l.b16 %v2338
        %v2355 = vunpack.c.l.b16 %v2339
        %v2356 = vunpack.c.l.b16 %v2340
        %v2357 = vunpack.c.l.b16 %v2341
        %v2358 = vunpack.c.l.b16 %v2342
        %v2359 = vpack.c.b16 %v2352, %v2351
        %v2360 = vpack.c.b16 %v2354, %v2353
        %v2361 = vpack.c.b16 %v2356, %v2355
        %v2362 = vpack.c.b16 %v2358, %v2357
        %v2371 = vunpack.c.l.b16 %v2326
        %v2372 = vunpack.c.l.b16 %v2327
        %v2373 = vunpack.c.l.b16 %v2328
        %v2374 = vunpack.c.l.b16 %v2329
        %v2375 = vunpack.c.l.b16 %v2330
        %v2376 = vunpack.c.l.b16 %v2331
        %v2377 = vunpack.c.l.b16 %v2332
        %v2378 = vunpack.c.l.b16 %v2333
        %v2379 = vpack.c.b16 %v2372, %v2371
        %v2380 = vpack.c.b16 %v2374, %v2373
        %v2381 = vpack.c.b16 %v2376, %v2375
        %v2382 = vpack.c.b16 %v2378, %v2377
        %v2388 = vsel %vm334, %v2359, 0
        %v2391 = vsel %vm334, %v2360, 0
        %v2394 = vsel %vm334, %v2361, 0
        %v2397 = vsel %vm334, %v2362, 0
        %2399 = vmatprep.subr.bf16.mxu0 0
        %2400 = vmatpush1.bf16.msra.mxu0 %v2379
        %2401 = vmatprep.subr.bf16.mxu0 0
        %2402 = vmatpush1.bf16.msra.mxu0 %v2380
        %2403 = vmatprep.subr.bf16.mxu0 0
        %2404 = vmatpush1.bf16.msra.mxu0 %v2381
        %2405 = vmatprep.subr.bf16.mxu0 0
        %2406 = vmatpush1.bf16.msra.mxu0 %v2382
        %2407 = vmatprep.subr.bf16.mxu0 0
        %2408 = vmatpush1.bf16.msra.mxu0 0
        %2409 = vmatprep.subr.bf16.mxu0 0
        %2410 = vmatpush1.bf16.msra.mxu0 0
        %2411 = vmatprep.subr.bf16.mxu0 0
        %2412 = vmatpush1.bf16.msra.mxu0 0
        %2413 = vmatprep.subr.bf16.mxu0 0
        %2414 = vmatpush1.bf16.msra.mxu0 0
        %2415 = vmatprep.subr.bf16.mxu0 0
        %2416 = vmatpush1.bf16.msra.mxu0 0
        %2417 = vmatprep.subr.bf16.mxu0 0
        %2418 = vmatpush1.bf16.msra.mxu0 0
        %2419 = vmatprep.subr.bf16.mxu0 0
        %2420 = vmatpush1.bf16.msra.mxu0 0
        %2421 = vmatprep.subr.bf16.mxu0 0
        %2422 = vmatpush1.bf16.msra.mxu0 0
        %2423 = vmatprep.subr.bf16.mxu0 0
        %2424 = vmatpush1.bf16.msra.mxu0 0
        %2425 = vmatprep.subr.bf16.mxu0 0
        %2426 = vmatpush1.bf16.msra.mxu0 0
        %2427 = vmatprep.subr.bf16.mxu0 0
        %2428 = vmatpush1.bf16.msra.mxu0 0
        %2429 = vmatprep.subr.bf16.mxu0 0
        %2430 = vmatpush1.bf16.msra.mxu0 0
        %2431 = vmatprep.mubr.bf16.mxu0 0
        %2432 = vmatmul.mubr.bf16.gmra.mrb[0].mxu0 %v2388
        %v2433 = vpop.f32.mrb[0].mxu0
        %v2434 = vadd.f32 0.0, %v2433
        %v2435 = vpop.f32.mrb[0].mxu0
        %v2436 = vpop.f32.mrb[0].mxu0
        %v2437 = vadd.f32 0.0, %v2436
        %v2438 = vpop.f32.mrb[0].mxu0
        %2439 = vmatprep.mubr.bf16.mxu0 0
        %2440 = vmatmul.mubr.bf16.gmra.mrb[0].mxu0 %v2391
        %v2441 = vpop.f32.mrb[0].mxu0
        %v2442 = vadd.f32 0.0, %v2441
        %v2443 = vpop.f32.mrb[0].mxu0
        %v2444 = vpop.f32.mrb[0].mxu0
        %v2445 = vadd.f32 0.0, %v2444
        %v2446 = vpop.f32.mrb[0].mxu0
        %2447 = vmatprep.mubr.bf16.mxu0 0
        %2448 = vmatmul.mubr.bf16.gmra.mrb[0].mxu0 %v2394
        %v2449 = vpop.f32.mrb[0].mxu0
        %v2450 = vadd.f32 0.0, %v2449
        %v2451 = vpop.f32.mrb[0].mxu0
        %v2452 = vpop.f32.mrb[0].mxu0
        %v2453 = vadd.f32 0.0, %v2452
        %v2454 = vpop.f32.mrb[0].mxu0
        %2455 = vmatprep.mubr.bf16.mxu0 0
        %2456 = vmatmul.mubr.bf16.gmra.mrb[0].mxu0 %v2397
        %v2457 = vpop.f32.mrb[0].mxu0
        %v2458 = vadd.f32 0.0, %v2457
        %v2459 = vpop.f32.mrb[0].mxu0
        %v2460 = vpop.f32.mrb[0].mxu0
        %v2461 = vadd.f32 0.0, %v2460
        %v2462 = vpop.f32.mrb[0].mxu0
        %2463 = vdwg.mxu0
        %2464 = vst [vmem:[#allocation2 + $0x60] sm:$0xff] %v2434
        %2465 = vst [vmem:[#allocation2 + $0xf8] sm:$0xff] %v2437
        %2466 = vst [vmem:[#allocation2 + $0x190] sm:$0xff] %v2442
        %2467 = vst [vmem:[#allocation2 + $0x228] sm:$0xff] %v2445
        %2468 = vst [vmem:[#allocation2 + $0x2c0] sm:$0xff] %v2450
        %2469 = vst [vmem:[#allocation2 + $0x358] sm:$0xff] %v2453
        %2470 = vst [vmem:[#allocation2 + $0x3f0] sm:$0xff] %v2458
        %2471 = vst [vmem:[#allocation2 + $0x488] sm:$0xff] %v2461
        %vm2472 = vcmp.eq.s32.totalorder %v242, 14
        %vm2473 = vcmp.eq.s32.totalorder %v243, 14
        %vm2474 = vcmp.eq.s32.totalorder %v244, 14
        %vm2475 = vcmp.eq.s32.totalorder %v245, 14
        %vm2476 = vcmp.eq.s32.totalorder %v246, 14
        %vm2477 = vcmp.eq.s32.totalorder %v247, 14
        %vm2478 = vcmp.eq.s32.totalorder %v248, 14
        %vm2479 = vcmp.eq.s32.totalorder %v249, 14
        %s2480 = scalar_lea.vmem %s215, 416
        %v2481 = vld [vmem:[%s2480] sm:$0xf]
        %v2482 = vld [vmem:[%s2480 + $0x4] sm:$0xf]
        %v2483 = vld [vmem:[%s2480 + $0x8] sm:$0xf]
        %v2484 = vld [vmem:[%s2480 + $0xc] sm:$0xf]
        %v2485 = vld [vmem:[%s2480 + $0x10] sm:$0xf]
        %v2486 = vld [vmem:[%s2480 + $0x14] sm:$0xf]
        %v2487 = vld [vmem:[%s2480 + $0x18] sm:$0xf]
        %v2488 = vld [vmem:[%s2480 + $0x1c] sm:$0xf]
        %vm2489 = vmpackc.low %vm2472, %vm2472
        %vm2490 = vmpackc.low %vm2473, %vm2473
        %vm2491 = vmpackc.low %vm2474, %vm2474
        %vm2492 = vmpackc.low %vm2475, %vm2475
        %vm2493 = vmpackc.low %vm2476, %vm2476
        %vm2494 = vmpackc.low %vm2477, %vm2477
        %vm2495 = vmpackc.low %vm2478, %vm2478
        %vm2496 = vmpackc.low %vm2479, %vm2479
        %v2497 = vsel %vm2489, %v2481, 0
        %v2498 = vsel %vm2490, %v2482, 0
        %v2499 = vsel %vm2491, %v2483, 0
        %v2500 = vsel %vm2492, %v2484, 0
        %v2501 = vsel %vm2493, %v2485, 0
        %v2502 = vsel %vm2494, %v2486, 0
        %v2503 = vsel %vm2495, %v2487, 0
        %v2504 = vsel %vm2496, %v2488, 0
        %s2505 = scalar_lea.vmem %s2, 416
        %v2506 = vld [vmem:[%s2505] sm:$0xf]
        %v2507 = vld [vmem:[%s2505 + $0x4] sm:$0xf]
        %v2508 = vld [vmem:[%s2505 + $0x8] sm:$0xf]
        %v2509 = vld [vmem:[%s2505 + $0xc] sm:$0xf]
        %v2510 = vld [vmem:[%s2505 + $0x10] sm:$0xf]
        %v2511 = vld [vmem:[%s2505 + $0x14] sm:$0xf]
        %v2512 = vld [vmem:[%s2505 + $0x18] sm:$0xf]
        %v2513 = vld [vmem:[%s2505 + $0x1c] sm:$0xf]
        %v2522 = vunpack.c.l.b16 %v2506
        %v2523 = vunpack.c.l.b16 %v2507
        %v2524 = vunpack.c.l.b16 %v2508
        %v2525 = vunpack.c.l.b16 %v2509
        %v2526 = vunpack.c.l.b16 %v2510
        %v2527 = vunpack.c.l.b16 %v2511
        %v2528 = vunpack.c.l.b16 %v2512
        %v2529 = vunpack.c.l.b16 %v2513
        %v2530 = vpack.c.b16 %v2523, %v2522
        %v2531 = vpack.c.b16 %v2525, %v2524
        %v2532 = vpack.c.b16 %v2527, %v2526
        %v2533 = vpack.c.b16 %v2529, %v2528
        %v2542 = vunpack.c.l.b16 %v2497
        %v2543 = vunpack.c.l.b16 %v2498
        %v2544 = vunpack.c.l.b16 %v2499
        %v2545 = vunpack.c.l.b16 %v2500
        %v2546 = vunpack.c.l.b16 %v2501
        %v2547 = vunpack.c.l.b16 %v2502
        %v2548 = vunpack.c.l.b16 %v2503
        %v2549 = vunpack.c.l.b16 %v2504
        %v2550 = vpack.c.b16 %v2543, %v2542
        %v2551 = vpack.c.b16 %v2545, %v2544
        %v2552 = vpack.c.b16 %v2547, %v2546
        %v2553 = vpack.c.b16 %v2549, %v2548
        %v2559 = vsel %vm334, %v2530, 0
        %v2562 = vsel %vm334, %v2531, 0
        %v2565 = vsel %vm334, %v2532, 0
        %v2568 = vsel %vm334, %v2533, 0
        %2570 = vmatprep.subr.bf16.mxu0 0
        %2571 = vmatpush1.bf16.msra.mxu0 %v2550
        %2572 = vmatprep.subr.bf16.mxu0 0
        %2573 = vmatpush1.bf16.msra.mxu0 %v2551
        %2574 = vmatprep.subr.bf16.mxu0 0
        %2575 = vmatpush1.bf16.msra.mxu0 %v2552
        %2576 = vmatprep.subr.bf16.mxu0 0
        %2577 = vmatpush1.bf16.msra.mxu0 %v2553
        %2578 = vmatprep.subr.bf16.mxu0 0
        %2579 = vmatpush1.bf16.msra.mxu0 0
        %2580 = vmatprep.subr.bf16.mxu0 0
        %2581 = vmatpush1.bf16.msra.mxu0 0
        %2582 = vmatprep.subr.bf16.mxu0 0
        %2583 = vmatpush1.bf16.msra.mxu0 0
        %2584 = vmatprep.subr.bf16.mxu0 0
        %2585 = vmatpush1.bf16.msra.mxu0 0
        %2586 = vmatprep.subr.bf16.mxu0 0
        %2587 = vmatpush1.bf16.msra.mxu0 0
        %2588 = vmatprep.subr.bf16.mxu0 0
        %2589 = vmatpush1.bf16.msra.mxu0 0
        %2590 = vmatprep.subr.bf16.mxu0 0
        %2591 = vmatpush1.bf16.msra.mxu0 0
        %2592 = vmatprep.subr.bf16.mxu0 0
        %2593 = vmatpush1.bf16.msra.mxu0 0
        %2594 = vmatprep.subr.bf16.mxu0 0
        %2595 = vmatpush1.bf16.msra.mxu0 0
        %2596 = vmatprep.subr.bf16.mxu0 0
        %2597 = vmatpush1.bf16.msra.mxu0 0
        %2598 = vmatprep.subr.bf16.mxu0 0
        %2599 = vmatpush1.bf16.msra.mxu0 0
        %2600 = vmatprep.subr.bf16.mxu0 0
        %2601 = vmatpush1.bf16.msra.mxu0 0
        %2602 = vmatprep.mubr.bf16.mxu0 0
        %2603 = vmatmul.mubr.bf16.gmra.mrb[0].mxu0 %v2559
        %v2604 = vpop.f32.mrb[0].mxu0
        %v2605 = vadd.f32 0.0, %v2604
        %v2606 = vpop.f32.mrb[0].mxu0
        %v2607 = vpop.f32.mrb[0].mxu0
        %v2608 = vadd.f32 0.0, %v2607
        %v2609 = vpop.f32.mrb[0].mxu0
        %2610 = vmatprep.mubr.bf16.mxu0 0
        %2611 = vmatmul.mubr.bf16.gmra.mrb[0].mxu0 %v2562
        %v2612 = vpop.f32.mrb[0].mxu0
        %v2613 = vadd.f32 0.0, %v2612
        %v2614 = vpop.f32.mrb[0].mxu0
        %v2615 = vpop.f32.mrb[0].mxu0
        %v2616 = vadd.f32 0.0, %v2615
        %v2617 = vpop.f32.mrb[0].mxu0
        %2618 = vmatprep.mubr.bf16.mxu0 0
        %2619 = vmatmul.mubr.bf16.gmra.mrb[0].mxu0 %v2565
        %v2620 = vpop.f32.mrb[0].mxu0
        %v2621 = vadd.f32 0.0, %v2620
        %v2622 = vpop.f32.mrb[0].mxu0
        %v2623 = vpop.f32.mrb[0].mxu0
        %v2624 = vadd.f32 0.0, %v2623
        %v2625 = vpop.f32.mrb[0].mxu0
        %2626 = vmatprep.mubr.bf16.mxu0 0
        %2627 = vmatmul.mubr.bf16.gmra.mrb[0].mxu0 %v2568
        %v2628 = vpop.f32.mrb[0].mxu0
        %v2629 = vadd.f32 0.0, %v2628
        %v2630 = vpop.f32.mrb[0].mxu0
        %v2631 = vpop.f32.mrb[0].mxu0
        %v2632 = vadd.f32 0.0, %v2631
        %v2633 = vpop.f32.mrb[0].mxu0
        %2634 = vdwg.mxu0
        %2635 = vst [vmem:[#allocation2 + $0x68] sm:$0xff] %v2605
        %2636 = vst [vmem:[#allocation2 + $0x100] sm:$0xff] %v2608
        %2637 = vst [vmem:[#allocation2 + $0x198] sm:$0xff] %v2613
        %2638 = vst [vmem:[#allocation2 + $0x230] sm:$0xff] %v2616
        %2639 = vst [vmem:[#allocation2 + $0x2c8] sm:$0xff] %v2621
        %2640 = vst [vmem:[#allocation2 + $0x360] sm:$0xff] %v2624
        %2641 = vst [vmem:[#allocation2 + $0x3f8] sm:$0xff] %v2629
        %2642 = vst [vmem:[#allocation2 + $0x490] sm:$0xff] %v2632
        %vm2643 = vcmp.eq.s32.totalorder %v242, 15
        %vm2644 = vcmp.eq.s32.totalorder %v243, 15
        %vm2645 = vcmp.eq.s32.totalorder %v244, 15
        %vm2646 = vcmp.eq.s32.totalorder %v245, 15
        %vm2647 = vcmp.eq.s32.totalorder %v246, 15
        %vm2648 = vcmp.eq.s32.totalorder %v247, 15
        %vm2649 = vcmp.eq.s32.totalorder %v248, 15
        %vm2650 = vcmp.eq.s32.totalorder %v249, 15
        %s2651 = scalar_lea.vmem %s215, 448
        %v2652 = vld [vmem:[%s2651] sm:$0xf]
        %v2653 = vld [vmem:[%s2651 + $0x4] sm:$0xf]
        %v2654 = vld [vmem:[%s2651 + $0x8] sm:$0xf]
        %v2655 = vld [vmem:[%s2651 + $0xc] sm:$0xf]
        %v2656 = vld [vmem:[%s2651 + $0x10] sm:$0xf]
        %v2657 = vld [vmem:[%s2651 + $0x14] sm:$0xf]
        %v2658 = vld [vmem:[%s2651 + $0x18] sm:$0xf]
        %v2659 = vld [vmem:[%s2651 + $0x1c] sm:$0xf]
        %vm2660 = vmpackc.low %vm2643, %vm2643
        %vm2661 = vmpackc.low %vm2644, %vm2644
        %vm2662 = vmpackc.low %vm2645, %vm2645
        %vm2663 = vmpackc.low %vm2646, %vm2646
        %vm2664 = vmpackc.low %vm2647, %vm2647
        %vm2665 = vmpackc.low %vm2648, %vm2648
        %vm2666 = vmpackc.low %vm2649, %vm2649
        %vm2667 = vmpackc.low %vm2650, %vm2650
        %v2668 = vsel %vm2660, %v2652, 0
        %v2669 = vsel %vm2661, %v2653, 0
        %v2670 = vsel %vm2662, %v2654, 0
        %v2671 = vsel %vm2663, %v2655, 0
        %v2672 = vsel %vm2664, %v2656, 0
        %v2673 = vsel %vm2665, %v2657, 0
        %v2674 = vsel %vm2666, %v2658, 0
        %v2675 = vsel %vm2667, %v2659, 0
        %s2676 = scalar_lea.vmem %s2, 448
        %v2677 = vld [vmem:[%s2676] sm:$0xf]
        %v2678 = vld [vmem:[%s2676 + $0x4] sm:$0xf]
        %v2679 = vld [vmem:[%s2676 + $0x8] sm:$0xf]
        %v2680 = vld [vmem:[%s2676 + $0xc] sm:$0xf]
        %v2681 = vld [vmem:[%s2676 + $0x10] sm:$0xf]
        %v2682 = vld [vmem:[%s2676 + $0x14] sm:$0xf]
        %v2683 = vld [vmem:[%s2676 + $0x18] sm:$0xf]
        %v2684 = vld [vmem:[%s2676 + $0x1c] sm:$0xf]
        %v2693 = vunpack.c.l.b16 %v2677
        %v2694 = vunpack.c.l.b16 %v2678
        %v2695 = vunpack.c.l.b16 %v2679
        %v2696 = vunpack.c.l.b16 %v2680
        %v2697 = vunpack.c.l.b16 %v2681
        %v2698 = vunpack.c.l.b16 %v2682
        %v2699 = vunpack.c.l.b16 %v2683
        %v2700 = vunpack.c.l.b16 %v2684
        %v2701 = vpack.c.b16 %v2694, %v2693
        %v2702 = vpack.c.b16 %v2696, %v2695
        %v2703 = vpack.c.b16 %v2698, %v2697
        %v2704 = vpack.c.b16 %v2700, %v2699
        %v2713 = vunpack.c.l.b16 %v2668
        %v2714 = vunpack.c.l.b16 %v2669
        %v2715 = vunpack.c.l.b16 %v2670
        %v2716 = vunpack.c.l.b16 %v2671
        %v2717 = vunpack.c.l.b16 %v2672
        %v2718 = vunpack.c.l.b16 %v2673
        %v2719 = vunpack.c.l.b16 %v2674
        %v2720 = vunpack.c.l.b16 %v2675
        %v2721 = vpack.c.b16 %v2714, %v2713
        %v2722 = vpack.c.b16 %v2716, %v2715
        %v2723 = vpack.c.b16 %v2718, %v2717
        %v2724 = vpack.c.b16 %v2720, %v2719
        %v2730 = vsel %vm334, %v2701, 0
        %v2733 = vsel %vm334, %v2702, 0
        %v2736 = vsel %vm334, %v2703, 0
        %v2739 = vsel %vm334, %v2704, 0
        %2741 = vmatprep.subr.bf16.mxu0 0
        %2742 = vmatpush1.bf16.msra.mxu0 %v2721
        %2743 = vmatprep.subr.bf16.mxu0 0
        %2744 = vmatpush1.bf16.msra.mxu0 %v2722
        %2745 = vmatprep.subr.bf16.mxu0 0
        %2746 = vmatpush1.bf16.msra.mxu0 %v2723
        %2747 = vmatprep.subr.bf16.mxu0 0
        %2748 = vmatpush1.bf16.msra.mxu0 %v2724
        %2749 = vmatprep.subr.bf16.mxu0 0
        %2750 = vmatpush1.bf16.msra.mxu0 0
        %2751 = vmatprep.subr.bf16.mxu0 0
        %2752 = vmatpush1.bf16.msra.mxu0 0
        %2753 = vmatprep.subr.bf16.mxu0 0
        %2754 = vmatpush1.bf16.msra.mxu0 0
        %2755 = vmatprep.subr.bf16.mxu0 0
        %2756 = vmatpush1.bf16.msra.mxu0 0
        %2757 = vmatprep.subr.bf16.mxu0 0
        %2758 = vmatpush1.bf16.msra.mxu0 0
        %2759 = vmatprep.subr.bf16.mxu0 0
        %2760 = vmatpush1.bf16.msra.mxu0 0
        %2761 = vmatprep.subr.bf16.mxu0 0
        %2762 = vmatpush1.bf16.msra.mxu0 0
        %2763 = vmatprep.subr.bf16.mxu0 0
        %2764 = vmatpush1.bf16.msra.mxu0 0
        %2765 = vmatprep.subr.bf16.mxu0 0
        %2766 = vmatpush1.bf16.msra.mxu0 0
        %2767 = vmatprep.subr.bf16.mxu0 0
        %2768 = vmatpush1.bf16.msra.mxu0 0
        %2769 = vmatprep.subr.bf16.mxu0 0
        %2770 = vmatpush1.bf16.msra.mxu0 0
        %2771 = vmatprep.subr.bf16.mxu0 0
        %2772 = vmatpush1.bf16.msra.mxu0 0
        %2773 = vmatprep.mubr.bf16.mxu0 0
        %2774 = vmatmul.mubr.bf16.gmra.mrb[0].mxu0 %v2730
        %v2775 = vpop.f32.mrb[0].mxu0
        %v2776 = vadd.f32 0.0, %v2775
        %v2777 = vpop.f32.mrb[0].mxu0
        %v2778 = vpop.f32.mrb[0].mxu0
        %v2779 = vadd.f32 0.0, %v2778
        %v2780 = vpop.f32.mrb[0].mxu0
        %2781 = vmatprep.mubr.bf16.mxu0 0
        %2782 = vmatmul.mubr.bf16.gmra.mrb[0].mxu0 %v2733
        %v2783 = vpop.f32.mrb[0].mxu0
        %v2784 = vadd.f32 0.0, %v2783
        %v2785 = vpop.f32.mrb[0].mxu0
        %v2786 = vpop.f32.mrb[0].mxu0
        %v2787 = vadd.f32 0.0, %v2786
        %v2788 = vpop.f32.mrb[0].mxu0
        %2789 = vmatprep.mubr.bf16.mxu0 0
        %2790 = vmatmul.mubr.bf16.gmra.mrb[0].mxu0 %v2736
        %v2791 = vpop.f32.mrb[0].mxu0
        %v2792 = vadd.f32 0.0, %v2791
        %v2793 = vpop.f32.mrb[0].mxu0
        %v2794 = vpop.f32.mrb[0].mxu0
        %v2795 = vadd.f32 0.0, %v2794
        %v2796 = vpop.f32.mrb[0].mxu0
        %2797 = vmatprep.mubr.bf16.mxu0 0
        %2798 = vmatmul.mubr.bf16.gmra.mrb[0].mxu0 %v2739
        %v2799 = vpop.f32.mrb[0].mxu0
        %v2800 = vadd.f32 0.0, %v2799
        %v2801 = vpop.f32.mrb[0].mxu0
        %v2802 = vpop.f32.mrb[0].mxu0
        %v2803 = vadd.f32 0.0, %v2802
        %v2804 = vpop.f32.mrb[0].mxu0
        %2805 = vdwg.mxu0
        %2806 = vst [vmem:[#allocation2 + $0x70] sm:$0xff] %v2776
        %2807 = vst [vmem:[#allocation2 + $0x108] sm:$0xff] %v2779
        %2808 = vst [vmem:[#allocation2 + $0x1a0] sm:$0xff] %v2784
        %2809 = vst [vmem:[#allocation2 + $0x238] sm:$0xff] %v2787
        %2810 = vst [vmem:[#allocation2 + $0x2d0] sm:$0xff] %v2792
        %2811 = vst [vmem:[#allocation2 + $0x368] sm:$0xff] %v2795
        %2812 = vst [vmem:[#allocation2 + $0x400] sm:$0xff] %v2800
        %2813 = vst [vmem:[#allocation2 + $0x498] sm:$0xff] %v2803
        %vm2814 = vcmp.eq.s32.totalorder %v242, 16
        %vm2815 = vcmp.eq.s32.totalorder %v243, 16
        %vm2816 = vcmp.eq.s32.totalorder %v244, 16
        %vm2817 = vcmp.eq.s32.totalorder %v245, 16
        %vm2818 = vcmp.eq.s32.totalorder %v246, 16
        %vm2819 = vcmp.eq.s32.totalorder %v247, 16
        %vm2820 = vcmp.eq.s32.totalorder %v248, 16
        %vm2821 = vcmp.eq.s32.totalorder %v249, 16
        %s2822 = scalar_lea.vmem %s215, 480
        %v2823 = vld [vmem:[%s2822] sm:$0xf]
        %v2824 = vld [vmem:[%s2822 + $0x4] sm:$0xf]
        %v2825 = vld [vmem:[%s2822 + $0x8] sm:$0xf]
        %v2826 = vld [vmem:[%s2822 + $0xc] sm:$0xf]
        %v2827 = vld [vmem:[%s2822 + $0x10] sm:$0xf]
        %v2828 = vld [vmem:[%s2822 + $0x14] sm:$0xf]
        %v2829 = vld [vmem:[%s2822 + $0x18] sm:$0xf]
        %v2830 = vld [vmem:[%s2822 + $0x1c] sm:$0xf]
        %vm2831 = vmpackc.low %vm2814, %vm2814
        %vm2832 = vmpackc.low %vm2815, %vm2815
        %vm2833 = vmpackc.low %vm2816, %vm2816
        %vm2834 = vmpackc.low %vm2817, %vm2817
        %vm2835 = vmpackc.low %vm2818, %vm2818
        %vm2836 = vmpackc.low %vm2819, %vm2819
        %vm2837 = vmpackc.low %vm2820, %vm2820
        %vm2838 = vmpackc.low %vm2821, %vm2821
        %v2839 = vsel %vm2831, %v2823, 0
        %v2840 = vsel %vm2832, %v2824, 0
        %v2841 = vsel %vm2833, %v2825, 0
        %v2842 = vsel %vm2834, %v2826, 0
        %v2843 = vsel %vm2835, %v2827, 0
        %v2844 = vsel %vm2836, %v2828, 0
        %v2845 = vsel %vm2837, %v2829, 0
        %v2846 = vsel %vm2838, %v2830, 0
        %s2847 = scalar_lea.vmem %s2, 480
        %v2848 = vld [vmem:[%s2847] sm:$0xf]
        %v2849 = vld [vmem:[%s2847 + $0x4] sm:$0xf]
        %v2850 = vld [vmem:[%s2847 + $0x8] sm:$0xf]
        %v2851 = vld [vmem:[%s2847 + $0xc] sm:$0xf]
        %v2852 = vld [vmem:[%s2847 + $0x10] sm:$0xf]
        %v2853 = vld [vmem:[%s2847 + $0x14] sm:$0xf]
        %v2854 = vld [vmem:[%s2847 + $0x18] sm:$0xf]
        %v2855 = vld [vmem:[%s2847 + $0x1c] sm:$0xf]
        %v2864 = vunpack.c.l.b16 %v2848
        %v2865 = vunpack.c.l.b16 %v2849
        %v2866 = vunpack.c.l.b16 %v2850
        %v2867 = vunpack.c.l.b16 %v2851
        %v2868 = vunpack.c.l.b16 %v2852
        %v2869 = vunpack.c.l.b16 %v2853
        %v2870 = vunpack.c.l.b16 %v2854
        %v2871 = vunpack.c.l.b16 %v2855
        %v2872 = vpack.c.b16 %v2865, %v2864
        %v2873 = vpack.c.b16 %v2867, %v2866
        %v2874 = vpack.c.b16 %v2869, %v2868
        %v2875 = vpack.c.b16 %v2871, %v2870
        %v2884 = vunpack.c.l.b16 %v2839
        %v2885 = vunpack.c.l.b16 %v2840
        %v2886 = vunpack.c.l.b16 %v2841
        %v2887 = vunpack.c.l.b16 %v2842
        %v2888 = vunpack.c.l.b16 %v2843
        %v2889 = vunpack.c.l.b16 %v2844
        %v2890 = vunpack.c.l.b16 %v2845
        %v2891 = vunpack.c.l.b16 %v2846
        %v2892 = vpack.c.b16 %v2885, %v2884
        %v2893 = vpack.c.b16 %v2887, %v2886
        %v2894 = vpack.c.b16 %v2889, %v2888
        %v2895 = vpack.c.b16 %v2891, %v2890
        %v2901 = vsel %vm334, %v2872, 0
        %v2904 = vsel %vm334, %v2873, 0
        %v2907 = vsel %vm334, %v2874, 0
        %v2910 = vsel %vm334, %v2875, 0
        %2912 = vmatprep.subr.bf16.mxu0 0
        %2913 = vmatpush1.bf16.msra.mxu0 %v2892
        %2914 = vmatprep.subr.bf16.mxu0 0
        %2915 = vmatpush1.bf16.msra.mxu0 %v2893
        %2916 = vmatprep.subr.bf16.mxu0 0
        %2917 = vmatpush1.bf16.msra.mxu0 %v2894
        %2918 = vmatprep.subr.bf16.mxu0 0
        %2919 = vmatpush1.bf16.msra.mxu0 %v2895
        %2920 = vmatprep.subr.bf16.mxu0 0
        %2921 = vmatpush1.bf16.msra.mxu0 0
        %2922 = vmatprep.subr.bf16.mxu0 0
        %2923 = vmatpush1.bf16.msra.mxu0 0
        %2924 = vmatprep.subr.bf16.mxu0 0
        %2925 = vmatpush1.bf16.msra.mxu0 0
        %2926 = vmatprep.subr.bf16.mxu0 0
        %2927 = vmatpush1.bf16.msra.mxu0 0
        %2928 = vmatprep.subr.bf16.mxu0 0
        %2929 = vmatpush1.bf16.msra.mxu0 0
        %2930 = vmatprep.subr.bf16.mxu0 0
        %2931 = vmatpush1.bf16.msra.mxu0 0
        %2932 = vmatprep.subr.bf16.mxu0 0
        %2933 = vmatpush1.bf16.msra.mxu0 0
        %2934 = vmatprep.subr.bf16.mxu0 0
        %2935 = vmatpush1.bf16.msra.mxu0 0
        %2936 = vmatprep.subr.bf16.mxu0 0
        %2937 = vmatpush1.bf16.msra.mxu0 0
        %2938 = vmatprep.subr.bf16.mxu0 0
        %2939 = vmatpush1.bf16.msra.mxu0 0
        %2940 = vmatprep.subr.bf16.mxu0 0
        %2941 = vmatpush1.bf16.msra.mxu0 0
        %2942 = vmatprep.subr.bf16.mxu0 0
        %2943 = vmatpush1.bf16.msra.mxu0 0
        %2944 = vmatprep.mubr.bf16.mxu0 0
        %2945 = vmatmul.mubr.bf16.gmra.mrb[0].mxu0 %v2901
        %v2946 = vpop.f32.mrb[0].mxu0
        %v2947 = vadd.f32 0.0, %v2946
        %v2948 = vpop.f32.mrb[0].mxu0
        %v2949 = vpop.f32.mrb[0].mxu0
        %v2950 = vadd.f32 0.0, %v2949
        %v2951 = vpop.f32.mrb[0].mxu0
        %2952 = vmatprep.mubr.bf16.mxu0 0
        %2953 = vmatmul.mubr.bf16.gmra.mrb[0].mxu0 %v2904
        %v2954 = vpop.f32.mrb[0].mxu0
        %v2955 = vadd.f32 0.0, %v2954
        %v2956 = vpop.f32.mrb[0].mxu0
        %v2957 = vpop.f32.mrb[0].mxu0
        %v2958 = vadd.f32 0.0, %v2957
        %v2959 = vpop.f32.mrb[0].mxu0
        %2960 = vmatprep.mubr.bf16.mxu0 0
        %2961 = vmatmul.mubr.bf16.gmra.mrb[0].mxu0 %v2907
        %v2962 = vpop.f32.mrb[0].mxu0
        %v2963 = vadd.f32 0.0, %v2962
        %v2964 = vpop.f32.mrb[0].mxu0
        %v2965 = vpop.f32.mrb[0].mxu0
        %v2966 = vadd.f32 0.0, %v2965
        %v2967 = vpop.f32.mrb[0].mxu0
        %2968 = vmatprep.mubr.bf16.mxu0 0
        %2969 = vmatmul.mubr.bf16.gmra.mrb[0].mxu0 %v2910
        %v2970 = vpop.f32.mrb[0].mxu0
        %v2971 = vadd.f32 0.0, %v2970
        %v2972 = vpop.f32.mrb[0].mxu0
        %v2973 = vpop.f32.mrb[0].mxu0
        %v2974 = vadd.f32 0.0, %v2973
        %v2975 = vpop.f32.mrb[0].mxu0
        %2976 = vdwg.mxu0
        %2977 = vst [vmem:[#allocation2 + $0x78] sm:$0xff] %v2947
        %2978 = vst [vmem:[#allocation2 + $0x110] sm:$0xff] %v2950
        %2979 = vst [vmem:[#allocation2 + $0x1a8] sm:$0xff] %v2955
        %2980 = vst [vmem:[#allocation2 + $0x240] sm:$0xff] %v2958
        %2981 = vst [vmem:[#allocation2 + $0x2d8] sm:$0xff] %v2963
        %2982 = vst [vmem:[#allocation2 + $0x370] sm:$0xff] %v2966
        %2983 = vst [vmem:[#allocation2 + $0x408] sm:$0xff] %v2971
        %2984 = vst [vmem:[#allocation2 + $0x4a0] sm:$0xff] %v2974
        %vm2985 = vcmp.eq.s32.totalorder %v242, 17
        %vm2986 = vcmp.eq.s32.totalorder %v243, 17
        %vm2987 = vcmp.eq.s32.totalorder %v244, 17
        %vm2988 = vcmp.eq.s32.totalorder %v245, 17
        %vm2989 = vcmp.eq.s32.totalorder %v246, 17
        %vm2990 = vcmp.eq.s32.totalorder %v247, 17
        %vm2991 = vcmp.eq.s32.totalorder %v248, 17
        %vm2992 = vcmp.eq.s32.totalorder %v249, 17
        %s2993 = scalar_lea.vmem %s215, 512
        %v2994 = vld [vmem:[%s2993] sm:$0xf]
        %v2995 = vld [vmem:[%s2993 + $0x4] sm:$0xf]
        %v2996 = vld [vmem:[%s2993 + $0x8] sm:$0xf]
        %v2997 = vld [vmem:[%s2993 + $0xc] sm:$0xf]
        %v2998 = vld [vmem:[%s2993 + $0x10] sm:$0xf]
        %v2999 = vld [vmem:[%s2993 + $0x14] sm:$0xf]
        %v3000 = vld [vmem:[%s2993 + $0x18] sm:$0xf]
        %v3001 = vld [vmem:[%s2993 + $0x1c] sm:$0xf]
        %vm3002 = vmpackc.low %vm2985, %vm2985
        %vm3003 = vmpackc.low %vm2986, %vm2986
        %vm3004 = vmpackc.low %vm2987, %vm2987
        %vm3005 = vmpackc.low %vm2988, %vm2988
        %vm3006 = vmpackc.low %vm2989, %vm2989
        %vm3007 = vmpackc.low %vm2990, %vm2990
        %vm3008 = vmpackc.low %vm2991, %vm2991
        %vm3009 = vmpackc.low %vm2992, %vm2992
        %v3010 = vsel %vm3002, %v2994, 0
        %v3011 = vsel %vm3003, %v2995, 0
        %v3012 = vsel %vm3004, %v2996, 0
        %v3013 = vsel %vm3005, %v2997, 0
        %v3014 = vsel %vm3006, %v2998, 0
        %v3015 = vsel %vm3007, %v2999, 0
        %v3016 = vsel %vm3008, %v3000, 0
        %v3017 = vsel %vm3009, %v3001, 0
        %s3018 = scalar_lea.vmem %s2, 512
        %v3019 = vld [vmem:[%s3018] sm:$0xf]
        %v3020 = vld [vmem:[%s3018 + $0x4] sm:$0xf]
        %v3021 = vld [vmem:[%s3018 + $0x8] sm:$0xf]
        %v3022 = vld [vmem:[%s3018 + $0xc] sm:$0xf]
        %v3023 = vld [vmem:[%s3018 + $0x10] sm:$0xf]
        %v3024 = vld [vmem:[%s3018 + $0x14] sm:$0xf]
        %v3025 = vld [vmem:[%s3018 + $0x18] sm:$0xf]
        %v3026 = vld [vmem:[%s3018 + $0x1c] sm:$0xf]
        %v3035 = vunpack.c.l.b16 %v3019
        %v3036 = vunpack.c.l.b16 %v3020
        %v3037 = vunpack.c.l.b16 %v3021
        %v3038 = vunpack.c.l.b16 %v3022
        %v3039 = vunpack.c.l.b16 %v3023
        %v3040 = vunpack.c.l.b16 %v3024
        %v3041 = vunpack.c.l.b16 %v3025
        %v3042 = vunpack.c.l.b16 %v3026
        %v3043 = vpack.c.b16 %v3036, %v3035
        %v3044 = vpack.c.b16 %v3038, %v3037
        %v3045 = vpack.c.b16 %v3040, %v3039
        %v3046 = vpack.c.b16 %v3042, %v3041
        %v3055 = vunpack.c.l.b16 %v3010
        %v3056 = vunpack.c.l.b16 %v3011
        %v3057 = vunpack.c.l.b16 %v3012
        %v3058 = vunpack.c.l.b16 %v3013
        %v3059 = vunpack.c.l.b16 %v3014
        %v3060 = vunpack.c.l.b16 %v3015
        %v3061 = vunpack.c.l.b16 %v3016
        %v3062 = vunpack.c.l.b16 %v3017
        %v3063 = vpack.c.b16 %v3056, %v3055
        %v3064 = vpack.c.b16 %v3058, %v3057
        %v3065 = vpack.c.b16 %v3060, %v3059
        %v3066 = vpack.c.b16 %v3062, %v3061
        %v3072 = vsel %vm334, %v3043, 0
        %v3075 = vsel %vm334, %v3044, 0
        %v3078 = vsel %vm334, %v3045, 0
        %v3081 = vsel %vm334, %v3046, 0
        %3083 = vmatprep.subr.bf16.mxu0 0
        %3084 = vmatpush1.bf16.msra.mxu0 %v3063
        %3085 = vmatprep.subr.bf16.mxu0 0
        %3086 = vmatpush1.bf16.msra.mxu0 %v3064
        %3087 = vmatprep.subr.bf16.mxu0 0
        %3088 = vmatpush1.bf16.msra.mxu0 %v3065
        %3089 = vmatprep.subr.bf16.mxu0 0
        %3090 = vmatpush1.bf16.msra.mxu0 %v3066
        %3091 = vmatprep.subr.bf16.mxu0 0
        %3092 = vmatpush1.bf16.msra.mxu0 0
        %3093 = vmatprep.subr.bf16.mxu0 0
        %3094 = vmatpush1.bf16.msra.mxu0 0
        %3095 = vmatprep.subr.bf16.mxu0 0
        %3096 = vmatpush1.bf16.msra.mxu0 0
        %3097 = vmatprep.subr.bf16.mxu0 0
        %3098 = vmatpush1.bf16.msra.mxu0 0
        %3099 = vmatprep.subr.bf16.mxu0 0
        %3100 = vmatpush1.bf16.msra.mxu0 0
        %3101 = vmatprep.subr.bf16.mxu0 0
        %3102 = vmatpush1.bf16.msra.mxu0 0
        %3103 = vmatprep.subr.bf16.mxu0 0
        %3104 = vmatpush1.bf16.msra.mxu0 0
        %3105 = vmatprep.subr.bf16.mxu0 0
        %3106 = vmatpush1.bf16.msra.mxu0 0
        %3107 = vmatprep.subr.bf16.mxu0 0
        %3108 = vmatpush1.bf16.msra.mxu0 0
        %3109 = vmatprep.subr.bf16.mxu0 0
        %3110 = vmatpush1.bf16.msra.mxu0 0
        %3111 = vmatprep.subr.bf16.mxu0 0
        %3112 = vmatpush1.bf16.msra.mxu0 0
        %3113 = vmatprep.subr.bf16.mxu0 0
        %3114 = vmatpush1.bf16.msra.mxu0 0
        %3115 = vmatprep.mubr.bf16.mxu0 0
        %3116 = vmatmul.mubr.bf16.gmra.mrb[0].mxu0 %v3072
        %v3117 = vpop.f32.mrb[0].mxu0
        %v3118 = vadd.f32 0.0, %v3117
        %v3119 = vpop.f32.mrb[0].mxu0
        %v3120 = vpop.f32.mrb[0].mxu0
        %v3121 = vadd.f32 0.0, %v3120
        %v3122 = vpop.f32.mrb[0].mxu0
        %3123 = vmatprep.mubr.bf16.mxu0 0
        %3124 = vmatmul.mubr.bf16.gmra.mrb[0].mxu0 %v3075
        %v3125 = vpop.f32.mrb[0].mxu0
        %v3126 = vadd.f32 0.0, %v3125
        %v3127 = vpop.f32.mrb[0].mxu0
        %v3128 = vpop.f32.mrb[0].mxu0
        %v3129 = vadd.f32 0.0, %v3128
        %v3130 = vpop.f32.mrb[0].mxu0
        %3131 = vmatprep.mubr.bf16.mxu0 0
        %3132 = vmatmul.mubr.bf16.gmra.mrb[0].mxu0 %v3078
        %v3133 = vpop.f32.mrb[0].mxu0
        %v3134 = vadd.f32 0.0, %v3133
        %v3135 = vpop.f32.mrb[0].mxu0
        %v3136 = vpop.f32.mrb[0].mxu0
        %v3137 = vadd.f32 0.0, %v3136
        %v3138 = vpop.f32.mrb[0].mxu0
        %3139 = vmatprep.mubr.bf16.mxu0 0
        %3140 = vmatmul.mubr.bf16.gmra.mrb[0].mxu0 %v3081
        %v3141 = vpop.f32.mrb[0].mxu0
        %v3142 = vadd.f32 0.0, %v3141
        %v3143 = vpop.f32.mrb[0].mxu0
        %v3144 = vpop.f32.mrb[0].mxu0
        %v3145 = vadd.f32 0.0, %v3144
        %v3146 = vpop.f32.mrb[0].mxu0
        %3147 = vdwg.mxu0
        %3148 = vst [vmem:[#allocation2 + $0x80] sm:$0xff] %v3118
        %3149 = vst [vmem:[#allocation2 + $0x118] sm:$0xff] %v3121
        %3150 = vst [vmem:[#allocation2 + $0x1b0] sm:$0xff] %v3126
        %3151 = vst [vmem:[#allocation2 + $0x248] sm:$0xff] %v3129
        %3152 = vst [vmem:[#allocation2 + $0x2e0] sm:$0xff] %v3134
        %3153 = vst [vmem:[#allocation2 + $0x378] sm:$0xff] %v3137
        %3154 = vst [vmem:[#allocation2 + $0x410] sm:$0xff] %v3142
        %3155 = vst [vmem:[#allocation2 + $0x4a8] sm:$0xff] %v3145
        %vm3156 = vcmp.eq.s32.totalorder %v242, 18
        %vm3157 = vcmp.eq.s32.totalorder %v243, 18
        %vm3158 = vcmp.eq.s32.totalorder %v244, 18
        %vm3159 = vcmp.eq.s32.totalorder %v245, 18
        %vm3160 = vcmp.eq.s32.totalorder %v246, 18
        %vm3161 = vcmp.eq.s32.totalorder %v247, 18
        %vm3162 = vcmp.eq.s32.totalorder %v248, 18
        %vm3163 = vcmp.eq.s32.totalorder %v249, 18
        %s3164 = scalar_lea.vmem %s215, 544
        %v3165 = vld [vmem:[%s3164] sm:$0xf]
        %v3166 = vld [vmem:[%s3164 + $0x4] sm:$0xf]
        %v3167 = vld [vmem:[%s3164 + $0x8] sm:$0xf]
        %v3168 = vld [vmem:[%s3164 + $0xc] sm:$0xf]
        %v3169 = vld [vmem:[%s3164 + $0x10] sm:$0xf]
        %v3170 = vld [vmem:[%s3164 + $0x14] sm:$0xf]
        %v3171 = vld [vmem:[%s3164 + $0x18] sm:$0xf]
        %v3172 = vld [vmem:[%s3164 + $0x1c] sm:$0xf]
        %vm3173 = vmpackc.low %vm3156, %vm3156
        %vm3174 = vmpackc.low %vm3157, %vm3157
        %vm3175 = vmpackc.low %vm3158, %vm3158
        %vm3176 = vmpackc.low %vm3159, %vm3159
        %vm3177 = vmpackc.low %vm3160, %vm3160
        %vm3178 = vmpackc.low %vm3161, %vm3161
        %vm3179 = vmpackc.low %vm3162, %vm3162
        %vm3180 = vmpackc.low %vm3163, %vm3163
        %v3181 = vsel %vm3173, %v3165, 0
        %v3182 = vsel %vm3174, %v3166, 0
        %v3183 = vsel %vm3175, %v3167, 0
        %v3184 = vsel %vm3176, %v3168, 0
        %v3185 = vsel %vm3177, %v3169, 0
        %v3186 = vsel %vm3178, %v3170, 0
        %v3187 = vsel %vm3179, %v3171, 0
        %v3188 = vsel %vm3180, %v3172, 0
        %s3189 = scalar_lea.vmem %s2, 544
        %v3190 = vld [vmem:[%s3189] sm:$0xf]
        %v3191 = vld [vmem:[%s3189 + $0x4] sm:$0xf]
        %v3192 = vld [vmem:[%s3189 + $0x8] sm:$0xf]
        %v3193 = vld [vmem:[%s3189 + $0xc] sm:$0xf]
        %v3194 = vld [vmem:[%s3189 + $0x10] sm:$0xf]
        %v3195 = vld [vmem:[%s3189 + $0x14] sm:$0xf]
        %v3196 = vld [vmem:[%s3189 + $0x18] sm:$0xf]
        %v3197 = vld [vmem:[%s3189 + $0x1c] sm:$0xf]
        %v3206 = vunpack.c.l.b16 %v3190
        %v3207 = vunpack.c.l.b16 %v3191
        %v3208 = vunpack.c.l.b16 %v3192
        %v3209 = vunpack.c.l.b16 %v3193
        %v3210 = vunpack.c.l.b16 %v3194
        %v3211 = vunpack.c.l.b16 %v3195
        %v3212 = vunpack.c.l.b16 %v3196
        %v3213 = vunpack.c.l.b16 %v3197
        %v3214 = vpack.c.b16 %v3207, %v3206
        %v3215 = vpack.c.b16 %v3209, %v3208
        %v3216 = vpack.c.b16 %v3211, %v3210
        %v3217 = vpack.c.b16 %v3213, %v3212
        %v3226 = vunpack.c.l.b16 %v3181
        %v3227 = vunpack.c.l.b16 %v3182
        %v3228 = vunpack.c.l.b16 %v3183
        %v3229 = vunpack.c.l.b16 %v3184
        %v3230 = vunpack.c.l.b16 %v3185
        %v3231 = vunpack.c.l.b16 %v3186
        %v3232 = vunpack.c.l.b16 %v3187
        %v3233 = vunpack.c.l.b16 %v3188
        %v3234 = vpack.c.b16 %v3227, %v3226
        %v3235 = vpack.c.b16 %v3229, %v3228
        %v3236 = vpack.c.b16 %v3231, %v3230
        %v3237 = vpack.c.b16 %v3233, %v3232
        %v3243 = vsel %vm334, %v3214, 0
        %v3246 = vsel %vm334, %v3215, 0
        %v3249 = vsel %vm334, %v3216, 0
        %v3252 = vsel %vm334, %v3217, 0
        %3254 = vmatprep.subr.bf16.mxu0 0
        %3255 = vmatpush1.bf16.msra.mxu0 %v3234
        %3256 = vmatprep.subr.bf16.mxu0 0
        %3257 = vmatpush1.bf16.msra.mxu0 %v3235
        %3258 = vmatprep.subr.bf16.mxu0 0
        %3259 = vmatpush1.bf16.msra.mxu0 %v3236
        %3260 = vmatprep.subr.bf16.mxu0 0
        %3261 = vmatpush1.bf16.msra.mxu0 %v3237
        %3262 = vmatprep.subr.bf16.mxu0 0
        %3263 = vmatpush1.bf16.msra.mxu0 0
        %3264 = vmatprep.subr.bf16.mxu0 0
        %3265 = vmatpush1.bf16.msra.mxu0 0
        %3266 = vmatprep.subr.bf16.mxu0 0
        %3267 = vmatpush1.bf16.msra.mxu0 0
        %3268 = vmatprep.subr.bf16.mxu0 0
        %3269 = vmatpush1.bf16.msra.mxu0 0
        %3270 = vmatprep.subr.bf16.mxu0 0
        %3271 = vmatpush1.bf16.msra.mxu0 0
        %3272 = vmatprep.subr.bf16.mxu0 0
        %3273 = vmatpush1.bf16.msra.mxu0 0
        %3274 = vmatprep.subr.bf16.mxu0 0
        %3275 = vmatpush1.bf16.msra.mxu0 0
        %3276 = vmatprep.subr.bf16.mxu0 0
        %3277 = vmatpush1.bf16.msra.mxu0 0
        %3278 = vmatprep.subr.bf16.mxu0 0
        %3279 = vmatpush1.bf16.msra.mxu0 0
        %3280 = vmatprep.subr.bf16.mxu0 0
        %3281 = vmatpush1.bf16.msra.mxu0 0
        %3282 = vmatprep.subr.bf16.mxu0 0
        %3283 = vmatpush1.bf16.msra.mxu0 0
        %3284 = vmatprep.subr.bf16.mxu0 0
        %3285 = vmatpush1.bf16.msra.mxu0 0
        %3286 = vmatprep.mubr.bf16.mxu0 0
        %3287 = vmatmul.mubr.bf16.gmra.mrb[0].mxu0 %v3243
        %v3288 = vpop.f32.mrb[0].mxu0
        %v3289 = vadd.f32 0.0, %v3288
        %v3290 = vpop.f32.mrb[0].mxu0
        %v3291 = vpop.f32.mrb[0].mxu0
        %v3292 = vadd.f32 0.0, %v3291
        %v3293 = vpop.f32.mrb[0].mxu0
        %3294 = vmatprep.mubr.bf16.mxu0 0
        %3295 = vmatmul.mubr.bf16.gmra.mrb[0].mxu0 %v3246
        %v3296 = vpop.f32.mrb[0].mxu0
        %v3297 = vadd.f32 0.0, %v3296
        %v3298 = vpop.f32.mrb[0].mxu0
        %v3299 = vpop.f32.mrb[0].mxu0
        %v3300 = vadd.f32 0.0, %v3299
        %v3301 = vpop.f32.mrb[0].mxu0
        %3302 = vmatprep.mubr.bf16.mxu0 0
        %3303 = vmatmul.mubr.bf16.gmra.mrb[0].mxu0 %v3249
        %v3304 = vpop.f32.mrb[0].mxu0
        %v3305 = vadd.f32 0.0, %v3304
        %v3306 = vpop.f32.mrb[0].mxu0
        %v3307 = vpop.f32.mrb[0].mxu0
        %v3308 = vadd.f32 0.0, %v3307
        %v3309 = vpop.f32.mrb[0].mxu0
        %3310 = vmatprep.mubr.bf16.mxu0 0
        %3311 = vmatmul.mubr.bf16.gmra.mrb[0].mxu0 %v3252
        %v3312 = vpop.f32.mrb[0].mxu0
        %v3313 = vadd.f32 0.0, %v3312
        %v3314 = vpop.f32.mrb[0].mxu0
        %v3315 = vpop.f32.mrb[0].mxu0
        %v3316 = vadd.f32 0.0, %v3315
        %v3317 = vpop.f32.mrb[0].mxu0
        %3318 = vdwg.mxu0
        %3319 = vst [vmem:[#allocation2 + $0x88] sm:$0xff] %v3289
        %3320 = vst [vmem:[#allocation2 + $0x120] sm:$0xff] %v3292
        %3321 = vst [vmem:[#allocation2 + $0x1b8] sm:$0xff] %v3297
        %3322 = vst [vmem:[#allocation2 + $0x250] sm:$0xff] %v3300
        %3323 = vst [vmem:[#allocation2 + $0x2e8] sm:$0xff] %v3305
        %3324 = vst [vmem:[#allocation2 + $0x380] sm:$0xff] %v3308
        %3325 = vst [vmem:[#allocation2 + $0x418] sm:$0xff] %v3313
        %3326 = vst [vmem:[#allocation2 + $0x4b0] sm:$0xff] %v3316
        %vm3327 = vcmp.eq.s32.totalorder %v242, 19
        %vm3328 = vcmp.eq.s32.totalorder %v243, 19
        %vm3329 = vcmp.eq.s32.totalorder %v244, 19
        %vm3330 = vcmp.eq.s32.totalorder %v245, 19
        %vm3331 = vcmp.eq.s32.totalorder %v246, 19
        %vm3332 = vcmp.eq.s32.totalorder %v247, 19
        %vm3333 = vcmp.eq.s32.totalorder %v248, 19
        %vm3334 = vcmp.eq.s32.totalorder %v249, 19
        %s3335 = scalar_lea.vmem %s215, 576
        %v3336 = vld [vmem:[%s3335] sm:$0xf]
        %v3337 = vld [vmem:[%s3335 + $0x4] sm:$0xf]
        %v3338 = vld [vmem:[%s3335 + $0x8] sm:$0xf]
        %v3339 = vld [vmem:[%s3335 + $0xc] sm:$0xf]
        %v3340 = vld [vmem:[%s3335 + $0x10] sm:$0xf]
        %v3341 = vld [vmem:[%s3335 + $0x14] sm:$0xf]
        %v3342 = vld [vmem:[%s3335 + $0x18] sm:$0xf]
        %v3343 = vld [vmem:[%s3335 + $0x1c] sm:$0xf]
        %vm3344 = vmpackc.low %vm3327, %vm3327
        %vm3345 = vmpackc.low %vm3328, %vm3328
        %vm3346 = vmpackc.low %vm3329, %vm3329
        %vm3347 = vmpackc.low %vm3330, %vm3330
        %vm3348 = vmpackc.low %vm3331, %vm3331
        %vm3349 = vmpackc.low %vm3332, %vm3332
        %vm3350 = vmpackc.low %vm3333, %vm3333
        %vm3351 = vmpackc.low %vm3334, %vm3334
        %v3352 = vsel %vm3344, %v3336, 0
        %v3353 = vsel %vm3345, %v3337, 0
        %v3354 = vsel %vm3346, %v3338, 0
        %v3355 = vsel %vm3347, %v3339, 0
        %v3356 = vsel %vm3348, %v3340, 0
        %v3357 = vsel %vm3349, %v3341, 0
        %v3358 = vsel %vm3350, %v3342, 0
        %v3359 = vsel %vm3351, %v3343, 0
        %s3360 = scalar_lea.vmem %s2, 576
        %v3361 = vld [vmem:[%s3360] sm:$0xf]
        %v3362 = vld [vmem:[%s3360 + $0x4] sm:$0xf]
        %v3363 = vld [vmem:[%s3360 + $0x8] sm:$0xf]
        %v3364 = vld [vmem:[%s3360 + $0xc] sm:$0xf]
        %v3365 = vld [vmem:[%s3360 + $0x10] sm:$0xf]
        %v3366 = vld [vmem:[%s3360 + $0x14] sm:$0xf]
        %v3367 = vld [vmem:[%s3360 + $0x18] sm:$0xf]
        %v3368 = vld [vmem:[%s3360 + $0x1c] sm:$0xf]
        %v3377 = vunpack.c.l.b16 %v3361
        %v3378 = vunpack.c.l.b16 %v3362
        %v3379 = vunpack.c.l.b16 %v3363
        %v3380 = vunpack.c.l.b16 %v3364
        %v3381 = vunpack.c.l.b16 %v3365
        %v3382 = vunpack.c.l.b16 %v3366
        %v3383 = vunpack.c.l.b16 %v3367
        %v3384 = vunpack.c.l.b16 %v3368
        %v3385 = vpack.c.b16 %v3378, %v3377
        %v3386 = vpack.c.b16 %v3380, %v3379
        %v3387 = vpack.c.b16 %v3382, %v3381
        %v3388 = vpack.c.b16 %v3384, %v3383
        %v3397 = vunpack.c.l.b16 %v3352
        %v3398 = vunpack.c.l.b16 %v3353
        %v3399 = vunpack.c.l.b16 %v3354
        %v3400 = vunpack.c.l.b16 %v3355
        %v3401 = vunpack.c.l.b16 %v3356
        %v3402 = vunpack.c.l.b16 %v3357
        %v3403 = vunpack.c.l.b16 %v3358
        %v3404 = vunpack.c.l.b16 %v3359
        %v3405 = vpack.c.b16 %v3398, %v3397
        %v3406 = vpack.c.b16 %v3400, %v3399
        %v3407 = vpack.c.b16 %v3402, %v3401
        %v3408 = vpack.c.b16 %v3404, %v3403
        %v3414 = vsel %vm334, %v3385, 0
        %v3417 = vsel %vm334, %v3386, 0
        %v3420 = vsel %vm334, %v3387, 0
        %v3423 = vsel %vm334, %v3388, 0
        %3425 = vmatprep.subr.bf16.mxu0 0
        %3426 = vmatpush1.bf16.msra.mxu0 %v3405
        %3427 = vmatprep.subr.bf16.mxu0 0
        %3428 = vmatpush1.bf16.msra.mxu0 %v3406
        %3429 = vmatprep.subr.bf16.mxu0 0
        %3430 = vmatpush1.bf16.msra.mxu0 %v3407
        %3431 = vmatprep.subr.bf16.mxu0 0
        %3432 = vmatpush1.bf16.msra.mxu0 %v3408
        %3433 = vmatprep.subr.bf16.mxu0 0
        %3434 = vmatpush1.bf16.msra.mxu0 0
        %3435 = vmatprep.subr.bf16.mxu0 0
        %3436 = vmatpush1.bf16.msra.mxu0 0
        %3437 = vmatprep.subr.bf16.mxu0 0
        %3438 = vmatpush1.bf16.msra.mxu0 0
        %3439 = vmatprep.subr.bf16.mxu0 0
        %3440 = vmatpush1.bf16.msra.mxu0 0
        %3441 = vmatprep.subr.bf16.mxu0 0
        %3442 = vmatpush1.bf16.msra.mxu0 0
        %3443 = vmatprep.subr.bf16.mxu0 0
        %3444 = vmatpush1.bf16.msra.mxu0 0
        %3445 = vmatprep.subr.bf16.mxu0 0
        %3446 = vmatpush1.bf16.msra.mxu0 0
        %3447 = vmatprep.subr.bf16.mxu0 0
        %3448 = vmatpush1.bf16.msra.mxu0 0
        %3449 = vmatprep.subr.bf16.mxu0 0
        %3450 = vmatpush1.bf16.msra.mxu0 0
        %3451 = vmatprep.subr.bf16.mxu0 0
        %3452 = vmatpush1.bf16.msra.mxu0 0
        %3453 = vmatprep.subr.bf16.mxu0 0
        %3454 = vmatpush1.bf16.msra.mxu0 0
        %3455 = vmatprep.subr.bf16.mxu0 0
        %3456 = vmatpush1.bf16.msra.mxu0 0
        %3457 = vmatprep.mubr.bf16.mxu0 0
        %3458 = vmatmul.mubr.bf16.gmra.mrb[0].mxu0 %v3414
        %v3459 = vpop.f32.mrb[0].mxu0
        %v3460 = vadd.f32 0.0, %v3459
        %v3461 = vpop.f32.mrb[0].mxu0
        %v3462 = vpop.f32.mrb[0].mxu0
        %v3463 = vadd.f32 0.0, %v3462
        %v3464 = vpop.f32.mrb[0].mxu0
        %3465 = vmatprep.mubr.bf16.mxu0 0
        %3466 = vmatmul.mubr.bf16.gmra.mrb[0].mxu0 %v3417
        %v3467 = vpop.f32.mrb[0].mxu0
        %v3468 = vadd.f32 0.0, %v3467
        %v3469 = vpop.f32.mrb[0].mxu0
        %v3470 = vpop.f32.mrb[0].mxu0
        %v3471 = vadd.f32 0.0, %v3470
        %v3472 = vpop.f32.mrb[0].mxu0
        %3473 = vmatprep.mubr.bf16.mxu0 0
        %3474 = vmatmul.mubr.bf16.gmra.mrb[0].mxu0 %v3420
        %v3475 = vpop.f32.mrb[0].mxu0
        %v3476 = vadd.f32 0.0, %v3475
        %v3477 = vpop.f32.mrb[0].mxu0
        %v3478 = vpop.f32.mrb[0].mxu0
        %v3479 = vadd.f32 0.0, %v3478
        %v3480 = vpop.f32.mrb[0].mxu0
        %3481 = vmatprep.mubr.bf16.mxu0 0
        %3482 = vmatmul.mubr.bf16.gmra.mrb[0].mxu0 %v3423
        %v3483 = vpop.f32.mrb[0].mxu0
        %v3484 = vadd.f32 0.0, %v3483
        %v3485 = vpop.f32.mrb[0].mxu0
        %v3486 = vpop.f32.mrb[0].mxu0
        %v3487 = vadd.f32 0.0, %v3486
        %v3488 = vpop.f32.mrb[0].mxu0
        %3489 = vdwg.mxu0
        %3490 = vst [vmem:[#allocation2 + $0x90] sm:$0xff] %v3460
        %3491 = vst [vmem:[#allocation2 + $0x128] sm:$0xff] %v3463
        %3492 = vst [vmem:[#allocation2 + $0x1c0] sm:$0xff] %v3468
        %3493 = vst [vmem:[#allocation2 + $0x258] sm:$0xff] %v3471
        %3494 = vst [vmem:[#allocation2 + $0x2f0] sm:$0xff] %v3476
        %3495 = vst [vmem:[#allocation2 + $0x388] sm:$0xff] %v3479
        %3496 = vst [vmem:[#allocation2 + $0x420] sm:$0xff] %v3484
        %3497 = vst [vmem:[#allocation2 + $0x4b8] sm:$0xff] %v3487
        %v3498 = vld [vmem:[#allocation2] sm:$0xff]
        %v3499 = vld [vmem:[#allocation2 + $0x8] sm:$0xff]
        %v3500 = vld [vmem:[#allocation2 + $0x10] sm:$0xff]
        %v3501 = vld [vmem:[#allocation2 + $0x18] sm:$0xff]
        %v3502 = vld [vmem:[#allocation2 + $0x20] sm:$0xff]
        %v3503 = vld [vmem:[#allocation2 + $0x28] sm:$0xff]
        %v3504 = vld [vmem:[#allocation2 + $0x30] sm:$0xff]
        %v3505 = vld [vmem:[#allocation2 + $0x38] sm:$0xff]
        %v3506 = vld [vmem:[#allocation2 + $0x40] sm:$0xff]
        %v3507 = vld [vmem:[#allocation2 + $0x48] sm:$0xff]
        %v3508 = vld [vmem:[#allocation2 + $0x50] sm:$0xff]
        %v3509 = vld [vmem:[#allocation2 + $0x58] sm:$0xff]
        %v3510 = vld [vmem:[#allocation2 + $0x60] sm:$0xff]
        %v3511 = vld [vmem:[#allocation2 + $0x68] sm:$0xff]
        %v3512 = vld [vmem:[#allocation2 + $0x70] sm:$0xff]
        %v3513 = vld [vmem:[#allocation2 + $0x78] sm:$0xff]
        %v3514 = vld [vmem:[#allocation2 + $0x80] sm:$0xff]
        %v3515 = vld [vmem:[#allocation2 + $0x88] sm:$0xff]
        %v3516 = vld [vmem:[#allocation2 + $0x90] sm:$0xff]
        %v3517 = vld [vmem:[#allocation2 + $0x98] sm:$0xff]
        %v3518 = vld [vmem:[#allocation2 + $0xa0] sm:$0xff]
        %v3519 = vld [vmem:[#allocation2 + $0xa8] sm:$0xff]
        %v3520 = vld [vmem:[#allocation2 + $0xb0] sm:$0xff]
        %v3521 = vld [vmem:[#allocation2 + $0xb8] sm:$0xff]
        %v3522 = vld [vmem:[#allocation2 + $0xc0] sm:$0xff]
        %v3523 = vld [vmem:[#allocation2 + $0xc8] sm:$0xff]
        %v3524 = vld [vmem:[#allocation2 + $0xd0] sm:$0xff]
        %v3525 = vld [vmem:[#allocation2 + $0xd8] sm:$0xff]
        %v3526 = vld [vmem:[#allocation2 + $0xe0] sm:$0xff]
        %v3527 = vld [vmem:[#allocation2 + $0xe8] sm:$0xff]
        %v3528 = vld [vmem:[#allocation2 + $0xf0] sm:$0xff]
        %v3529 = vld [vmem:[#allocation2 + $0xf8] sm:$0xff]
        %v3530 = vld [vmem:[#allocation2 + $0x100] sm:$0xff]
        %v3531 = vld [vmem:[#allocation2 + $0x108] sm:$0xff]
        %v3532 = vld [vmem:[#allocation2 + $0x110] sm:$0xff]
        %v3533 = vld [vmem:[#allocation2 + $0x118] sm:$0xff]
        %v3534 = vld [vmem:[#allocation2 + $0x120] sm:$0xff]
        %v3535 = vld [vmem:[#allocation2 + $0x128] sm:$0xff]
        %v3536 = vld [vmem:[#allocation2 + $0x130] sm:$0xff]
        %v3537 = vld [vmem:[#allocation2 + $0x138] sm:$0xff]
        %v3538 = vld [vmem:[#allocation2 + $0x140] sm:$0xff]
        %v3539 = vld [vmem:[#allocation2 + $0x148] sm:$0xff]
        %v3540 = vld [vmem:[#allocation2 + $0x150] sm:$0xff]
        %v3541 = vld [vmem:[#allocation2 + $0x158] sm:$0xff]
        %v3542 = vld [vmem:[#allocation2 + $0x160] sm:$0xff]
        %v3543 = vld [vmem:[#allocation2 + $0x168] sm:$0xff]
        %v3544 = vld [vmem:[#allocation2 + $0x170] sm:$0xff]
        %v3545 = vld [vmem:[#allocation2 + $0x178] sm:$0xff]
        %v3546 = vld [vmem:[#allocation2 + $0x180] sm:$0xff]
        %v3547 = vld [vmem:[#allocation2 + $0x188] sm:$0xff]
        %v3548 = vld [vmem:[#allocation2 + $0x190] sm:$0xff]
        %v3549 = vld [vmem:[#allocation2 + $0x198] sm:$0xff]
        %v3550 = vld [vmem:[#allocation2 + $0x1a0] sm:$0xff]
        %v3551 = vld [vmem:[#allocation2 + $0x1a8] sm:$0xff]
        %v3552 = vld [vmem:[#allocation2 + $0x1b0] sm:$0xff]
        %v3553 = vld [vmem:[#allocation2 + $0x1b8] sm:$0xff]
        %v3554 = vld [vmem:[#allocation2 + $0x1c0] sm:$0xff]
        %v3555 = vld [vmem:[#allocation2 + $0x1c8] sm:$0xff]
        %v3556 = vld [vmem:[#allocation2 + $0x1d0] sm:$0xff]
        %v3557 = vld [vmem:[#allocation2 + $0x1d8] sm:$0xff]
        %v3558 = vld [vmem:[#allocation2 + $0x1e0] sm:$0xff]
        %v3559 = vld [vmem:[#allocation2 + $0x1e8] sm:$0xff]
        %v3560 = vld [vmem:[#allocation2 + $0x1f0] sm:$0xff]
        %v3561 = vld [vmem:[#allocation2 + $0x1f8] sm:$0xff]
        %v3562 = vld [vmem:[#allocation2 + $0x200] sm:$0xff]
        %v3563 = vld [vmem:[#allocation2 + $0x208] sm:$0xff]
        %v3564 = vld [vmem:[#allocation2 + $0x210] sm:$0xff]
        %v3565 = vld [vmem:[#allocation2 + $0x218] sm:$0xff]
        %v3566 = vld [vmem:[#allocation2 + $0x220] sm:$0xff]
        %v3567 = vld [vmem:[#allocation2 + $0x228] sm:$0xff]
        %v3568 = vld [vmem:[#allocation2 + $0x230] sm:$0xff]
        %v3569 = vld [vmem:[#allocation2 + $0x238] sm:$0xff]
        %v3570 = vld [vmem:[#allocation2 + $0x240] sm:$0xff]
        %v3571 = vld [vmem:[#allocation2 + $0x248] sm:$0xff]
        %v3572 = vld [vmem:[#allocation2 + $0x250] sm:$0xff]
        %v3573 = vld [vmem:[#allocation2 + $0x258] sm:$0xff]
        %v3574 = vld [vmem:[#allocation2 + $0x260] sm:$0xff]
        %v3575 = vld [vmem:[#allocation2 + $0x268] sm:$0xff]
        %v3576 = vld [vmem:[#allocation2 + $0x270] sm:$0xff]
        %v3577 = vld [vmem:[#allocation2 + $0x278] sm:$0xff]
        %v3578 = vld [vmem:[#allocation2 + $0x280] sm:$0xff]
        %v3579 = vld [vmem:[#allocation2 + $0x288] sm:$0xff]
        %v3580 = vld [vmem:[#allocation2 + $0x290] sm:$0xff]
        %v3581 = vld [vmem:[#allocation2 + $0x298] sm:$0xff]
        %v3582 = vld [vmem:[#allocation2 + $0x2a0] sm:$0xff]
        %v3583 = vld [vmem:[#allocation2 + $0x2a8] sm:$0xff]
        %v3584 = vld [vmem:[#allocation2 + $0x2b0] sm:$0xff]
        %v3585 = vld [vmem:[#allocation2 + $0x2b8] sm:$0xff]
        %v3586 = vld [vmem:[#allocation2 + $0x2c0] sm:$0xff]
        %v3587 = vld [vmem:[#allocation2 + $0x2c8] sm:$0xff]
        %v3588 = vld [vmem:[#allocation2 + $0x2d0] sm:$0xff]
        %v3589 = vld [vmem:[#allocation2 + $0x2d8] sm:$0xff]
        %v3590 = vld [vmem:[#allocation2 + $0x2e0] sm:$0xff]
        %v3591 = vld [vmem:[#allocation2 + $0x2e8] sm:$0xff]
        %v3592 = vld [vmem:[#allocation2 + $0x2f0] sm:$0xff]
        %v3593 = vld [vmem:[#allocation2 + $0x2f8] sm:$0xff]
        %v3594 = vld [vmem:[#allocation2 + $0x300] sm:$0xff]
        %v3595 = vld [vmem:[#allocation2 + $0x308] sm:$0xff]
        %v3596 = vld [vmem:[#allocation2 + $0x310] sm:$0xff]
        %v3597 = vld [vmem:[#allocation2 + $0x318] sm:$0xff]
        %v3598 = vld [vmem:[#allocation2 + $0x320] sm:$0xff]
        %v3599 = vld [vmem:[#allocation2 + $0x328] sm:$0xff]
        %v3600 = vld [vmem:[#allocation2 + $0x330] sm:$0xff]
        %v3601 = vld [vmem:[#allocation2 + $0x338] sm:$0xff]
        %v3602 = vld [vmem:[#allocation2 + $0x340] sm:$0xff]
        %v3603 = vld [vmem:[#allocation2 + $0x348] sm:$0xff]
        %v3604 = vld [vmem:[#allocation2 + $0x350] sm:$0xff]
        %v3605 = vld [vmem:[#allocation2 + $0x358] sm:$0xff]
        %v3606 = vld [vmem:[#allocation2 + $0x360] sm:$0xff]
        %v3607 = vld [vmem:[#allocation2 + $0x368] sm:$0xff]
        %v3608 = vld [vmem:[#allocation2 + $0x370] sm:$0xff]
        %v3609 = vld [vmem:[#allocation2 + $0x378] sm:$0xff]
        %v3610 = vld [vmem:[#allocation2 + $0x380] sm:$0xff]
        %v3611 = vld [vmem:[#allocation2 + $0x388] sm:$0xff]
        %v3612 = vld [vmem:[#allocation2 + $0x390] sm:$0xff]
        %v3613 = vld [vmem:[#allocation2 + $0x398] sm:$0xff]
        %v3614 = vld [vmem:[#allocation2 + $0x3a0] sm:$0xff]
        %v3615 = vld [vmem:[#allocation2 + $0x3a8] sm:$0xff]
        %v3616 = vld [vmem:[#allocation2 + $0x3b0] sm:$0xff]
        %v3617 = vld [vmem:[#allocation2 + $0x3b8] sm:$0xff]
        %v3618 = vld [vmem:[#allocation2 + $0x3c0] sm:$0xff]
        %v3619 = vld [vmem:[#allocation2 + $0x3c8] sm:$0xff]
        %v3620 = vld [vmem:[#allocation2 + $0x3d0] sm:$0xff]
        %v3621 = vld [vmem:[#allocation2 + $0x3d8] sm:$0xff]
        %v3622 = vld [vmem:[#allocation2 + $0x3e0] sm:$0xff]
        %v3623 = vld [vmem:[#allocation2 + $0x3e8] sm:$0xff]
        %v3624 = vld [vmem:[#allocation2 + $0x3f0] sm:$0xff]
        %v3625 = vld [vmem:[#allocation2 + $0x3f8] sm:$0xff]
        %v3626 = vld [vmem:[#allocation2 + $0x400] sm:$0xff]
        %v3627 = vld [vmem:[#allocation2 + $0x408] sm:$0xff]
        %v3628 = vld [vmem:[#allocation2 + $0x410] sm:$0xff]
        %v3629 = vld [vmem:[#allocation2 + $0x418] sm:$0xff]
        %v3630 = vld [vmem:[#allocation2 + $0x420] sm:$0xff]
        %v3631 = vld [vmem:[#allocation2 + $0x428] sm:$0xff]
        %v3632 = vld [vmem:[#allocation2 + $0x430] sm:$0xff]
        %v3633 = vld [vmem:[#allocation2 + $0x438] sm:$0xff]
        %v3634 = vld [vmem:[#allocation2 + $0x440] sm:$0xff]
        %v3635 = vld [vmem:[#allocation2 + $0x448] sm:$0xff]
        %v3636 = vld [vmem:[#allocation2 + $0x450] sm:$0xff]
        %v3637 = vld [vmem:[#allocation2 + $0x458] sm:$0xff]
        %v3638 = vld [vmem:[#allocation2 + $0x460] sm:$0xff]
        %v3639 = vld [vmem:[#allocation2 + $0x468] sm:$0xff]
        %v3640 = vld [vmem:[#allocation2 + $0x470] sm:$0xff]
        %v3641 = vld [vmem:[#allocation2 + $0x478] sm:$0xff]
        %v3642 = vld [vmem:[#allocation2 + $0x480] sm:$0xff]
        %v3643 = vld [vmem:[#allocation2 + $0x488] sm:$0xff]
        %v3644 = vld [vmem:[#allocation2 + $0x490] sm:$0xff]
        %v3645 = vld [vmem:[#allocation2 + $0x498] sm:$0xff]
        %v3646 = vld [vmem:[#allocation2 + $0x4a0] sm:$0xff]
        %v3647 = vld [vmem:[#allocation2 + $0x4a8] sm:$0xff]
        %v3648 = vld [vmem:[#allocation2 + $0x4b0] sm:$0xff]
        %v3649 = vld [vmem:[#allocation2 + $0x4b8] sm:$0xff]
        %v3650 = vld [vmem:[%s3] sm:$0xff]
        %v3651 = vld [vmem:[%s3 + $0x8] sm:$0xff]
        %v3652 = vld [vmem:[%s3 + $0x10] sm:$0xff]
        %v3653 = vld [vmem:[%s3 + $0x18] sm:$0xff]
        %v3654 = vld [vmem:[%s3 + $0x20] sm:$0xff]
        %v3655 = vld [vmem:[%s3 + $0x28] sm:$0xff]
        %v3656 = vld [vmem:[%s3 + $0x30] sm:$0xff]
        %v3657 = vld [vmem:[%s3 + $0x38] sm:$0xff]
        %v3658 = vld [vmem:[%s3 + $0x40] sm:$0xff]
        %v3659 = vld [vmem:[%s3 + $0x48] sm:$0xff]
        %v3660 = vld [vmem:[%s3 + $0x50] sm:$0xff]
        %v3661 = vld [vmem:[%s3 + $0x58] sm:$0xff]
        %v3662 = vld [vmem:[%s3 + $0x60] sm:$0xff]
        %v3663 = vld [vmem:[%s3 + $0x68] sm:$0xff]
        %v3664 = vld [vmem:[%s3 + $0x70] sm:$0xff]
        %v3665 = vld [vmem:[%s3 + $0x78] sm:$0xff]
        %v3666 = vld [vmem:[%s3 + $0x80] sm:$0xff]
        %v3667 = vld [vmem:[%s3 + $0x88] sm:$0xff]
        %v3668 = vld [vmem:[%s3 + $0x90] sm:$0xff]
        %v3669 = vld [vmem:[%s3 + $0x98] sm:$0xff]
        %v3670 = vld [vmem:[%s3 + $0xa0] sm:$0xff]
        %v3671 = vld [vmem:[%s3 + $0xa8] sm:$0xff]
        %v3672 = vld [vmem:[%s3 + $0xb0] sm:$0xff]
        %v3673 = vld [vmem:[%s3 + $0xb8] sm:$0xff]
        %v3674 = vld [vmem:[%s3 + $0xc0] sm:$0xff]
        %v3675 = vld [vmem:[%s3 + $0xc8] sm:$0xff]
        %v3676 = vld [vmem:[%s3 + $0xd0] sm:$0xff]
        %v3677 = vld [vmem:[%s3 + $0xd8] sm:$0xff]
        %v3678 = vld [vmem:[%s3 + $0xe0] sm:$0xff]
        %v3679 = vld [vmem:[%s3 + $0xe8] sm:$0xff]
        %v3680 = vld [vmem:[%s3 + $0xf0] sm:$0xff]
        %v3681 = vld [vmem:[%s3 + $0xf8] sm:$0xff]
        %v3682 = vld [vmem:[%s3 + $0x100] sm:$0xff]
        %v3683 = vld [vmem:[%s3 + $0x108] sm:$0xff]
        %v3684 = vld [vmem:[%s3 + $0x110] sm:$0xff]
        %v3685 = vld [vmem:[%s3 + $0x118] sm:$0xff]
        %v3686 = vld [vmem:[%s3 + $0x120] sm:$0xff]
        %v3687 = vld [vmem:[%s3 + $0x128] sm:$0xff]
        %v3688 = vld [vmem:[%s3 + $0x130] sm:$0xff]
        %v3689 = vld [vmem:[%s3 + $0x138] sm:$0xff]
        %v3690 = vld [vmem:[%s3 + $0x140] sm:$0xff]
        %v3691 = vld [vmem:[%s3 + $0x148] sm:$0xff]
        %v3692 = vld [vmem:[%s3 + $0x150] sm:$0xff]
        %v3693 = vld [vmem:[%s3 + $0x158] sm:$0xff]
        %v3694 = vld [vmem:[%s3 + $0x160] sm:$0xff]
        %v3695 = vld [vmem:[%s3 + $0x168] sm:$0xff]
        %v3696 = vld [vmem:[%s3 + $0x170] sm:$0xff]
        %v3697 = vld [vmem:[%s3 + $0x178] sm:$0xff]
        %v3698 = vld [vmem:[%s3 + $0x180] sm:$0xff]
        %v3699 = vld [vmem:[%s3 + $0x188] sm:$0xff]
        %v3700 = vld [vmem:[%s3 + $0x190] sm:$0xff]
        %v3701 = vld [vmem:[%s3 + $0x198] sm:$0xff]
        %v3702 = vld [vmem:[%s3 + $0x1a0] sm:$0xff]
        %v3703 = vld [vmem:[%s3 + $0x1a8] sm:$0xff]
        %v3704 = vld [vmem:[%s3 + $0x1b0] sm:$0xff]
        %v3705 = vld [vmem:[%s3 + $0x1b8] sm:$0xff]
        %v3706 = vld [vmem:[%s3 + $0x1c0] sm:$0xff]
        %v3707 = vld [vmem:[%s3 + $0x1c8] sm:$0xff]
        %v3708 = vld [vmem:[%s3 + $0x1d0] sm:$0xff]
        %v3709 = vld [vmem:[%s3 + $0x1d8] sm:$0xff]
        %v3710 = vld [vmem:[%s3 + $0x1e0] sm:$0xff]
        %v3711 = vld [vmem:[%s3 + $0x1e8] sm:$0xff]
        %v3712 = vld [vmem:[%s3 + $0x1f0] sm:$0xff]
        %v3713 = vld [vmem:[%s3 + $0x1f8] sm:$0xff]
        %v3714 = vld [vmem:[%s3 + $0x200] sm:$0xff]
        %v3715 = vld [vmem:[%s3 + $0x208] sm:$0xff]
        %v3716 = vld [vmem:[%s3 + $0x210] sm:$0xff]
        %v3717 = vld [vmem:[%s3 + $0x218] sm:$0xff]
        %v3718 = vld [vmem:[%s3 + $0x220] sm:$0xff]
        %v3719 = vld [vmem:[%s3 + $0x228] sm:$0xff]
        %v3720 = vld [vmem:[%s3 + $0x230] sm:$0xff]
        %v3721 = vld [vmem:[%s3 + $0x238] sm:$0xff]
        %v3722 = vld [vmem:[%s3 + $0x240] sm:$0xff]
        %v3723 = vld [vmem:[%s3 + $0x248] sm:$0xff]
        %v3724 = vld [vmem:[%s3 + $0x250] sm:$0xff]
        %v3725 = vld [vmem:[%s3 + $0x258] sm:$0xff]
        %v3726 = vld [vmem:[%s3 + $0x260] sm:$0xff]
        %v3727 = vld [vmem:[%s3 + $0x268] sm:$0xff]
        %v3728 = vld [vmem:[%s3 + $0x270] sm:$0xff]
        %v3729 = vld [vmem:[%s3 + $0x278] sm:$0xff]
        %v3730 = vld [vmem:[%s3 + $0x280] sm:$0xff]
        %v3731 = vld [vmem:[%s3 + $0x288] sm:$0xff]
        %v3732 = vld [vmem:[%s3 + $0x290] sm:$0xff]
        %v3733 = vld [vmem:[%s3 + $0x298] sm:$0xff]
        %v3734 = vld [vmem:[%s3 + $0x2a0] sm:$0xff]
        %v3735 = vld [vmem:[%s3 + $0x2a8] sm:$0xff]
        %v3736 = vld [vmem:[%s3 + $0x2b0] sm:$0xff]
        %v3737 = vld [vmem:[%s3 + $0x2b8] sm:$0xff]
        %v3738 = vld [vmem:[%s3 + $0x2c0] sm:$0xff]
        %v3739 = vld [vmem:[%s3 + $0x2c8] sm:$0xff]
        %v3740 = vld [vmem:[%s3 + $0x2d0] sm:$0xff]
        %v3741 = vld [vmem:[%s3 + $0x2d8] sm:$0xff]
        %v3742 = vld [vmem:[%s3 + $0x2e0] sm:$0xff]
        %v3743 = vld [vmem:[%s3 + $0x2e8] sm:$0xff]
        %v3744 = vld [vmem:[%s3 + $0x2f0] sm:$0xff]
        %v3745 = vld [vmem:[%s3 + $0x2f8] sm:$0xff]
        %v3746 = vld [vmem:[%s3 + $0x300] sm:$0xff]
        %v3747 = vld [vmem:[%s3 + $0x308] sm:$0xff]
        %v3748 = vld [vmem:[%s3 + $0x310] sm:$0xff]
        %v3749 = vld [vmem:[%s3 + $0x318] sm:$0xff]
        %v3750 = vld [vmem:[%s3 + $0x320] sm:$0xff]
        %v3751 = vld [vmem:[%s3 + $0x328] sm:$0xff]
        %v3752 = vld [vmem:[%s3 + $0x330] sm:$0xff]
        %v3753 = vld [vmem:[%s3 + $0x338] sm:$0xff]
        %v3754 = vld [vmem:[%s3 + $0x340] sm:$0xff]
        %v3755 = vld [vmem:[%s3 + $0x348] sm:$0xff]
        %v3756 = vld [vmem:[%s3 + $0x350] sm:$0xff]
        %v3757 = vld [vmem:[%s3 + $0x358] sm:$0xff]
        %v3758 = vld [vmem:[%s3 + $0x360] sm:$0xff]
        %v3759 = vld [vmem:[%s3 + $0x368] sm:$0xff]
        %v3760 = vld [vmem:[%s3 + $0x370] sm:$0xff]
        %v3761 = vld [vmem:[%s3 + $0x378] sm:$0xff]
        %v3762 = vld [vmem:[%s3 + $0x380] sm:$0xff]
        %v3763 = vld [vmem:[%s3 + $0x388] sm:$0xff]
        %v3764 = vld [vmem:[%s3 + $0x390] sm:$0xff]
        %v3765 = vld [vmem:[%s3 + $0x398] sm:$0xff]
        %v3766 = vld [vmem:[%s3 + $0x3a0] sm:$0xff]
        %v3767 = vld [vmem:[%s3 + $0x3a8] sm:$0xff]
        %v3768 = vld [vmem:[%s3 + $0x3b0] sm:$0xff]
        %v3769 = vld [vmem:[%s3 + $0x3b8] sm:$0xff]
        %v3770 = vld [vmem:[%s3 + $0x3c0] sm:$0xff]
        %v3771 = vld [vmem:[%s3 + $0x3c8] sm:$0xff]
        %v3772 = vld [vmem:[%s3 + $0x3d0] sm:$0xff]
        %v3773 = vld [vmem:[%s3 + $0x3d8] sm:$0xff]
        %v3774 = vld [vmem:[%s3 + $0x3e0] sm:$0xff]
        %v3775 = vld [vmem:[%s3 + $0x3e8] sm:$0xff]
        %v3776 = vld [vmem:[%s3 + $0x3f0] sm:$0xff]
        %v3777 = vld [vmem:[%s3 + $0x3f8] sm:$0xff]
        %v3778 = vld [vmem:[%s3 + $0x400] sm:$0xff]
        %v3779 = vld [vmem:[%s3 + $0x408] sm:$0xff]
        %v3780 = vld [vmem:[%s3 + $0x410] sm:$0xff]
        %v3781 = vld [vmem:[%s3 + $0x418] sm:$0xff]
        %v3782 = vld [vmem:[%s3 + $0x420] sm:$0xff]
        %v3783 = vld [vmem:[%s3 + $0x428] sm:$0xff]
        %v3784 = vld [vmem:[%s3 + $0x430] sm:$0xff]
        %v3785 = vld [vmem:[%s3 + $0x438] sm:$0xff]
        %v3786 = vld [vmem:[%s3 + $0x440] sm:$0xff]
        %v3787 = vld [vmem:[%s3 + $0x448] sm:$0xff]
        %v3788 = vld [vmem:[%s3 + $0x450] sm:$0xff]
        %v3789 = vld [vmem:[%s3 + $0x458] sm:$0xff]
        %v3790 = vld [vmem:[%s3 + $0x460] sm:$0xff]
        %v3791 = vld [vmem:[%s3 + $0x468] sm:$0xff]
        %v3792 = vld [vmem:[%s3 + $0x470] sm:$0xff]
        %v3793 = vld [vmem:[%s3 + $0x478] sm:$0xff]
        %v3794 = vld [vmem:[%s3 + $0x480] sm:$0xff]
        %v3795 = vld [vmem:[%s3 + $0x488] sm:$0xff]
        %v3796 = vld [vmem:[%s3 + $0x490] sm:$0xff]
        %v3797 = vld [vmem:[%s3 + $0x498] sm:$0xff]
        %v3798 = vld [vmem:[%s3 + $0x4a0] sm:$0xff]
        %v3799 = vld [vmem:[%s3 + $0x4a8] sm:$0xff]
        %v3800 = vld [vmem:[%s3 + $0x4b0] sm:$0xff]
        %v3801 = vld [vmem:[%s3 + $0x4b8] sm:$0xff]
        %v3802 = vld [vmem:[%s3 + $0x4c0] sm:$0xff]
        %v3803 = vld [vmem:[%s3 + $0x4c8] sm:$0xff]
        %v3804 = vld [vmem:[%s3 + $0x4d0] sm:$0xff]
        %v3805 = vld [vmem:[%s3 + $0x4d8] sm:$0xff]
        %v3806 = vld [vmem:[%s3 + $0x4e0] sm:$0xff]
        %v3807 = vld [vmem:[%s3 + $0x4e8] sm:$0xff]
        %v3808 = vld [vmem:[%s3 + $0x4f0] sm:$0xff]
        %v3809 = vld [vmem:[%s3 + $0x4f8] sm:$0xff]
        %v3810 = vld [vmem:[%s3 + $0x500] sm:$0xff]
        %v3811 = vld [vmem:[%s3 + $0x508] sm:$0xff]
        %v3812 = vld [vmem:[%s3 + $0x510] sm:$0xff]
        %v3813 = vld [vmem:[%s3 + $0x518] sm:$0xff]
        %v3814 = vld [vmem:[%s3 + $0x520] sm:$0xff]
        %v3815 = vld [vmem:[%s3 + $0x528] sm:$0xff]
        %v3816 = vld [vmem:[%s3 + $0x530] sm:$0xff]
        %v3817 = vld [vmem:[%s3 + $0x538] sm:$0xff]
        %v3818 = vld [vmem:[%s3 + $0x540] sm:$0xff]
        %v3819 = vld [vmem:[%s3 + $0x548] sm:$0xff]
        %v3820 = vld [vmem:[%s3 + $0x550] sm:$0xff]
        %v3821 = vld [vmem:[%s3 + $0x558] sm:$0xff]
        %v3822 = vld [vmem:[%s3 + $0x560] sm:$0xff]
        %v3823 = vld [vmem:[%s3 + $0x568] sm:$0xff]
        %v3824 = vld [vmem:[%s3 + $0x570] sm:$0xff]
        %v3825 = vld [vmem:[%s3 + $0x578] sm:$0xff]
        %v3826 = vld [vmem:[%s3 + $0x580] sm:$0xff]
        %v3827 = vld [vmem:[%s3 + $0x588] sm:$0xff]
        %v3828 = vld [vmem:[%s3 + $0x590] sm:$0xff]
        %v3829 = vld [vmem:[%s3 + $0x598] sm:$0xff]
        %v3830 = vld [vmem:[%s3 + $0x5a0] sm:$0xff]
        %v3831 = vld [vmem:[%s3 + $0x5a8] sm:$0xff]
        %v3832 = vld [vmem:[%s3 + $0x5b0] sm:$0xff]
        %v3833 = vld [vmem:[%s3 + $0x5b8] sm:$0xff]
        %v3834 = vld [vmem:[%s3 + $0x5c0] sm:$0xff]
        %v3835 = vld [vmem:[%s3 + $0x5c8] sm:$0xff]
        %v3836 = vld [vmem:[%s3 + $0x5d0] sm:$0xff]
        %v3837 = vld [vmem:[%s3 + $0x5d8] sm:$0xff]
        %v3838 = vld [vmem:[%s3 + $0x5e0] sm:$0xff]
        %v3839 = vld [vmem:[%s3 + $0x5e8] sm:$0xff]
        %v3840 = vld [vmem:[%s3 + $0x5f0] sm:$0xff]
        %v3841 = vld [vmem:[%s3 + $0x5f8] sm:$0xff]
        %v3842 = vld [vmem:[%s3 + $0x600] sm:$0xff]
        %v3843 = vld [vmem:[%s3 + $0x608] sm:$0xff]
        %v3844 = vld [vmem:[%s3 + $0x610] sm:$0xff]
        %v3845 = vld [vmem:[%s3 + $0x618] sm:$0xff]
        %v3846 = vld [vmem:[%s3 + $0x620] sm:$0xff]
        %v3847 = vld [vmem:[%s3 + $0x628] sm:$0xff]
        %v3848 = vld [vmem:[%s3 + $0x630] sm:$0xff]
        %v3849 = vld [vmem:[%s3 + $0x638] sm:$0xff]
        %v3850 = vld [vmem:[%s3 + $0x640] sm:$0xff]
        %v3851 = vld [vmem:[%s3 + $0x648] sm:$0xff]
        %v3852 = vld [vmem:[%s3 + $0x650] sm:$0xff]
        %v3853 = vld [vmem:[%s3 + $0x658] sm:$0xff]
        %v3854 = vld [vmem:[%s3 + $0x660] sm:$0xff]
        %v3855 = vld [vmem:[%s3 + $0x668] sm:$0xff]
        %v3856 = vld [vmem:[%s3 + $0x670] sm:$0xff]
        %v3857 = vld [vmem:[%s3 + $0x678] sm:$0xff]
        %v3858 = vld [vmem:[%s3 + $0x680] sm:$0xff]
        %v3859 = vld [vmem:[%s3 + $0x688] sm:$0xff]
        %v3860 = vld [vmem:[%s3 + $0x690] sm:$0xff]
        %v3861 = vld [vmem:[%s3 + $0x698] sm:$0xff]
        %v3862 = vld [vmem:[%s3 + $0x6a0] sm:$0xff]
        %v3863 = vld [vmem:[%s3 + $0x6a8] sm:$0xff]
        %v3864 = vld [vmem:[%s3 + $0x6b0] sm:$0xff]
        %v3865 = vld [vmem:[%s3 + $0x6b8] sm:$0xff]
        %v3866 = vld [vmem:[%s3 + $0x6c0] sm:$0xff]
        %v3867 = vld [vmem:[%s3 + $0x6c8] sm:$0xff]
        %v3868 = vld [vmem:[%s3 + $0x6d0] sm:$0xff]
        %v3869 = vld [vmem:[%s3 + $0x6d8] sm:$0xff]
        %v3870 = vld [vmem:[%s3 + $0x6e0] sm:$0xff]
        %v3871 = vld [vmem:[%s3 + $0x6e8] sm:$0xff]
        %v3872 = vld [vmem:[%s3 + $0x6f0] sm:$0xff]
        %v3873 = vld [vmem:[%s3 + $0x6f8] sm:$0xff]
        %v3874 = vld [vmem:[%s3 + $0x700] sm:$0xff]
        %v3875 = vld [vmem:[%s3 + $0x708] sm:$0xff]
        %v3876 = vld [vmem:[%s3 + $0x710] sm:$0xff]
        %v3877 = vld [vmem:[%s3 + $0x718] sm:$0xff]
        %v3878 = vld [vmem:[%s3 + $0x720] sm:$0xff]
        %v3879 = vld [vmem:[%s3 + $0x728] sm:$0xff]
        %v3880 = vld [vmem:[%s3 + $0x730] sm:$0xff]
        %v3881 = vld [vmem:[%s3 + $0x738] sm:$0xff]
        %v3882 = vld [vmem:[%s3 + $0x740] sm:$0xff]
        %v3883 = vld [vmem:[%s3 + $0x748] sm:$0xff]
        %v3884 = vld [vmem:[%s3 + $0x750] sm:$0xff]
        %v3885 = vld [vmem:[%s3 + $0x758] sm:$0xff]
        %v3886 = vld [vmem:[%s3 + $0x760] sm:$0xff]
        %v3887 = vld [vmem:[%s3 + $0x768] sm:$0xff]
        %v3888 = vld [vmem:[%s3 + $0x770] sm:$0xff]
        %v3889 = vld [vmem:[%s3 + $0x778] sm:$0xff]
        %v3890 = vld [vmem:[%s3 + $0x780] sm:$0xff]
        %v3891 = vld [vmem:[%s3 + $0x788] sm:$0xff]
        %v3892 = vld [vmem:[%s3 + $0x790] sm:$0xff]
        %v3893 = vld [vmem:[%s3 + $0x798] sm:$0xff]
        %v3894 = vld [vmem:[%s3 + $0x7a0] sm:$0xff]
        %v3895 = vld [vmem:[%s3 + $0x7a8] sm:$0xff]
        %v3896 = vld [vmem:[%s3 + $0x7b0] sm:$0xff]
        %v3897 = vld [vmem:[%s3 + $0x7b8] sm:$0xff]
        %v3898 = vld [vmem:[%s3 + $0x7c0] sm:$0xff]
        %v3899 = vld [vmem:[%s3 + $0x7c8] sm:$0xff]
        %v3900 = vld [vmem:[%s3 + $0x7d0] sm:$0xff]
        %v3901 = vld [vmem:[%s3 + $0x7d8] sm:$0xff]
        %v3902 = vld [vmem:[%s3 + $0x7e0] sm:$0xff]
        %v3903 = vld [vmem:[%s3 + $0x7e8] sm:$0xff]
        %v3904 = vld [vmem:[%s3 + $0x7f0] sm:$0xff]
        %v3905 = vld [vmem:[%s3 + $0x7f8] sm:$0xff]
        %v3906 = vld [vmem:[%s3 + $0x800] sm:$0xff]
        %v3907 = vld [vmem:[%s3 + $0x808] sm:$0xff]
        %v3908 = vld [vmem:[%s3 + $0x810] sm:$0xff]
        %v3909 = vld [vmem:[%s3 + $0x818] sm:$0xff]
        %v3910 = vld [vmem:[%s3 + $0x820] sm:$0xff]
        %v3911 = vld [vmem:[%s3 + $0x828] sm:$0xff]
        %v3912 = vld [vmem:[%s3 + $0x830] sm:$0xff]
        %v3913 = vld [vmem:[%s3 + $0x838] sm:$0xff]
        %v3914 = vld [vmem:[%s3 + $0x840] sm:$0xff]
        %v3915 = vld [vmem:[%s3 + $0x848] sm:$0xff]
        %v3916 = vld [vmem:[%s3 + $0x850] sm:$0xff]
        %v3917 = vld [vmem:[%s3 + $0x858] sm:$0xff]
        %v3918 = vld [vmem:[%s3 + $0x860] sm:$0xff]
        %v3919 = vld [vmem:[%s3 + $0x868] sm:$0xff]
        %v3920 = vld [vmem:[%s3 + $0x870] sm:$0xff]
        %v3921 = vld [vmem:[%s3 + $0x878] sm:$0xff]
        %v3922 = vld [vmem:[%s3 + $0x880] sm:$0xff]
        %v3923 = vld [vmem:[%s3 + $0x888] sm:$0xff]
        %v3924 = vld [vmem:[%s3 + $0x890] sm:$0xff]
        %v3925 = vld [vmem:[%s3 + $0x898] sm:$0xff]
        %v3926 = vld [vmem:[%s3 + $0x8a0] sm:$0xff]
        %v3927 = vld [vmem:[%s3 + $0x8a8] sm:$0xff]
        %v3928 = vld [vmem:[%s3 + $0x8b0] sm:$0xff]
        %v3929 = vld [vmem:[%s3 + $0x8b8] sm:$0xff]
        %v3930 = vld [vmem:[%s3 + $0x8c0] sm:$0xff]
        %v3931 = vld [vmem:[%s3 + $0x8c8] sm:$0xff]
        %v3932 = vld [vmem:[%s3 + $0x8d0] sm:$0xff]
        %v3933 = vld [vmem:[%s3 + $0x8d8] sm:$0xff]
        %v3934 = vld [vmem:[%s3 + $0x8e0] sm:$0xff]
        %v3935 = vld [vmem:[%s3 + $0x8e8] sm:$0xff]
        %v3936 = vld [vmem:[%s3 + $0x8f0] sm:$0xff]
        %v3937 = vld [vmem:[%s3 + $0x8f8] sm:$0xff]
        %v3938 = vld [vmem:[%s3 + $0x900] sm:$0xff]
        %v3939 = vld [vmem:[%s3 + $0x908] sm:$0xff]
        %v3940 = vld [vmem:[%s3 + $0x910] sm:$0xff]
        %v3941 = vld [vmem:[%s3 + $0x918] sm:$0xff]
        %v3942 = vld [vmem:[%s3 + $0x920] sm:$0xff]
        %v3943 = vld [vmem:[%s3 + $0x928] sm:$0xff]
        %v3944 = vld [vmem:[%s3 + $0x930] sm:$0xff]
        %v3945 = vld [vmem:[%s3 + $0x938] sm:$0xff]
        %v3946 = vld [vmem:[%s3 + $0x940] sm:$0xff]
        %v3947 = vld [vmem:[%s3 + $0x948] sm:$0xff]
        %v3948 = vld [vmem:[%s3 + $0x950] sm:$0xff]
        %v3949 = vld [vmem:[%s3 + $0x958] sm:$0xff]
        %v3950 = vld [vmem:[%s3 + $0x960] sm:$0xff]
        %v3951 = vld [vmem:[%s3 + $0x968] sm:$0xff]
        %v3952 = vld [vmem:[%s3 + $0x970] sm:$0xff]
        %v3953 = vld [vmem:[%s3 + $0x978] sm:$0xff]
        %3954 = vmatprep.subr.mxu0 0.0
        %3955 = vmatpush1.msra.mxu0 %v3650
        %3956 = vmatprep.subr.mxu0 0.0
        %3957 = vmatpush1.msra.mxu0 %v3651
        %3958 = vmatprep.subr.mxu0 0.0
        %3959 = vmatpush1.msra.mxu0 %v3652
        %3960 = vmatprep.subr.mxu0 0.0
        %3961 = vmatpush1.msra.mxu0 %v3653
        %3962 = vmatprep.subr.mxu0 0.0
        %3963 = vmatpush1.msra.mxu0 %v3654
        %3964 = vmatprep.subr.mxu0 0.0
        %3965 = vmatpush1.msra.mxu0 %v3655
        %3966 = vmatprep.subr.mxu0 0.0
        %3967 = vmatpush1.msra.mxu0 %v3656
        %3968 = vmatprep.subr.mxu0 0.0
        %3969 = vmatpush1.msra.mxu0 %v3657
        %3970 = vmatprep.subr.mxu0 0.0
        %3971 = vmatpush1.msra.mxu0 %v3658
        %3972 = vmatprep.subr.mxu0 0.0
        %3973 = vmatpush1.msra.mxu0 %v3659
        %3974 = vmatprep.subr.mxu0 0.0
        %3975 = vmatpush1.msra.mxu0 %v3660
        %3976 = vmatprep.subr.mxu0 0.0
        %3977 = vmatpush1.msra.mxu0 %v3661
        %3978 = vmatprep.subr.mxu0 0.0
        %3979 = vmatpush1.msra.mxu0 %v3662
        %3980 = vmatprep.subr.mxu0 0.0
        %3981 = vmatpush1.msra.mxu0 %v3663
        %3982 = vmatprep.subr.mxu0 0.0
        %3983 = vmatpush1.msra.mxu0 %v3664
        %3984 = vmatprep.subr.mxu0 0.0
        %3985 = vmatpush1.msra.mxu0 %v3665
        %3986 = vmatprep.subr.mxu0 0.0
        %3987 = vmatpush1.msra.mxu0 %v3666
        %3988 = vmatprep.subr.mxu0 0.0
        %3989 = vmatpush1.msra.mxu0 %v3667
        %3990 = vmatprep.subr.mxu0 0.0
        %3991 = vmatpush1.msra.mxu0 %v3668
        %3992 = vmatprep.subr.mxu0 0.0
        %3993 = vmatpush1.msra.mxu0 %v3669
        %3994 = vmatprep.subr.mxu0 0.0
        %3995 = vmatpush1.msra.mxu0 %v3670
        %3996 = vmatprep.subr.mxu0 0.0
        %3997 = vmatpush1.msra.mxu0 %v3671
        %3998 = vmatprep.subr.mxu0 0.0
        %3999 = vmatpush1.msra.mxu0 %v3672
        %4000 = vmatprep.subr.mxu0 0.0
        %4001 = vmatpush1.msra.mxu0 %v3673
        %4002 = vmatprep.subr.mxu0 0.0
        %4003 = vmatpush1.msra.mxu0 %v3674
        %4004 = vmatprep.subr.mxu0 0.0
        %4005 = vmatpush1.msra.mxu0 %v3675
        %4006 = vmatprep.subr.mxu0 0.0
        %4007 = vmatpush1.msra.mxu0 %v3676
        %4008 = vmatprep.subr.mxu0 0.0
        %4009 = vmatpush1.msra.mxu0 %v3677
        %4010 = vmatprep.subr.mxu0 0.0
        %4011 = vmatpush1.msra.mxu0 %v3678
        %4012 = vmatprep.subr.mxu0 0.0
        %4013 = vmatpush1.msra.mxu0 %v3679
        %4014 = vmatprep.subr.mxu0 0.0
        %4015 = vmatpush1.msra.mxu0 %v3680
        %4016 = vmatprep.subr.mxu0 0.0
        %4017 = vmatpush1.msra.mxu0 %v3681
        %4018 = vmatprep.mubr.f32.mxu0 %v3499
        %4019 = vmatmul.mubr.f32.gmra.mrb[0].mxu0 %v3498
        %v4020 = vpop.f32.mrb[0].mxu0
        %v4021 = vadd.f32 0.0, %v4020
        %v4022 = vpop.f32.mrb[0].mxu0
        %4023 = vmatprep.mubr.f32.mxu0 %v3518
        %4024 = vmatmul.mubr.f32.gmra.mrb[0].mxu0 %v3517
        %v4025 = vpop.f32.mrb[0].mxu0
        %v4026 = vadd.f32 0.0, %v4025
        %v4027 = vpop.f32.mrb[0].mxu0
        %4028 = vmatprep.mubr.f32.mxu0 %v3537
        %4029 = vmatmul.mubr.f32.gmra.mrb[0].mxu0 %v3536
        %v4030 = vpop.f32.mrb[0].mxu0
        %v4031 = vadd.f32 0.0, %v4030
        %v4032 = vpop.f32.mrb[0].mxu0
        %4033 = vmatprep.mubr.f32.mxu0 %v3556
        %4034 = vmatmul.mubr.f32.gmra.mrb[0].mxu0 %v3555
        %v4035 = vpop.f32.mrb[0].mxu0
        %v4036 = vadd.f32 0.0, %v4035
        %v4037 = vpop.f32.mrb[0].mxu0
        %4038 = vmatprep.mubr.f32.mxu0 %v3575
        %4039 = vmatmul.mubr.f32.gmra.mrb[0].mxu0 %v3574
        %v4040 = vpop.f32.mrb[0].mxu0
        %v4041 = vadd.f32 0.0, %v4040
        %v4042 = vpop.f32.mrb[0].mxu0
        %4043 = vmatprep.mubr.f32.mxu0 %v3594
        %4044 = vmatmul.mubr.f32.gmra.mrb[0].mxu0 %v3593
        %v4045 = vpop.f32.mrb[0].mxu0
        %v4046 = vadd.f32 0.0, %v4045
        %v4047 = vpop.f32.mrb[0].mxu0
        %4048 = vmatprep.mubr.f32.mxu0 %v3613
        %4049 = vmatmul.mubr.f32.gmra.mrb[0].mxu0 %v3612
        %v4050 = vpop.f32.mrb[0].mxu0
        %v4051 = vadd.f32 0.0, %v4050
        %v4052 = vpop.f32.mrb[0].mxu0
        %4053 = vmatprep.mubr.f32.mxu0 %v3632
        %4054 = vmatmul.mubr.f32.gmra.mrb[0].mxu0 %v3631
        %v4055 = vpop.f32.mrb[0].mxu0
        %v4056 = vadd.f32 0.0, %v4055
        %v4057 = vpop.f32.mrb[0].mxu0
        %4058 = vdwg.mxu0
        %4059 = vmatprep.subr.mxu0 0.0
        %4060 = vmatpush1.msra.mxu0 %v3682
        %4061 = vmatprep.subr.mxu0 0.0
        %4062 = vmatpush1.msra.mxu0 %v3683
        %4063 = vmatprep.subr.mxu0 0.0
        %4064 = vmatpush1.msra.mxu0 %v3684
        %4065 = vmatprep.subr.mxu0 0.0
        %4066 = vmatpush1.msra.mxu0 %v3685
        %4067 = vmatprep.subr.mxu0 0.0
        %4068 = vmatpush1.msra.mxu0 %v3686
        %4069 = vmatprep.subr.mxu0 0.0
        %4070 = vmatpush1.msra.mxu0 %v3687
        %4071 = vmatprep.subr.mxu0 0.0
        %4072 = vmatpush1.msra.mxu0 %v3688
        %4073 = vmatprep.subr.mxu0 0.0
        %4074 = vmatpush1.msra.mxu0 %v3689
        %4075 = vmatprep.subr.mxu0 0.0
        %4076 = vmatpush1.msra.mxu0 %v3690
        %4077 = vmatprep.subr.mxu0 0.0
        %4078 = vmatpush1.msra.mxu0 %v3691
        %4079 = vmatprep.subr.mxu0 0.0
        %4080 = vmatpush1.msra.mxu0 %v3692
        %4081 = vmatprep.subr.mxu0 0.0
        %4082 = vmatpush1.msra.mxu0 %v3693
        %4083 = vmatprep.subr.mxu0 0.0
        %4084 = vmatpush1.msra.mxu0 %v3694
        %4085 = vmatprep.subr.mxu0 0.0
        %4086 = vmatpush1.msra.mxu0 %v3695
        %4087 = vmatprep.subr.mxu0 0.0
        %4088 = vmatpush1.msra.mxu0 %v3696
        %4089 = vmatprep.subr.mxu0 0.0
        %4090 = vmatpush1.msra.mxu0 %v3697
        %4091 = vmatprep.subr.mxu0 0.0
        %4092 = vmatpush1.msra.mxu0 %v3698
        %4093 = vmatprep.subr.mxu0 0.0
        %4094 = vmatpush1.msra.mxu0 %v3699
        %4095 = vmatprep.subr.mxu0 0.0
        %4096 = vmatpush1.msra.mxu0 %v3700
        %4097 = vmatprep.subr.mxu0 0.0
        %4098 = vmatpush1.msra.mxu0 %v3701
        %4099 = vmatprep.subr.mxu0 0.0
        %4100 = vmatpush1.msra.mxu0 %v3702
        %4101 = vmatprep.subr.mxu0 0.0
        %4102 = vmatpush1.msra.mxu0 %v3703
        %4103 = vmatprep.subr.mxu0 0.0
        %4104 = vmatpush1.msra.mxu0 %v3704
        %4105 = vmatprep.subr.mxu0 0.0
        %4106 = vmatpush1.msra.mxu0 %v3705
        %4107 = vmatprep.subr.mxu0 0.0
        %4108 = vmatpush1.msra.mxu0 %v3706
        %4109 = vmatprep.subr.mxu0 0.0
        %4110 = vmatpush1.msra.mxu0 %v3707
        %4111 = vmatprep.subr.mxu0 0.0
        %4112 = vmatpush1.msra.mxu0 %v3708
        %4113 = vmatprep.subr.mxu0 0.0
        %4114 = vmatpush1.msra.mxu0 %v3709
        %4115 = vmatprep.subr.mxu0 0.0
        %4116 = vmatpush1.msra.mxu0 %v3710
        %4117 = vmatprep.subr.mxu0 0.0
        %4118 = vmatpush1.msra.mxu0 %v3711
        %4119 = vmatprep.subr.mxu0 0.0
        %4120 = vmatpush1.msra.mxu0 %v3712
        %4121 = vmatprep.subr.mxu0 0.0
        %4122 = vmatpush1.msra.mxu0 %v3713
        %4123 = vmatprep.mubr.f32.mxu0 %v3501
        %4124 = vmatmul.mubr.f32.gmra.mrb[0].mxu0 %v3500
        %v4125 = vpop.f32.mrb[0].mxu0
        %v4126 = vadd.f32 %v4021, %v4125
        %v4127 = vpop.f32.mrb[0].mxu0
        %4128 = vmatprep.mubr.f32.mxu0 %v3520
        %4129 = vmatmul.mubr.f32.gmra.mrb[0].mxu0 %v3519
        %v4130 = vpop.f32.mrb[0].mxu0
        %v4131 = vadd.f32 %v4026, %v4130
        %v4132 = vpop.f32.mrb[0].mxu0
        %4133 = vmatprep.mubr.f32.mxu0 %v3539
        %4134 = vmatmul.mubr.f32.gmra.mrb[0].mxu0 %v3538
        %v4135 = vpop.f32.mrb[0].mxu0
        %v4136 = vadd.f32 %v4031, %v4135
        %v4137 = vpop.f32.mrb[0].mxu0
        %4138 = vmatprep.mubr.f32.mxu0 %v3558
        %4139 = vmatmul.mubr.f32.gmra.mrb[0].mxu0 %v3557
        %v4140 = vpop.f32.mrb[0].mxu0
        %v4141 = vadd.f32 %v4036, %v4140
        %v4142 = vpop.f32.mrb[0].mxu0
        %4143 = vmatprep.mubr.f32.mxu0 %v3577
        %4144 = vmatmul.mubr.f32.gmra.mrb[0].mxu0 %v3576
        %v4145 = vpop.f32.mrb[0].mxu0
        %v4146 = vadd.f32 %v4041, %v4145
        %v4147 = vpop.f32.mrb[0].mxu0
        %4148 = vmatprep.mubr.f32.mxu0 %v3596
        %4149 = vmatmul.mubr.f32.gmra.mrb[0].mxu0 %v3595
        %v4150 = vpop.f32.mrb[0].mxu0
        %v4151 = vadd.f32 %v4046, %v4150
        %v4152 = vpop.f32.mrb[0].mxu0
        %4153 = vmatprep.mubr.f32.mxu0 %v3615
        %4154 = vmatmul.mubr.f32.gmra.mrb[0].mxu0 %v3614
        %v4155 = vpop.f32.mrb[0].mxu0
        %v4156 = vadd.f32 %v4051, %v4155
        %v4157 = vpop.f32.mrb[0].mxu0
        %4158 = vmatprep.mubr.f32.mxu0 %v3634
        %4159 = vmatmul.mubr.f32.gmra.mrb[0].mxu0 %v3633
        %v4160 = vpop.f32.mrb[0].mxu0
        %v4161 = vadd.f32 %v4056, %v4160
        %v4162 = vpop.f32.mrb[0].mxu0
        %4163 = vdwg.mxu0
        %4164 = vmatprep.subr.mxu0 0.0
        %4165 = vmatpush1.msra.mxu0 %v3714
        %4166 = vmatprep.subr.mxu0 0.0
        %4167 = vmatpush1.msra.mxu0 %v3715
        %4168 = vmatprep.subr.mxu0 0.0
        %4169 = vmatpush1.msra.mxu0 %v3716
        %4170 = vmatprep.subr.mxu0 0.0
        %4171 = vmatpush1.msra.mxu0 %v3717
        %4172 = vmatprep.subr.mxu0 0.0
        %4173 = vmatpush1.msra.mxu0 %v3718
        %4174 = vmatprep.subr.mxu0 0.0
        %4175 = vmatpush1.msra.mxu0 %v3719
        %4176 = vmatprep.subr.mxu0 0.0
        %4177 = vmatpush1.msra.mxu0 %v3720
        %4178 = vmatprep.subr.mxu0 0.0
        %4179 = vmatpush1.msra.mxu0 %v3721
        %4180 = vmatprep.subr.mxu0 0.0
        %4181 = vmatpush1.msra.mxu0 %v3722
        %4182 = vmatprep.subr.mxu0 0.0
        %4183 = vmatpush1.msra.mxu0 %v3723
        %4184 = vmatprep.subr.mxu0 0.0
        %4185 = vmatpush1.msra.mxu0 %v3724
        %4186 = vmatprep.subr.mxu0 0.0
        %4187 = vmatpush1.msra.mxu0 %v3725
        %4188 = vmatprep.subr.mxu0 0.0
        %4189 = vmatpush1.msra.mxu0 %v3726
        %4190 = vmatprep.subr.mxu0 0.0
        %4191 = vmatpush1.msra.mxu0 %v3727
        %4192 = vmatprep.subr.mxu0 0.0
        %4193 = vmatpush1.msra.mxu0 %v3728
        %4194 = vmatprep.subr.mxu0 0.0
        %4195 = vmatpush1.msra.mxu0 %v3729
        %4196 = vmatprep.subr.mxu0 0.0
        %4197 = vmatpush1.msra.mxu0 %v3730
        %4198 = vmatprep.subr.mxu0 0.0
        %4199 = vmatpush1.msra.mxu0 %v3731
        %4200 = vmatprep.subr.mxu0 0.0
        %4201 = vmatpush1.msra.mxu0 %v3732
        %4202 = vmatprep.subr.mxu0 0.0
        %4203 = vmatpush1.msra.mxu0 %v3733
        %4204 = vmatprep.subr.mxu0 0.0
        %4205 = vmatpush1.msra.mxu0 %v3734
        %4206 = vmatprep.subr.mxu0 0.0
        %4207 = vmatpush1.msra.mxu0 %v3735
        %4208 = vmatprep.subr.mxu0 0.0
        %4209 = vmatpush1.msra.mxu0 %v3736
        %4210 = vmatprep.subr.mxu0 0.0
        %4211 = vmatpush1.msra.mxu0 %v3737
        %4212 = vmatprep.subr.mxu0 0.0
        %4213 = vmatpush1.msra.mxu0 %v3738
        %4214 = vmatprep.subr.mxu0 0.0
        %4215 = vmatpush1.msra.mxu0 %v3739
        %4216 = vmatprep.subr.mxu0 0.0
        %4217 = vmatpush1.msra.mxu0 %v3740
        %4218 = vmatprep.subr.mxu0 0.0
        %4219 = vmatpush1.msra.mxu0 %v3741
        %4220 = vmatprep.subr.mxu0 0.0
        %4221 = vmatpush1.msra.mxu0 %v3742
        %4222 = vmatprep.subr.mxu0 0.0
        %4223 = vmatpush1.msra.mxu0 %v3743
        %4224 = vmatprep.subr.mxu0 0.0
        %4225 = vmatpush1.msra.mxu0 %v3744
        %4226 = vmatprep.subr.mxu0 0.0
        %4227 = vmatpush1.msra.mxu0 %v3745
        %4228 = vmatprep.mubr.f32.mxu0 %v3503
        %4229 = vmatmul.mubr.f32.gmra.mrb[0].mxu0 %v3502
        %v4230 = vpop.f32.mrb[0].mxu0
        %v4231 = vadd.f32 %v4126, %v4230
        %v4232 = vpop.f32.mrb[0].mxu0
        %4233 = vmatprep.mubr.f32.mxu0 %v3522
        %4234 = vmatmul.mubr.f32.gmra.mrb[0].mxu0 %v3521
        %v4235 = vpop.f32.mrb[0].mxu0
        %v4236 = vadd.f32 %v4131, %v4235
        %v4237 = vpop.f32.mrb[0].mxu0
        %4238 = vmatprep.mubr.f32.mxu0 %v3541
        %4239 = vmatmul.mubr.f32.gmra.mrb[0].mxu0 %v3540
        %v4240 = vpop.f32.mrb[0].mxu0
        %v4241 = vadd.f32 %v4136, %v4240
        %v4242 = vpop.f32.mrb[0].mxu0
        %4243 = vmatprep.mubr.f32.mxu0 %v3560
        %4244 = vmatmul.mubr.f32.gmra.mrb[0].mxu0 %v3559
        %v4245 = vpop.f32.mrb[0].mxu0
        %v4246 = vadd.f32 %v4141, %v4245
        %v4247 = vpop.f32.mrb[0].mxu0
        %4248 = vmatprep.mubr.f32.mxu0 %v3579
        %4249 = vmatmul.mubr.f32.gmra.mrb[0].mxu0 %v3578
        %v4250 = vpop.f32.mrb[0].mxu0
        %v4251 = vadd.f32 %v4146, %v4250
        %v4252 = vpop.f32.mrb[0].mxu0
        %4253 = vmatprep.mubr.f32.mxu0 %v3598
        %4254 = vmatmul.mubr.f32.gmra.mrb[0].mxu0 %v3597
        %v4255 = vpop.f32.mrb[0].mxu0
        %v4256 = vadd.f32 %v4151, %v4255
        %v4257 = vpop.f32.mrb[0].mxu0
        %4258 = vmatprep.mubr.f32.mxu0 %v3617
        %4259 = vmatmul.mubr.f32.gmra.mrb[0].mxu0 %v3616
        %v4260 = vpop.f32.mrb[0].mxu0
        %v4261 = vadd.f32 %v4156, %v4260
        %v4262 = vpop.f32.mrb[0].mxu0
        %4263 = vmatprep.mubr.f32.mxu0 %v3636
        %4264 = vmatmul.mubr.f32.gmra.mrb[0].mxu0 %v3635
        %v4265 = vpop.f32.mrb[0].mxu0
        %v4266 = vadd.f32 %v4161, %v4265
        %v4267 = vpop.f32.mrb[0].mxu0
        %4268 = vdwg.mxu0
        %4269 = vmatprep.subr.mxu0 0.0
        %4270 = vmatpush1.msra.mxu0 %v3746
        %4271 = vmatprep.subr.mxu0 0.0
        %4272 = vmatpush1.msra.mxu0 %v3747
        %4273 = vmatprep.subr.mxu0 0.0
        %4274 = vmatpush1.msra.mxu0 %v3748
        %4275 = vmatprep.subr.mxu0 0.0
        %4276 = vmatpush1.msra.mxu0 %v3749
        %4277 = vmatprep.subr.mxu0 0.0
        %4278 = vmatpush1.msra.mxu0 %v3750
        %4279 = vmatprep.subr.mxu0 0.0
        %4280 = vmatpush1.msra.mxu0 %v3751
        %4281 = vmatprep.subr.mxu0 0.0
        %4282 = vmatpush1.msra.mxu0 %v3752
        %4283 = vmatprep.subr.mxu0 0.0
        %4284 = vmatpush1.msra.mxu0 %v3753
        %4285 = vmatprep.subr.mxu0 0.0
        %4286 = vmatpush1.msra.mxu0 %v3754
        %4287 = vmatprep.subr.mxu0 0.0
        %4288 = vmatpush1.msra.mxu0 %v3755
        %4289 = vmatprep.subr.mxu0 0.0
        %4290 = vmatpush1.msra.mxu0 %v3756
        %4291 = vmatprep.subr.mxu0 0.0
        %4292 = vmatpush1.msra.mxu0 %v3757
        %4293 = vmatprep.subr.mxu0 0.0
        %4294 = vmatpush1.msra.mxu0 %v3758
        %4295 = vmatprep.subr.mxu0 0.0
        %4296 = vmatpush1.msra.mxu0 %v3759
        %4297 = vmatprep.subr.mxu0 0.0
        %4298 = vmatpush1.msra.mxu0 %v3760
        %4299 = vmatprep.subr.mxu0 0.0
        %4300 = vmatpush1.msra.mxu0 %v3761
        %4301 = vmatprep.subr.mxu0 0.0
        %4302 = vmatpush1.msra.mxu0 %v3762
        %4303 = vmatprep.subr.mxu0 0.0
        %4304 = vmatpush1.msra.mxu0 %v3763
        %4305 = vmatprep.subr.mxu0 0.0
        %4306 = vmatpush1.msra.mxu0 %v3764
        %4307 = vmatprep.subr.mxu0 0.0
        %4308 = vmatpush1.msra.mxu0 %v3765
        %4309 = vmatprep.subr.mxu0 0.0
        %4310 = vmatpush1.msra.mxu0 %v3766
        %4311 = vmatprep.subr.mxu0 0.0
        %4312 = vmatpush1.msra.mxu0 %v3767
        %4313 = vmatprep.subr.mxu0 0.0
        %4314 = vmatpush1.msra.mxu0 %v3768
        %4315 = vmatprep.subr.mxu0 0.0
        %4316 = vmatpush1.msra.mxu0 %v3769
        %4317 = vmatprep.subr.mxu0 0.0
        %4318 = vmatpush1.msra.mxu0 %v3770
        %4319 = vmatprep.subr.mxu0 0.0
        %4320 = vmatpush1.msra.mxu0 %v3771
        %4321 = vmatprep.subr.mxu0 0.0
        %4322 = vmatpush1.msra.mxu0 %v3772
        %4323 = vmatprep.subr.mxu0 0.0
        %4324 = vmatpush1.msra.mxu0 %v3773
        %4325 = vmatprep.subr.mxu0 0.0
        %4326 = vmatpush1.msra.mxu0 %v3774
        %4327 = vmatprep.subr.mxu0 0.0
        %4328 = vmatpush1.msra.mxu0 %v3775
        %4329 = vmatprep.subr.mxu0 0.0
        %4330 = vmatpush1.msra.mxu0 %v3776
        %4331 = vmatprep.subr.mxu0 0.0
        %4332 = vmatpush1.msra.mxu0 %v3777
        %4333 = vmatprep.mubr.f32.mxu0 %v3505
        %4334 = vmatmul.mubr.f32.gmra.mrb[0].mxu0 %v3504
        %v4335 = vpop.f32.mrb[0].mxu0
        %v4336 = vadd.f32 %v4231, %v4335
        %v4337 = vpop.f32.mrb[0].mxu0
        %4338 = vmatprep.mubr.f32.mxu0 %v3524
        %4339 = vmatmul.mubr.f32.gmra.mrb[0].mxu0 %v3523
        %v4340 = vpop.f32.mrb[0].mxu0
        %v4341 = vadd.f32 %v4236, %v4340
        %v4342 = vpop.f32.mrb[0].mxu0
        %4343 = vmatprep.mubr.f32.mxu0 %v3543
        %4344 = vmatmul.mubr.f32.gmra.mrb[0].mxu0 %v3542
        %v4345 = vpop.f32.mrb[0].mxu0
        %v4346 = vadd.f32 %v4241, %v4345
        %v4347 = vpop.f32.mrb[0].mxu0
        %4348 = vmatprep.mubr.f32.mxu0 %v3562
        %4349 = vmatmul.mubr.f32.gmra.mrb[0].mxu0 %v3561
        %v4350 = vpop.f32.mrb[0].mxu0
        %v4351 = vadd.f32 %v4246, %v4350
        %v4352 = vpop.f32.mrb[0].mxu0
        %4353 = vmatprep.mubr.f32.mxu0 %v3581
        %4354 = vmatmul.mubr.f32.gmra.mrb[0].mxu0 %v3580
        %v4355 = vpop.f32.mrb[0].mxu0
        %v4356 = vadd.f32 %v4251, %v4355
        %v4357 = vpop.f32.mrb[0].mxu0
        %4358 = vmatprep.mubr.f32.mxu0 %v3600
        %4359 = vmatmul.mubr.f32.gmra.mrb[0].mxu0 %v3599
        %v4360 = vpop.f32.mrb[0].mxu0
        %v4361 = vadd.f32 %v4256, %v4360
        %v4362 = vpop.f32.mrb[0].mxu0
        %4363 = vmatprep.mubr.f32.mxu0 %v3619
        %4364 = vmatmul.mubr.f32.gmra.mrb[0].mxu0 %v3618
        %v4365 = vpop.f32.mrb[0].mxu0
        %v4366 = vadd.f32 %v4261, %v4365
        %v4367 = vpop.f32.mrb[0].mxu0
        %4368 = vmatprep.mubr.f32.mxu0 %v3638
        %4369 = vmatmul.mubr.f32.gmra.mrb[0].mxu0 %v3637
        %v4370 = vpop.f32.mrb[0].mxu0
        %v4371 = vadd.f32 %v4266, %v4370
        %v4372 = vpop.f32.mrb[0].mxu0
        %4373 = vdwg.mxu0
        %4374 = vmatprep.subr.mxu0 0.0
        %4375 = vmatpush1.msra.mxu0 %v3778
        %4376 = vmatprep.subr.mxu0 0.0
        %4377 = vmatpush1.msra.mxu0 %v3779
        %4378 = vmatprep.subr.mxu0 0.0
        %4379 = vmatpush1.msra.mxu0 %v3780
        %4380 = vmatprep.subr.mxu0 0.0
        %4381 = vmatpush1.msra.mxu0 %v3781
        %4382 = vmatprep.subr.mxu0 0.0
        %4383 = vmatpush1.msra.mxu0 %v3782
        %4384 = vmatprep.subr.mxu0 0.0
        %4385 = vmatpush1.msra.mxu0 %v3783
        %4386 = vmatprep.subr.mxu0 0.0
        %4387 = vmatpush1.msra.mxu0 %v3784
        %4388 = vmatprep.subr.mxu0 0.0
        %4389 = vmatpush1.msra.mxu0 %v3785
        %4390 = vmatprep.subr.mxu0 0.0
        %4391 = vmatpush1.msra.mxu0 %v3786
        %4392 = vmatprep.subr.mxu0 0.0
        %4393 = vmatpush1.msra.mxu0 %v3787
        %4394 = vmatprep.subr.mxu0 0.0
        %4395 = vmatpush1.msra.mxu0 %v3788
        %4396 = vmatprep.subr.mxu0 0.0
        %4397 = vmatpush1.msra.mxu0 %v3789
        %4398 = vmatprep.subr.mxu0 0.0
        %4399 = vmatpush1.msra.mxu0 %v3790
        %4400 = vmatprep.subr.mxu0 0.0
        %4401 = vmatpush1.msra.mxu0 %v3791
        %4402 = vmatprep.subr.mxu0 0.0
        %4403 = vmatpush1.msra.mxu0 %v3792
        %4404 = vmatprep.subr.mxu0 0.0
        %4405 = vmatpush1.msra.mxu0 %v3793
        %4406 = vmatprep.subr.mxu0 0.0
        %4407 = vmatpush1.msra.mxu0 %v3794
        %4408 = vmatprep.subr.mxu0 0.0
        %4409 = vmatpush1.msra.mxu0 %v3795
        %4410 = vmatprep.subr.mxu0 0.0
        %4411 = vmatpush1.msra.mxu0 %v3796
        %4412 = vmatprep.subr.mxu0 0.0
        %4413 = vmatpush1.msra.mxu0 %v3797
        %4414 = vmatprep.subr.mxu0 0.0
        %4415 = vmatpush1.msra.mxu0 %v3798
        %4416 = vmatprep.subr.mxu0 0.0
        %4417 = vmatpush1.msra.mxu0 %v3799
        %4418 = vmatprep.subr.mxu0 0.0
        %4419 = vmatpush1.msra.mxu0 %v3800
        %4420 = vmatprep.subr.mxu0 0.0
        %4421 = vmatpush1.msra.mxu0 %v3801
        %4422 = vmatprep.subr.mxu0 0.0
        %4423 = vmatpush1.msra.mxu0 %v3802
        %4424 = vmatprep.subr.mxu0 0.0
        %4425 = vmatpush1.msra.mxu0 %v3803
        %4426 = vmatprep.subr.mxu0 0.0
        %4427 = vmatpush1.msra.mxu0 %v3804
        %4428 = vmatprep.subr.mxu0 0.0
        %4429 = vmatpush1.msra.mxu0 %v3805
        %4430 = vmatprep.subr.mxu0 0.0
        %4431 = vmatpush1.msra.mxu0 %v3806
        %4432 = vmatprep.subr.mxu0 0.0
        %4433 = vmatpush1.msra.mxu0 %v3807
        %4434 = vmatprep.subr.mxu0 0.0
        %4435 = vmatpush1.msra.mxu0 %v3808
        %4436 = vmatprep.subr.mxu0 0.0
        %4437 = vmatpush1.msra.mxu0 %v3809
        %4438 = vmatprep.mubr.f32.mxu0 %v3507
        %4439 = vmatmul.mubr.f32.gmra.mrb[0].mxu0 %v3506
        %v4440 = vpop.f32.mrb[0].mxu0
        %v4441 = vadd.f32 %v4336, %v4440
        %v4442 = vpop.f32.mrb[0].mxu0
        %4443 = vmatprep.mubr.f32.mxu0 %v3526
        %4444 = vmatmul.mubr.f32.gmra.mrb[0].mxu0 %v3525
        %v4445 = vpop.f32.mrb[0].mxu0
        %v4446 = vadd.f32 %v4341, %v4445
        %v4447 = vpop.f32.mrb[0].mxu0
        %4448 = vmatprep.mubr.f32.mxu0 %v3545
        %4449 = vmatmul.mubr.f32.gmra.mrb[0].mxu0 %v3544
        %v4450 = vpop.f32.mrb[0].mxu0
        %v4451 = vadd.f32 %v4346, %v4450
        %v4452 = vpop.f32.mrb[0].mxu0
        %4453 = vmatprep.mubr.f32.mxu0 %v3564
        %4454 = vmatmul.mubr.f32.gmra.mrb[0].mxu0 %v3563
        %v4455 = vpop.f32.mrb[0].mxu0
        %v4456 = vadd.f32 %v4351, %v4455
        %v4457 = vpop.f32.mrb[0].mxu0
        %4458 = vmatprep.mubr.f32.mxu0 %v3583
        %4459 = vmatmul.mubr.f32.gmra.mrb[0].mxu0 %v3582
        %v4460 = vpop.f32.mrb[0].mxu0
        %v4461 = vadd.f32 %v4356, %v4460
        %v4462 = vpop.f32.mrb[0].mxu0
        %4463 = vmatprep.mubr.f32.mxu0 %v3602
        %4464 = vmatmul.mubr.f32.gmra.mrb[0].mxu0 %v3601
        %v4465 = vpop.f32.mrb[0].mxu0
        %v4466 = vadd.f32 %v4361, %v4465
        %v4467 = vpop.f32.mrb[0].mxu0
        %4468 = vmatprep.mubr.f32.mxu0 %v3621
        %4469 = vmatmul.mubr.f32.gmra.mrb[0].mxu0 %v3620
        %v4470 = vpop.f32.mrb[0].mxu0
        %v4471 = vadd.f32 %v4366, %v4470
        %v4472 = vpop.f32.mrb[0].mxu0
        %4473 = vmatprep.mubr.f32.mxu0 %v3640
        %4474 = vmatmul.mubr.f32.gmra.mrb[0].mxu0 %v3639
        %v4475 = vpop.f32.mrb[0].mxu0
        %v4476 = vadd.f32 %v4371, %v4475
        %v4477 = vpop.f32.mrb[0].mxu0
        %4478 = vdwg.mxu0
        %4479 = vmatprep.subr.mxu0 0.0
        %4480 = vmatpush1.msra.mxu0 %v3810
        %4481 = vmatprep.subr.mxu0 0.0
        %4482 = vmatpush1.msra.mxu0 %v3811
        %4483 = vmatprep.subr.mxu0 0.0
        %4484 = vmatpush1.msra.mxu0 %v3812
        %4485 = vmatprep.subr.mxu0 0.0
        %4486 = vmatpush1.msra.mxu0 %v3813
        %4487 = vmatprep.subr.mxu0 0.0
        %4488 = vmatpush1.msra.mxu0 %v3814
        %4489 = vmatprep.subr.mxu0 0.0
        %4490 = vmatpush1.msra.mxu0 %v3815
        %4491 = vmatprep.subr.mxu0 0.0
        %4492 = vmatpush1.msra.mxu0 %v3816
        %4493 = vmatprep.subr.mxu0 0.0
        %4494 = vmatpush1.msra.mxu0 %v3817
        %4495 = vmatprep.subr.mxu0 0.0
        %4496 = vmatpush1.msra.mxu0 %v3818
        %4497 = vmatprep.subr.mxu0 0.0
        %4498 = vmatpush1.msra.mxu0 %v3819
        %4499 = vmatprep.subr.mxu0 0.0
        %4500 = vmatpush1.msra.mxu0 %v3820
        %4501 = vmatprep.subr.mxu0 0.0
        %4502 = vmatpush1.msra.mxu0 %v3821
        %4503 = vmatprep.subr.mxu0 0.0
        %4504 = vmatpush1.msra.mxu0 %v3822
        %4505 = vmatprep.subr.mxu0 0.0
        %4506 = vmatpush1.msra.mxu0 %v3823
        %4507 = vmatprep.subr.mxu0 0.0
        %4508 = vmatpush1.msra.mxu0 %v3824
        %4509 = vmatprep.subr.mxu0 0.0
        %4510 = vmatpush1.msra.mxu0 %v3825
        %4511 = vmatprep.subr.mxu0 0.0
        %4512 = vmatpush1.msra.mxu0 %v3826
        %4513 = vmatprep.subr.mxu0 0.0
        %4514 = vmatpush1.msra.mxu0 %v3827
        %4515 = vmatprep.subr.mxu0 0.0
        %4516 = vmatpush1.msra.mxu0 %v3828
        %4517 = vmatprep.subr.mxu0 0.0
        %4518 = vmatpush1.msra.mxu0 %v3829
        %4519 = vmatprep.subr.mxu0 0.0
        %4520 = vmatpush1.msra.mxu0 %v3830
        %4521 = vmatprep.subr.mxu0 0.0
        %4522 = vmatpush1.msra.mxu0 %v3831
        %4523 = vmatprep.subr.mxu0 0.0
        %4524 = vmatpush1.msra.mxu0 %v3832
        %4525 = vmatprep.subr.mxu0 0.0
        %4526 = vmatpush1.msra.mxu0 %v3833
        %4527 = vmatprep.subr.mxu0 0.0
        %4528 = vmatpush1.msra.mxu0 %v3834
        %4529 = vmatprep.subr.mxu0 0.0
        %4530 = vmatpush1.msra.mxu0 %v3835
        %4531 = vmatprep.subr.mxu0 0.0
        %4532 = vmatpush1.msra.mxu0 %v3836
        %4533 = vmatprep.subr.mxu0 0.0
        %4534 = vmatpush1.msra.mxu0 %v3837
        %4535 = vmatprep.subr.mxu0 0.0
        %4536 = vmatpush1.msra.mxu0 %v3838
        %4537 = vmatprep.subr.mxu0 0.0
        %4538 = vmatpush1.msra.mxu0 %v3839
        %4539 = vmatprep.subr.mxu0 0.0
        %4540 = vmatpush1.msra.mxu0 %v3840
        %4541 = vmatprep.subr.mxu0 0.0
        %4542 = vmatpush1.msra.mxu0 %v3841
        %4543 = vmatprep.mubr.f32.mxu0 %v3509
        %4544 = vmatmul.mubr.f32.gmra.mrb[0].mxu0 %v3508
        %v4545 = vpop.f32.mrb[0].mxu0
        %v4546 = vadd.f32 %v4441, %v4545
        %v4547 = vpop.f32.mrb[0].mxu0
        %4548 = vmatprep.mubr.f32.mxu0 %v3528
        %4549 = vmatmul.mubr.f32.gmra.mrb[0].mxu0 %v3527
        %v4550 = vpop.f32.mrb[0].mxu0
        %v4551 = vadd.f32 %v4446, %v4550
        %v4552 = vpop.f32.mrb[0].mxu0
        %4553 = vmatprep.mubr.f32.mxu0 %v3547
        %4554 = vmatmul.mubr.f32.gmra.mrb[0].mxu0 %v3546
        %v4555 = vpop.f32.mrb[0].mxu0
        %v4556 = vadd.f32 %v4451, %v4555
        %v4557 = vpop.f32.mrb[0].mxu0
        %4558 = vmatprep.mubr.f32.mxu0 %v3566
        %4559 = vmatmul.mubr.f32.gmra.mrb[0].mxu0 %v3565
        %v4560 = vpop.f32.mrb[0].mxu0
        %v4561 = vadd.f32 %v4456, %v4560
        %v4562 = vpop.f32.mrb[0].mxu0
        %4563 = vmatprep.mubr.f32.mxu0 %v3585
        %4564 = vmatmul.mubr.f32.gmra.mrb[0].mxu0 %v3584
        %v4565 = vpop.f32.mrb[0].mxu0
        %v4566 = vadd.f32 %v4461, %v4565
        %v4567 = vpop.f32.mrb[0].mxu0
        %4568 = vmatprep.mubr.f32.mxu0 %v3604
        %4569 = vmatmul.mubr.f32.gmra.mrb[0].mxu0 %v3603
        %v4570 = vpop.f32.mrb[0].mxu0
        %v4571 = vadd.f32 %v4466, %v4570
        %v4572 = vpop.f32.mrb[0].mxu0
        %4573 = vmatprep.mubr.f32.mxu0 %v3623
        %4574 = vmatmul.mubr.f32.gmra.mrb[0].mxu0 %v3622
        %v4575 = vpop.f32.mrb[0].mxu0
        %v4576 = vadd.f32 %v4471, %v4575
        %v4577 = vpop.f32.mrb[0].mxu0
        %4578 = vmatprep.mubr.f32.mxu0 %v3642
        %4579 = vmatmul.mubr.f32.gmra.mrb[0].mxu0 %v3641
        %v4580 = vpop.f32.mrb[0].mxu0
        %v4581 = vadd.f32 %v4476, %v4580
        %v4582 = vpop.f32.mrb[0].mxu0
        %4583 = vdwg.mxu0
        %4584 = vmatprep.subr.mxu0 0.0
        %4585 = vmatpush1.msra.mxu0 %v3842
        %4586 = vmatprep.subr.mxu0 0.0
        %4587 = vmatpush1.msra.mxu0 %v3843
        %4588 = vmatprep.subr.mxu0 0.0
        %4589 = vmatpush1.msra.mxu0 %v3844
        %4590 = vmatprep.subr.mxu0 0.0
        %4591 = vmatpush1.msra.mxu0 %v3845
        %4592 = vmatprep.subr.mxu0 0.0
        %4593 = vmatpush1.msra.mxu0 %v3846
        %4594 = vmatprep.subr.mxu0 0.0
        %4595 = vmatpush1.msra.mxu0 %v3847
        %4596 = vmatprep.subr.mxu0 0.0
        %4597 = vmatpush1.msra.mxu0 %v3848
        %4598 = vmatprep.subr.mxu0 0.0
        %4599 = vmatpush1.msra.mxu0 %v3849
        %4600 = vmatprep.subr.mxu0 0.0
        %4601 = vmatpush1.msra.mxu0 %v3850
        %4602 = vmatprep.subr.mxu0 0.0
        %4603 = vmatpush1.msra.mxu0 %v3851
        %4604 = vmatprep.subr.mxu0 0.0
        %4605 = vmatpush1.msra.mxu0 %v3852
        %4606 = vmatprep.subr.mxu0 0.0
        %4607 = vmatpush1.msra.mxu0 %v3853
        %4608 = vmatprep.subr.mxu0 0.0
        %4609 = vmatpush1.msra.mxu0 %v3854
        %4610 = vmatprep.subr.mxu0 0.0
        %4611 = vmatpush1.msra.mxu0 %v3855
        %4612 = vmatprep.subr.mxu0 0.0
        %4613 = vmatpush1.msra.mxu0 %v3856
        %4614 = vmatprep.subr.mxu0 0.0
        %4615 = vmatpush1.msra.mxu0 %v3857
        %4616 = vmatprep.subr.mxu0 0.0
        %4617 = vmatpush1.msra.mxu0 %v3858
        %4618 = vmatprep.subr.mxu0 0.0
        %4619 = vmatpush1.msra.mxu0 %v3859
        %4620 = vmatprep.subr.mxu0 0.0
        %4621 = vmatpush1.msra.mxu0 %v3860
        %4622 = vmatprep.subr.mxu0 0.0
        %4623 = vmatpush1.msra.mxu0 %v3861
        %4624 = vmatprep.subr.mxu0 0.0
        %4625 = vmatpush1.msra.mxu0 %v3862
        %4626 = vmatprep.subr.mxu0 0.0
        %4627 = vmatpush1.msra.mxu0 %v3863
        %4628 = vmatprep.subr.mxu0 0.0
        %4629 = vmatpush1.msra.mxu0 %v3864
        %4630 = vmatprep.subr.mxu0 0.0
        %4631 = vmatpush1.msra.mxu0 %v3865
        %4632 = vmatprep.subr.mxu0 0.0
        %4633 = vmatpush1.msra.mxu0 %v3866
        %4634 = vmatprep.subr.mxu0 0.0
        %4635 = vmatpush1.msra.mxu0 %v3867
        %4636 = vmatprep.subr.mxu0 0.0
        %4637 = vmatpush1.msra.mxu0 %v3868
        %4638 = vmatprep.subr.mxu0 0.0
        %4639 = vmatpush1.msra.mxu0 %v3869
        %4640 = vmatprep.subr.mxu0 0.0
        %4641 = vmatpush1.msra.mxu0 %v3870
        %4642 = vmatprep.subr.mxu0 0.0
        %4643 = vmatpush1.msra.mxu0 %v3871
        %4644 = vmatprep.subr.mxu0 0.0
        %4645 = vmatpush1.msra.mxu0 %v3872
        %4646 = vmatprep.subr.mxu0 0.0
        %4647 = vmatpush1.msra.mxu0 %v3873
        %4648 = vmatprep.mubr.f32.mxu0 %v3511
        %4649 = vmatmul.mubr.f32.gmra.mrb[0].mxu0 %v3510
        %v4650 = vpop.f32.mrb[0].mxu0
        %v4651 = vadd.f32 %v4546, %v4650
        %v4652 = vpop.f32.mrb[0].mxu0
        %4653 = vmatprep.mubr.f32.mxu0 %v3530
        %4654 = vmatmul.mubr.f32.gmra.mrb[0].mxu0 %v3529
        %v4655 = vpop.f32.mrb[0].mxu0
        %v4656 = vadd.f32 %v4551, %v4655
        %v4657 = vpop.f32.mrb[0].mxu0
        %4658 = vmatprep.mubr.f32.mxu0 %v3549
        %4659 = vmatmul.mubr.f32.gmra.mrb[0].mxu0 %v3548
        %v4660 = vpop.f32.mrb[0].mxu0
        %v4661 = vadd.f32 %v4556, %v4660
        %v4662 = vpop.f32.mrb[0].mxu0
        %4663 = vmatprep.mubr.f32.mxu0 %v3568
        %4664 = vmatmul.mubr.f32.gmra.mrb[0].mxu0 %v3567
        %v4665 = vpop.f32.mrb[0].mxu0
        %v4666 = vadd.f32 %v4561, %v4665
        %v4667 = vpop.f32.mrb[0].mxu0
        %4668 = vmatprep.mubr.f32.mxu0 %v3587
        %4669 = vmatmul.mubr.f32.gmra.mrb[0].mxu0 %v3586
        %v4670 = vpop.f32.mrb[0].mxu0
        %v4671 = vadd.f32 %v4566, %v4670
        %v4672 = vpop.f32.mrb[0].mxu0
        %4673 = vmatprep.mubr.f32.mxu0 %v3606
        %4674 = vmatmul.mubr.f32.gmra.mrb[0].mxu0 %v3605
        %v4675 = vpop.f32.mrb[0].mxu0
        %v4676 = vadd.f32 %v4571, %v4675
        %v4677 = vpop.f32.mrb[0].mxu0
        %4678 = vmatprep.mubr.f32.mxu0 %v3625
        %4679 = vmatmul.mubr.f32.gmra.mrb[0].mxu0 %v3624
        %v4680 = vpop.f32.mrb[0].mxu0
        %v4681 = vadd.f32 %v4576, %v4680
        %v4682 = vpop.f32.mrb[0].mxu0
        %4683 = vmatprep.mubr.f32.mxu0 %v3644
        %4684 = vmatmul.mubr.f32.gmra.mrb[0].mxu0 %v3643
        %v4685 = vpop.f32.mrb[0].mxu0
        %v4686 = vadd.f32 %v4581, %v4685
        %v4687 = vpop.f32.mrb[0].mxu0
        %4688 = vdwg.mxu0
        %4689 = vmatprep.subr.mxu0 0.0
        %4690 = vmatpush1.msra.mxu0 %v3874
        %4691 = vmatprep.subr.mxu0 0.0
        %4692 = vmatpush1.msra.mxu0 %v3875
        %4693 = vmatprep.subr.mxu0 0.0
        %4694 = vmatpush1.msra.mxu0 %v3876
        %4695 = vmatprep.subr.mxu0 0.0
        %4696 = vmatpush1.msra.mxu0 %v3877
        %4697 = vmatprep.subr.mxu0 0.0
        %4698 = vmatpush1.msra.mxu0 %v3878
        %4699 = vmatprep.subr.mxu0 0.0
        %4700 = vmatpush1.msra.mxu0 %v3879
        %4701 = vmatprep.subr.mxu0 0.0
        %4702 = vmatpush1.msra.mxu0 %v3880
        %4703 = vmatprep.subr.mxu0 0.0
        %4704 = vmatpush1.msra.mxu0 %v3881
        %4705 = vmatprep.subr.mxu0 0.0
        %4706 = vmatpush1.msra.mxu0 %v3882
        %4707 = vmatprep.subr.mxu0 0.0
        %4708 = vmatpush1.msra.mxu0 %v3883
        %4709 = vmatprep.subr.mxu0 0.0
        %4710 = vmatpush1.msra.mxu0 %v3884
        %4711 = vmatprep.subr.mxu0 0.0
        %4712 = vmatpush1.msra.mxu0 %v3885
        %4713 = vmatprep.subr.mxu0 0.0
        %4714 = vmatpush1.msra.mxu0 %v3886
        %4715 = vmatprep.subr.mxu0 0.0
        %4716 = vmatpush1.msra.mxu0 %v3887
        %4717 = vmatprep.subr.mxu0 0.0
        %4718 = vmatpush1.msra.mxu0 %v3888
        %4719 = vmatprep.subr.mxu0 0.0
        %4720 = vmatpush1.msra.mxu0 %v3889
        %4721 = vmatprep.subr.mxu0 0.0
        %4722 = vmatpush1.msra.mxu0 %v3890
        %4723 = vmatprep.subr.mxu0 0.0
        %4724 = vmatpush1.msra.mxu0 %v3891
        %4725 = vmatprep.subr.mxu0 0.0
        %4726 = vmatpush1.msra.mxu0 %v3892
        %4727 = vmatprep.subr.mxu0 0.0
        %4728 = vmatpush1.msra.mxu0 %v3893
        %4729 = vmatprep.subr.mxu0 0.0
        %4730 = vmatpush1.msra.mxu0 %v3894
        %4731 = vmatprep.subr.mxu0 0.0
        %4732 = vmatpush1.msra.mxu0 %v3895
        %4733 = vmatprep.subr.mxu0 0.0
        %4734 = vmatpush1.msra.mxu0 %v3896
        %4735 = vmatprep.subr.mxu0 0.0
        %4736 = vmatpush1.msra.mxu0 %v3897
        %4737 = vmatprep.subr.mxu0 0.0
        %4738 = vmatpush1.msra.mxu0 %v3898
        %4739 = vmatprep.subr.mxu0 0.0
        %4740 = vmatpush1.msra.mxu0 %v3899
        %4741 = vmatprep.subr.mxu0 0.0
        %4742 = vmatpush1.msra.mxu0 %v3900
        %4743 = vmatprep.subr.mxu0 0.0
        %4744 = vmatpush1.msra.mxu0 %v3901
        %4745 = vmatprep.subr.mxu0 0.0
        %4746 = vmatpush1.msra.mxu0 %v3902
        %4747 = vmatprep.subr.mxu0 0.0
        %4748 = vmatpush1.msra.mxu0 %v3903
        %4749 = vmatprep.subr.mxu0 0.0
        %4750 = vmatpush1.msra.mxu0 %v3904
        %4751 = vmatprep.subr.mxu0 0.0
        %4752 = vmatpush1.msra.mxu0 %v3905
        %4753 = vmatprep.mubr.f32.mxu0 %v3513
        %4754 = vmatmul.mubr.f32.gmra.mrb[0].mxu0 %v3512
        %v4755 = vpop.f32.mrb[0].mxu0
        %v4756 = vadd.f32 %v4651, %v4755
        %v4757 = vpop.f32.mrb[0].mxu0
        %4758 = vmatprep.mubr.f32.mxu0 %v3532
        %4759 = vmatmul.mubr.f32.gmra.mrb[0].mxu0 %v3531
        %v4760 = vpop.f32.mrb[0].mxu0
        %v4761 = vadd.f32 %v4656, %v4760
        %v4762 = vpop.f32.mrb[0].mxu0
        %4763 = vmatprep.mubr.f32.mxu0 %v3551
        %4764 = vmatmul.mubr.f32.gmra.mrb[0].mxu0 %v3550
        %v4765 = vpop.f32.mrb[0].mxu0
        %v4766 = vadd.f32 %v4661, %v4765
        %v4767 = vpop.f32.mrb[0].mxu0
        %4768 = vmatprep.mubr.f32.mxu0 %v3570
        %4769 = vmatmul.mubr.f32.gmra.mrb[0].mxu0 %v3569
        %v4770 = vpop.f32.mrb[0].mxu0
        %v4771 = vadd.f32 %v4666, %v4770
        %v4772 = vpop.f32.mrb[0].mxu0
        %4773 = vmatprep.mubr.f32.mxu0 %v3589
        %4774 = vmatmul.mubr.f32.gmra.mrb[0].mxu0 %v3588
        %v4775 = vpop.f32.mrb[0].mxu0
        %v4776 = vadd.f32 %v4671, %v4775
        %v4777 = vpop.f32.mrb[0].mxu0
        %4778 = vmatprep.mubr.f32.mxu0 %v3608
        %4779 = vmatmul.mubr.f32.gmra.mrb[0].mxu0 %v3607
        %v4780 = vpop.f32.mrb[0].mxu0
        %v4781 = vadd.f32 %v4676, %v4780
        %v4782 = vpop.f32.mrb[0].mxu0
        %4783 = vmatprep.mubr.f32.mxu0 %v3627
        %4784 = vmatmul.mubr.f32.gmra.mrb[0].mxu0 %v3626
        %v4785 = vpop.f32.mrb[0].mxu0
        %v4786 = vadd.f32 %v4681, %v4785
        %v4787 = vpop.f32.mrb[0].mxu0
        %4788 = vmatprep.mubr.f32.mxu0 %v3646
        %4789 = vmatmul.mubr.f32.gmra.mrb[0].mxu0 %v3645
        %v4790 = vpop.f32.mrb[0].mxu0
        %v4791 = vadd.f32 %v4686, %v4790
        %v4792 = vpop.f32.mrb[0].mxu0
        %4793 = vdwg.mxu0
        %4794 = vmatprep.subr.mxu0 0.0
        %4795 = vmatpush1.msra.mxu0 %v3906
        %4796 = vmatprep.subr.mxu0 0.0
        %4797 = vmatpush1.msra.mxu0 %v3907
        %4798 = vmatprep.subr.mxu0 0.0
        %4799 = vmatpush1.msra.mxu0 %v3908
        %4800 = vmatprep.subr.mxu0 0.0
        %4801 = vmatpush1.msra.mxu0 %v3909
        %4802 = vmatprep.subr.mxu0 0.0
        %4803 = vmatpush1.msra.mxu0 %v3910
        %4804 = vmatprep.subr.mxu0 0.0
        %4805 = vmatpush1.msra.mxu0 %v3911
        %4806 = vmatprep.subr.mxu0 0.0
        %4807 = vmatpush1.msra.mxu0 %v3912
        %4808 = vmatprep.subr.mxu0 0.0
        %4809 = vmatpush1.msra.mxu0 %v3913
        %4810 = vmatprep.subr.mxu0 0.0
        %4811 = vmatpush1.msra.mxu0 %v3914
        %4812 = vmatprep.subr.mxu0 0.0
        %4813 = vmatpush1.msra.mxu0 %v3915
        %4814 = vmatprep.subr.mxu0 0.0
        %4815 = vmatpush1.msra.mxu0 %v3916
        %4816 = vmatprep.subr.mxu0 0.0
        %4817 = vmatpush1.msra.mxu0 %v3917
        %4818 = vmatprep.subr.mxu0 0.0
        %4819 = vmatpush1.msra.mxu0 %v3918
        %4820 = vmatprep.subr.mxu0 0.0
        %4821 = vmatpush1.msra.mxu0 %v3919
        %4822 = vmatprep.subr.mxu0 0.0
        %4823 = vmatpush1.msra.mxu0 %v3920
        %4824 = vmatprep.subr.mxu0 0.0
        %4825 = vmatpush1.msra.mxu0 %v3921
        %4826 = vmatprep.subr.mxu0 0.0
        %4827 = vmatpush1.msra.mxu0 %v3922
        %4828 = vmatprep.subr.mxu0 0.0
        %4829 = vmatpush1.msra.mxu0 %v3923
        %4830 = vmatprep.subr.mxu0 0.0
        %4831 = vmatpush1.msra.mxu0 %v3924
        %4832 = vmatprep.subr.mxu0 0.0
        %4833 = vmatpush1.msra.mxu0 %v3925
        %4834 = vmatprep.subr.mxu0 0.0
        %4835 = vmatpush1.msra.mxu0 %v3926
        %4836 = vmatprep.subr.mxu0 0.0
        %4837 = vmatpush1.msra.mxu0 %v3927
        %4838 = vmatprep.subr.mxu0 0.0
        %4839 = vmatpush1.msra.mxu0 %v3928
        %4840 = vmatprep.subr.mxu0 0.0
        %4841 = vmatpush1.msra.mxu0 %v3929
        %4842 = vmatprep.subr.mxu0 0.0
        %4843 = vmatpush1.msra.mxu0 %v3930
        %4844 = vmatprep.subr.mxu0 0.0
        %4845 = vmatpush1.msra.mxu0 %v3931
        %4846 = vmatprep.subr.mxu0 0.0
        %4847 = vmatpush1.msra.mxu0 %v3932
        %4848 = vmatprep.subr.mxu0 0.0
        %4849 = vmatpush1.msra.mxu0 %v3933
        %4850 = vmatprep.subr.mxu0 0.0
        %4851 = vmatpush1.msra.mxu0 %v3934
        %4852 = vmatprep.subr.mxu0 0.0
        %4853 = vmatpush1.msra.mxu0 %v3935
        %4854 = vmatprep.subr.mxu0 0.0
        %4855 = vmatpush1.msra.mxu0 %v3936
        %4856 = vmatprep.subr.mxu0 0.0
        %4857 = vmatpush1.msra.mxu0 %v3937
        %4858 = vmatprep.mubr.f32.mxu0 %v3515
        %4859 = vmatmul.mubr.f32.gmra.mrb[0].mxu0 %v3514
        %v4860 = vpop.f32.mrb[0].mxu0
        %v4861 = vadd.f32 %v4756, %v4860
        %v4862 = vpop.f32.mrb[0].mxu0
        %4863 = vmatprep.mubr.f32.mxu0 %v3534
        %4864 = vmatmul.mubr.f32.gmra.mrb[0].mxu0 %v3533
        %v4865 = vpop.f32.mrb[0].mxu0
        %v4866 = vadd.f32 %v4761, %v4865
        %v4867 = vpop.f32.mrb[0].mxu0
        %4868 = vmatprep.mubr.f32.mxu0 %v3553
        %4869 = vmatmul.mubr.f32.gmra.mrb[0].mxu0 %v3552
        %v4870 = vpop.f32.mrb[0].mxu0
        %v4871 = vadd.f32 %v4766, %v4870
        %v4872 = vpop.f32.mrb[0].mxu0
        %4873 = vmatprep.mubr.f32.mxu0 %v3572
        %4874 = vmatmul.mubr.f32.gmra.mrb[0].mxu0 %v3571
        %v4875 = vpop.f32.mrb[0].mxu0
        %v4876 = vadd.f32 %v4771, %v4875
        %v4877 = vpop.f32.mrb[0].mxu0
        %4878 = vmatprep.mubr.f32.mxu0 %v3591
        %4879 = vmatmul.mubr.f32.gmra.mrb[0].mxu0 %v3590
        %v4880 = vpop.f32.mrb[0].mxu0
        %v4881 = vadd.f32 %v4776, %v4880
        %v4882 = vpop.f32.mrb[0].mxu0
        %4883 = vmatprep.mubr.f32.mxu0 %v3610
        %4884 = vmatmul.mubr.f32.gmra.mrb[0].mxu0 %v3609
        %v4885 = vpop.f32.mrb[0].mxu0
        %v4886 = vadd.f32 %v4781, %v4885
        %v4887 = vpop.f32.mrb[0].mxu0
        %4888 = vmatprep.mubr.f32.mxu0 %v3629
        %4889 = vmatmul.mubr.f32.gmra.mrb[0].mxu0 %v3628
        %v4890 = vpop.f32.mrb[0].mxu0
        %v4891 = vadd.f32 %v4786, %v4890
        %v4892 = vpop.f32.mrb[0].mxu0
        %4893 = vmatprep.mubr.f32.mxu0 %v3648
        %4894 = vmatmul.mubr.f32.gmra.mrb[0].mxu0 %v3647
        %v4895 = vpop.f32.mrb[0].mxu0
        %v4896 = vadd.f32 %v4791, %v4895
        %v4897 = vpop.f32.mrb[0].mxu0
        %4898 = vdwg.mxu0
        %4899 = vmatprep.subr.mxu0 0.0
        %4900 = vmatpush1.msra.mxu0 %v3938
        %4901 = vmatprep.subr.mxu0 0.0
        %4902 = vmatpush1.msra.mxu0 %v3939
        %4903 = vmatprep.subr.mxu0 0.0
        %4904 = vmatpush1.msra.mxu0 %v3940
        %4905 = vmatprep.subr.mxu0 0.0
        %4906 = vmatpush1.msra.mxu0 %v3941
        %4907 = vmatprep.subr.mxu0 0.0
        %4908 = vmatpush1.msra.mxu0 %v3942
        %4909 = vmatprep.subr.mxu0 0.0
        %4910 = vmatpush1.msra.mxu0 %v3943
        %4911 = vmatprep.subr.mxu0 0.0
        %4912 = vmatpush1.msra.mxu0 %v3944
        %4913 = vmatprep.subr.mxu0 0.0
        %4914 = vmatpush1.msra.mxu0 %v3945
        %4915 = vmatprep.subr.mxu0 0.0
        %4916 = vmatpush1.msra.mxu0 %v3946
        %4917 = vmatprep.subr.mxu0 0.0
        %4918 = vmatpush1.msra.mxu0 %v3947
        %4919 = vmatprep.subr.mxu0 0.0
        %4920 = vmatpush1.msra.mxu0 %v3948
        %4921 = vmatprep.subr.mxu0 0.0
        %4922 = vmatpush1.msra.mxu0 %v3949
        %4923 = vmatprep.subr.mxu0 0.0
        %4924 = vmatpush1.msra.mxu0 %v3950
        %4925 = vmatprep.subr.mxu0 0.0
        %4926 = vmatpush1.msra.mxu0 %v3951
        %4927 = vmatprep.subr.mxu0 0.0
        %4928 = vmatpush1.msra.mxu0 %v3952
        %4929 = vmatprep.subr.mxu0 0.0
        %4930 = vmatpush1.msra.mxu0 %v3953
        %4931 = vmatprep.subr.mxu0 0.0
        %4932 = vmatpush1.msra.mxu0 0.0
        %4933 = vmatprep.subr.mxu0 0.0
        %4934 = vmatpush1.msra.mxu0 0.0
        %4935 = vmatprep.subr.mxu0 0.0
        %4936 = vmatpush1.msra.mxu0 0.0
        %4937 = vmatprep.subr.mxu0 0.0
        %4938 = vmatpush1.msra.mxu0 0.0
        %4939 = vmatprep.subr.mxu0 0.0
        %4940 = vmatpush1.msra.mxu0 0.0
        %4941 = vmatprep.subr.mxu0 0.0
        %4942 = vmatpush1.msra.mxu0 0.0
        %4943 = vmatprep.subr.mxu0 0.0
        %4944 = vmatpush1.msra.mxu0 0.0
        %4945 = vmatprep.subr.mxu0 0.0
        %4946 = vmatpush1.msra.mxu0 0.0
        %4947 = vmatprep.subr.mxu0 0.0
        %4948 = vmatpush1.msra.mxu0 0.0
        %4949 = vmatprep.subr.mxu0 0.0
        %4950 = vmatpush1.msra.mxu0 0.0
        %4951 = vmatprep.subr.mxu0 0.0
        %4952 = vmatpush1.msra.mxu0 0.0
        %4953 = vmatprep.subr.mxu0 0.0
        %4954 = vmatpush1.msra.mxu0 0.0
        %4955 = vmatprep.subr.mxu0 0.0
        %4956 = vmatpush1.msra.mxu0 0.0
        %4957 = vmatprep.subr.mxu0 0.0
        %4958 = vmatpush1.msra.mxu0 0.0
        %4959 = vmatprep.subr.mxu0 0.0
        %4960 = vmatpush1.msra.mxu0 0.0
        %4961 = vmatprep.subr.mxu0 0.0
        %4962 = vmatpush1.msra.mxu0 0.0
        %4963 = vmatprep.mubr.f32.mxu0 0.0
        %4964 = vmatmul.mubr.f32.gmra.mrb[0].mxu0 %v3516
        %v4965 = vpop.f32.mrb[0].mxu0
        %v4966 = vadd.f32 %v4861, %v4965
        %v4967 = vpop.f32.mrb[0].mxu0
        %4968 = vmatprep.mubr.f32.mxu0 0.0
        %4969 = vmatmul.mubr.f32.gmra.mrb[0].mxu0 %v3535
        %v4970 = vpop.f32.mrb[0].mxu0
        %v4971 = vadd.f32 %v4866, %v4970
        %v4972 = vpop.f32.mrb[0].mxu0
        %4973 = vmatprep.mubr.f32.mxu0 0.0
        %4974 = vmatmul.mubr.f32.gmra.mrb[0].mxu0 %v3554
        %v4975 = vpop.f32.mrb[0].mxu0
        %v4976 = vadd.f32 %v4871, %v4975
        %v4977 = vpop.f32.mrb[0].mxu0
        %4978 = vmatprep.mubr.f32.mxu0 0.0
        %4979 = vmatmul.mubr.f32.gmra.mrb[0].mxu0 %v3573
        %v4980 = vpop.f32.mrb[0].mxu0
        %v4981 = vadd.f32 %v4876, %v4980
        %v4982 = vpop.f32.mrb[0].mxu0
        %4983 = vmatprep.mubr.f32.mxu0 0.0
        %4984 = vmatmul.mubr.f32.gmra.mrb[0].mxu0 %v3592
        %v4985 = vpop.f32.mrb[0].mxu0
        %v4986 = vadd.f32 %v4881, %v4985
        %v4987 = vpop.f32.mrb[0].mxu0
        %4988 = vmatprep.mubr.f32.mxu0 0.0
        %4989 = vmatmul.mubr.f32.gmra.mrb[0].mxu0 %v3611
        %v4990 = vpop.f32.mrb[0].mxu0
        %v4991 = vadd.f32 %v4886, %v4990
        %v4992 = vpop.f32.mrb[0].mxu0
        %4993 = vmatprep.mubr.f32.mxu0 0.0
        %4994 = vmatmul.mubr.f32.gmra.mrb[0].mxu0 %v3630
        %v4995 = vpop.f32.mrb[0].mxu0
        %v4996 = vadd.f32 %v4891, %v4995
        %v4997 = vpop.f32.mrb[0].mxu0
        %4998 = vmatprep.mubr.f32.mxu0 0.0
        %4999 = vmatmul.mubr.f32.gmra.mrb[0].mxu0 %v3649
        %v5000 = vpop.f32.mrb[0].mxu0
        %v5001 = vadd.f32 %v4896, %v5000
        %v5002 = vpop.f32.mrb[0].mxu0
        %5003 = vdwg.mxu0
        %5004 = vst [vmem:[%s205] sm:$0xff] %v4966
        %5005 = vst [vmem:[%s205 + $0x8] sm:$0xff] %v4971
        %5006 = vst [vmem:[%s205 + $0x10] sm:$0xff] %v4976
        %5007 = vst [vmem:[%s205 + $0x18] sm:$0xff] %v4981
        %5008 = vst [vmem:[%s205 + $0x20] sm:$0xff] %v4986
        %5009 = vst [vmem:[%s205 + $0x28] sm:$0xff] %v4991
        %5010 = vst [vmem:[%s205 + $0x30] sm:$0xff] %v4996
        %5011 = vst [vmem:[%s205 + $0x38] sm:$0xff] %v5001
        %s5012 = sand.u32 %s120, 1
        %s5013 = scalar_lea.sflag [#allocation4], %s5012
        %s5014 = sand.u32 %s120, 1
        %s5015 = smul.addr %s5014, 64
        %s5016 = scalar_lea.vmem [#allocation3], %s5015
        // Predicated region
        $region37: #{gmm_synth.1} parent=35 // pred_check
          %p5017 = pneg %p130
        $region38: #{gmm_synth.1} parent=35 // pred_check_branch
          %5019 = sbr.rel (%p5017) target = $region40
        $region39: #{gmm_synth.1} parent=35 // pred_region
          %s5021 = ssub.s32 1024, 1024
          %5022 = vsyncadd %s5013, %s5021
          %s5023 = smul.addr %s18, 8
          %s5024 = smul.addr %s5023, 128
          %s5025 = scalar_lea.hbm %s4, %s5024
          %s5026 = sshll.u32 %s5016, 4
          %s5027 = int_to_ptr.vmem [resolvable:$true] %s5026
          %5032 = dma.vmem_to_hbm [thread:$0]  %s5027, 1024, %s5025, %s5013, 128, 128, 8
        $region40: #{gmm_synth.1} parent=35 // pred_fallthru
          _
      $region36: #{gmm_synth.1} parent=5 // pred_fallthru
        _
      %p5033 = scmp.le.s32.totalorder 2, %s13
      // Predicated region
      $region41: #{gmm_synth.1} parent=5 // pred_check
        %p5034 = pneg %p5033
      $region42: #{gmm_synth.1} parent=5 // pred_check_branch
        %5036 = sbr.rel (%p5034) target = $region44
      $region43: #{gmm_synth.1} parent=5 // pred_region
        %s5037 = ssub.s32 %s13, 2
        // Predicated region
        $region45: #{gmm_synth.1} parent=43 // pred_check
          %p5038 = pneg %p136
        $region46: #{gmm_synth.1} parent=43 // pred_check_branch
          %5040 = sbr.rel (%p5038) target = $region48
        $region47: #{gmm_synth.1} parent=43 // pred_region
          %s5041 = sand.u32 %s121, 1
          %s5042 = scalar_lea.sflag [#allocation4], %s5041
          %s5043 = sand.u32 %s121, 1
          %s5044 = smul.addr %s5043, 64
          %s5045 = scalar_lea.vmem [#allocation3], %s5044
          %5046 = dma.done %s5042, 1024
        $region48: #{gmm_synth.1} parent=43 // pred_fallthru
          _
      $region44: #{gmm_synth.1} parent=5 // pred_fallthru
        _
    $region6: #{gmm_synth.1} parent=1 // loop_footer
      %s17 = sadd.s32 1, %s13
    $region7: #{gmm_synth.1} parent=1 // loop_footer_branch
      %12 = sbr.rel target = $region3
    $region8: #{gmm_synth.1} parent=1 // loop_exit
      _
    %5047 = vsyncpa [#allocation4], 1
    %s5048 = scalar_lea.sflag [#allocation4], 1
    %5049 = vsyncpa %s5048, 1

</llo_original>
